<compile_context>
chip_gen: v7x
topology: tpu7x:2x2x1
jax: 0.10.0
libtpu: 0.0.40
codegen_flags: <defaults>
</compile_context>

<pallas_src>
import jax
import jax.numpy as jnp
from jax.experimental import pallas as pl
from jax.experimental.pallas import tpu as pltpu

I_DIM = 300   # LSTM input size
H_DIM = 150   # LSTM hidden size
O_DIM = 3     # Linear output size


# ----------------------------------------------------------------------------
# Single fused kernel: LSTM recurrence + Linear(150->3) + softmax + final slice
# ----------------------------------------------------------------------------
def net_kernel(x2d_ref, wih_ref, whh_ref, blstm_ref, h0_ref, c0_ref,
               wlin_ref, blin_ref, y_ref, hn_ref, cn_ref, xg_scr):
    # x2d_ref : (S*Bp, I) time-major flattened inputs, row index = t*Bp + b
    # wih_ref : (I, 4H)   fused input->gate weights, gate order [i, f, g, o]
    # whh_ref : (H, 4H)   fused hidden->gate weights
    # blstm_ref: (1, 4H)  combined bias (b_ih + b_hh)
    # h0/c0   : (Bp, H)   initial hidden / cell state (batch padded to Bp)
    # wlin    : (H, 3), blin : (1, 3)
    # outputs : y (Bp, 3), hn (Bp, H), cn (Bp, H)
    # xg_scr  : VMEM (S*Bp, 4H) scratch for the precomputed input-path gates
    Bp, H = h0_ref.shape
    S = x2d_ref.shape[0] // Bp

    # Entire input path in one MXU call: (S*Bp, I) @ (I, 4H), bias folded in.
    xg_scr[...] = (jnp.dot(x2d_ref[...], wih_ref[...],
                           preferred_element_type=jnp.float32)
                   + blstm_ref[...])

    whh = whh_ref[...]          # hoisted: reused by every timestep
    h = h0_ref[...]
    c = c0_ref[...]
    h_pen = h                   # LSTM output at timestep S-2

    # Statically unrolled recurrence: one (Bp, H) @ (H, 4H) matmul per step.
    # Each xg slab is a static, sublane-aligned contiguous slice.
    for t in range(S):
        xg_t = xg_scr[t * Bp:(t + 1) * Bp, :]                        # (Bp, 4H)
        gates = xg_t + jnp.dot(h, whh,
                               preferred_element_type=jnp.float32)   # (Bp, 4H)
        i_g = jax.nn.sigmoid(gates[:, 0 * H:1 * H])
        f_g = jax.nn.sigmoid(gates[:, 1 * H:2 * H])
        g_g = jnp.tanh(gates[:, 2 * H:3 * H])
        o_g = jax.nn.sigmoid(gates[:, 3 * H:4 * H])
        c = f_g * c + i_g * g_g
        h = o_g * jnp.tanh(c)
        if t == S - 2:
            h_pen = h

    hn_ref[...] = h             # written once (final state only)
    cn_ref[...] = c

    # Linear + softmax only for the two timesteps that survive [:, -4:-1]:
    #   y[b] = [ p(t=S-2)[b, 2], p(t=S-1)[b, 0], p(t=S-1)[b, 1] ]
    hcat = jnp.concatenate([h_pen, h], axis=0)                       # (2Bp, H)
    logits = (jnp.dot(hcat, wlin_ref[...],
                      preferred_element_type=jnp.float32)
              + blin_ref[...])                                       # (2Bp, 3)
    m = jnp.max(logits, axis=-1, keepdims=True)
    e = jnp.exp(logits - m)
    probs = e / jnp.sum(e, axis=-1, keepdims=True)
    p_pen = probs[:Bp]
    p_last = probs[Bp:]
    y_ref[...] = jnp.concatenate([p_pen[:, 2:3], p_last[:, 0:2]], axis=1)


# ----------------------------------------------------------------------------
# Wrapper: cheap layout plumbing only (transpose/pad of a ~20 KB activation)
# ----------------------------------------------------------------------------
def net_forward(x, hidden, batch_size, params):
    wih, whh, blstm, wlin, blin = params
    h0, c0 = hidden                 # PyTorch layout: (1, B, H) each
    B, S, I = x.shape
    H = whh.shape[0]
    assert B == batch_size
    assert S >= 2                   # [:, -4:-1] needs at least two timesteps

    Bp = ((B + 7) // 8) * 8         # pad batch to a sublane multiple

    # Time-major + batch padding so in-kernel per-step slabs are aligned.
    xt = jnp.transpose(x, (1, 0, 2))                         # (S, B, I)
    xt = jnp.pad(xt, ((0, 0), (0, Bp - B), (0, 0)))          # (S, Bp, I)
    x2d = xt.reshape(S * Bp, I)

    h0p = jnp.pad(h0[0], ((0, Bp - B), (0, 0)))              # (Bp, H)
    c0p = jnp.pad(c0[0], ((0, Bp - B), (0, 0)))

    y, hn, cn = pl.pallas_call(
        net_kernel,
        out_shape=(
            jax.ShapeDtypeStruct((Bp, wlin.shape[1]), jnp.float32),  # y
            jax.ShapeDtypeStruct((Bp, H), jnp.float32),              # h_n
            jax.ShapeDtypeStruct((Bp, H), jnp.float32),              # c_n
        ),
        scratch_shapes=[pltpu.VMEM((S * Bp, 4 * H), jnp.float32)],
    )(x2d, wih, whh, blstm, h0p, c0p, wlin, blin)

    # Drop padded batch rows (free slices) and restore PyTorch (1, B, H) shape.
    return y[:B], (hn[:B][None, ...], cn[:B][None, ...])


# ----------------------------------------------------------------------------
# Pure-JAX reference (full computation, mirrors the PyTorch module exactly)
# ----------------------------------------------------------------------------
def ref_forward(x, hidden, batch_size, params):
    wih, whh, blstm, wlin, blin = params
    h0, c0 = hidden
    B, S, I = x.shape
    H = whh.shape[0]

    def step(carry, x_t):
        h, c = carry
        gates = x_t @ wih + h @ whh + blstm
        i = jax.nn.sigmoid(gates[:, 0 * H:1 * H])
        f = jax.nn.sigmoid(gates[:, 1 * H:2 * H])
        g = jnp.tanh(gates[:, 2 * H:3 * H])
        o = jax.nn.sigmoid(gates[:, 3 * H:4 * H])
        c = f * c + i * g
        h = o * jnp.tanh(c)
        return (h, c), h

    (hn, cn), outs = jax.lax.scan(step, (h0[0], c0[0]),
                                  jnp.transpose(x, (1, 0, 2)))
    flat = jnp.transpose(outs, (1, 0, 2)).reshape(-1, H)   # (B*S, H)
    probs = jax.nn.softmax(flat @ wlin + blin, axis=-1)
    y = probs.reshape(batch_size, -1)[:, -4:-1]
    return y, (hn[None, ...], cn[None, ...])


if __name__ == "__main__":
    B, S = 2, 8
    key = jax.random.PRNGKey(0)
    keys = jax.random.split(key, 6)

    k_lstm = 1.0 / jnp.sqrt(jnp.float32(H_DIM))
    k_lin = 1.0 / jnp.sqrt(jnp.float32(H_DIM))

    # Deterministic synthetic parameters (PyTorch-style uniform init),
    # stored in the fused layout used by the kernel.
    wih = jax.random.uniform(keys[0], (I_DIM, 4 * H_DIM), jnp.float32,
                             -k_lstm, k_lstm)
    whh = jax.random.uniform(keys[1], (H_DIM, 4 * H_DIM), jnp.float32,
                             -k_lstm, k_lstm)
    blstm = jax.random.uniform(keys[2], (1, 4 * H_DIM), jnp.float32,
                               -2 * k_lstm, 2 * k_lstm)  # b_ih + b_hh combined
    wlin = jax.random.uniform(keys[3], (H_DIM, O_DIM), jnp.float32,
                              -k_lin, k_lin)
    blin = jax.random.uniform(keys[4], (1, O_DIM), jnp.float32,
                              -k_lin, k_lin)
    params = (wih, whh, blstm, wlin, blin)

    x = jax.random.normal(keys[5], (B, S, I_DIM), jnp.float32)
    hidden = (jnp.zeros((1, B, H_DIM), jnp.float32),
              jnp.zeros((1, B, H_DIM), jnp.float32))   # init_hidden

    y, (hn, cn) = net_forward(x, hidden, B, params)
    jax.block_until_ready((y, hn, cn))

    y_ref, (hn_ref, cn_ref) = ref_forward(x, hidden, B, params)
    assert y.shape == (B, O_DIM)
    assert hn.shape == (1, B, H_DIM) and cn.shape == (1, B, H_DIM)
    assert jnp.allclose(y, y_ref, atol=2e-5, rtol=2e-5)
    assert jnp.allclose(hn, hn_ref, atol=2e-5, rtol=2e-5)
    assert jnp.allclose(cn, cn_ref, atol=2e-5, rtol=2e-5)

    print("KERNEL_OK")
</pallas_src>

<mosaic_0001>
module attributes {stable_mosaic.version = 11 : i64} {
  func.func @net_kernel(%arg0: memref<64x300xf32, #tpu.memory_space<vmem>>, %arg1: memref<300x600xf32, #tpu.memory_space<vmem>>, %arg2: memref<150x600xf32, #tpu.memory_space<vmem>>, %arg3: memref<1x600xf32, #tpu.memory_space<vmem>>, %arg4: memref<8x150xf32, #tpu.memory_space<vmem>>, %arg5: memref<8x150xf32, #tpu.memory_space<vmem>>, %arg6: memref<150x3xf32, #tpu.memory_space<vmem>>, %arg7: memref<1x3xf32, #tpu.memory_space<vmem>>, %arg8: memref<8x3xf32, #tpu.memory_space<vmem>>, %arg9: memref<8x150xf32, #tpu.memory_space<vmem>>, %arg10: memref<8x150xf32, #tpu.memory_space<vmem>>, %arg11: memref<64x600xf32, #tpu.memory_space<vmem>>) attributes {dimension_semantics = [], scalar_prefetch = 0 : i64, scratch_operands = 1 : i64, tpu.core_type = #tpu.core_type<tc>} {
    %c0 = arith.constant 0 : index
    %c0_0 = arith.constant 0 : index
    %0 = vector.load %arg0[%c0, %c0_0] : memref<64x300xf32, #tpu.memory_space<vmem>>, vector<64x300xf32>
    %c0_1 = arith.constant 0 : index
    %c0_2 = arith.constant 0 : index
    %1 = vector.load %arg1[%c0_1, %c0_2] : memref<300x600xf32, #tpu.memory_space<vmem>>, vector<300x600xf32>
    %cst = arith.constant dense<0.000000e+00> : vector<64x600xf32>
    %2 = tpu.matmul %0, %1, %cst {dimension_numbers = #tpu.dot_dimension_numbers<[1], [0], [0], [1], [0, 0, 1, 1], [], []>} : vector<64x300xf32>, vector<300x600xf32>, vector<64x600xf32> -> vector<64x600xf32>
    %c0_3 = arith.constant 0 : index
    %c0_4 = arith.constant 0 : index
    %3 = vector.load %arg3[%c0_3, %c0_4] : memref<1x600xf32, #tpu.memory_space<vmem>>, vector<1x600xf32>
    %4 = vector.broadcast %3 : vector<1x600xf32> to vector<64x600xf32>
    %5 = arith.addf %2, %4 : vector<64x600xf32>
    %c0_5 = arith.constant 0 : index
    %c0_6 = arith.constant 0 : index
    %6 = vector.load %arg11[%c0_5, %c0_6] : memref<64x600xf32, #tpu.memory_space<vmem>>, vector<64x600xf32>
    tpu.vector_store %arg11[%c0_5, %c0_6], %5 {strides = array<i32>} : memref<64x600xf32, #tpu.memory_space<vmem>>, vector<64x600xf32>,
    %c0_7 = arith.constant 0 : index
    %c0_8 = arith.constant 0 : index
    %7 = vector.load %arg2[%c0_7, %c0_8] : memref<150x600xf32, #tpu.memory_space<vmem>>, vector<150x600xf32>
    %c0_9 = arith.constant 0 : index
    %c0_10 = arith.constant 0 : index
    %8 = vector.load %arg4[%c0_9, %c0_10] : memref<8x150xf32, #tpu.memory_space<vmem>>, vector<8x150xf32>
    %c0_11 = arith.constant 0 : index
    %c0_12 = arith.constant 0 : index
    %9 = vector.load %arg5[%c0_11, %c0_12] : memref<8x150xf32, #tpu.memory_space<vmem>>, vector<8x150xf32>
    %c0_13 = arith.constant 0 : index
    %c0_14 = arith.constant 0 : index
    %10 = vector.load %arg11[%c0_13, %c0_14] : memref<64x600xf32, #tpu.memory_space<vmem>>, vector<8x600xf32>
    %cst_15 = arith.constant dense<0.000000e+00> : vector<8x600xf32>
    %11 = tpu.matmul %8, %7, %cst_15 {dimension_numbers = #tpu.dot_dimension_numbers<[1], [0], [0], [1], [0, 0, 1, 1], [], []>} : vector<8x150xf32>, vector<150x600xf32>, vector<8x600xf32> -> vector<8x600xf32>
    %12 = arith.addf %10, %11 : vector<8x600xf32>
    %13 = vector.extract_strided_slice %12 {offsets = [0, 0], sizes = [8, 150], strides = [1, 1]} : vector<8x600xf32> to vector<8x150xf32>
    %14 = arith.negf %13 : vector<8x150xf32>
    %15 = math.exp %14 : vector<8x150xf32>
    %cst_16 = arith.constant 1.000000e+00 : f32
    %16 = vector.broadcast %cst_16 : f32 to vector<8x150xf32>
    %17 = arith.addf %16, %15 : vector<8x150xf32>
    %18 = arith.divf %16, %17 : vector<8x150xf32>
    %19 = vector.extract_strided_slice %12 {offsets = [0, 150], sizes = [8, 150], strides = [1, 1]} : vector<8x600xf32> to vector<8x150xf32>
    %20 = arith.negf %19 : vector<8x150xf32>
    %21 = math.exp %20 : vector<8x150xf32>
    %cst_17 = arith.constant 1.000000e+00 : f32
    %22 = vector.broadcast %cst_17 : f32 to vector<8x150xf32>
    %23 = arith.addf %22, %21 : vector<8x150xf32>
    %24 = arith.divf %22, %23 : vector<8x150xf32>
    %25 = vector.extract_strided_slice %12 {offsets = [0, 300], sizes = [8, 150], strides = [1, 1]} : vector<8x600xf32> to vector<8x150xf32>
    %26 = math.tanh %25 : vector<8x150xf32>
    %27 = vector.extract_strided_slice %12 {offsets = [0, 450], sizes = [8, 150], strides = [1, 1]} : vector<8x600xf32> to vector<8x150xf32>
    %28 = arith.negf %27 : vector<8x150xf32>
    %29 = math.exp %28 : vector<8x150xf32>
    %cst_18 = arith.constant 1.000000e+00 : f32
    %30 = vector.broadcast %cst_18 : f32 to vector<8x150xf32>
    %31 = arith.addf %30, %29 : vector<8x150xf32>
    %32 = arith.divf %30, %31 : vector<8x150xf32>
    %33 = arith.mulf %24, %9 : vector<8x150xf32>
    %34 = arith.mulf %18, %26 : vector<8x150xf32>
    %35 = arith.addf %33, %34 : vector<8x150xf32>
    %36 = math.tanh %35 : vector<8x150xf32>
    %37 = arith.mulf %32, %36 : vector<8x150xf32>
    %c8 = arith.constant 8 : index
    %c0_19 = arith.constant 0 : index
    %38 = vector.load %arg11[%c8, %c0_19] : memref<64x600xf32, #tpu.memory_space<vmem>>, vector<8x600xf32>
    %cst_20 = arith.constant dense<0.000000e+00> : vector<8x600xf32>
    %39 = tpu.matmul %37, %7, %cst_20 {dimension_numbers = #tpu.dot_dimension_numbers<[1], [0], [0], [1], [0, 0, 1, 1], [], []>} : vector<8x150xf32>, vector<150x600xf32>, vector<8x600xf32> -> vector<8x600xf32>
    %40 = arith.addf %38, %39 : vector<8x600xf32>
    %41 = vector.extract_strided_slice %40 {offsets = [0, 0], sizes = [8, 150], strides = [1, 1]} : vector<8x600xf32> to vector<8x150xf32>
    %42 = arith.negf %41 : vector<8x150xf32>
    %43 = math.exp %42 : vector<8x150xf32>
    %cst_21 = arith.constant 1.000000e+00 : f32
    %44 = vector.broadcast %cst_21 : f32 to vector<8x150xf32>
    %45 = arith.addf %44, %43 : vector<8x150xf32>
    %46 = arith.divf %44, %45 : vector<8x150xf32>
    %47 = vector.extract_strided_slice %40 {offsets = [0, 150], sizes = [8, 150], strides = [1, 1]} : vector<8x600xf32> to vector<8x150xf32>
    %48 = arith.negf %47 : vector<8x150xf32>
    %49 = math.exp %48 : vector<8x150xf32>
    %cst_22 = arith.constant 1.000000e+00 : f32
    %50 = vector.broadcast %cst_22 : f32 to vector<8x150xf32>
    %51 = arith.addf %50, %49 : vector<8x150xf32>
    %52 = arith.divf %50, %51 : vector<8x150xf32>
    %53 = vector.extract_strided_slice %40 {offsets = [0, 300], sizes = [8, 150], strides = [1, 1]} : vector<8x600xf32> to vector<8x150xf32>
    %54 = math.tanh %53 : vector<8x150xf32>
    %55 = vector.extract_strided_slice %40 {offsets = [0, 450], sizes = [8, 150], strides = [1, 1]} : vector<8x600xf32> to vector<8x150xf32>
    %56 = arith.negf %55 : vector<8x150xf32>
    %57 = math.exp %56 : vector<8x150xf32>
    %cst_23 = arith.constant 1.000000e+00 : f32
    %58 = vector.broadcast %cst_23 : f32 to vector<8x150xf32>
    %59 = arith.addf %58, %57 : vector<8x150xf32>
    %60 = arith.divf %58, %59 : vector<8x150xf32>
    %61 = arith.mulf %52, %35 : vector<8x150xf32>
    %62 = arith.mulf %46, %54 : vector<8x150xf32>
    %63 = arith.addf %61, %62 : vector<8x150xf32>
    %64 = math.tanh %63 : vector<8x150xf32>
    %65 = arith.mulf %60, %64 : vector<8x150xf32>
    %c16 = arith.constant 16 : index
    %c0_24 = arith.constant 0 : index
    %66 = vector.load %arg11[%c16, %c0_24] : memref<64x600xf32, #tpu.memory_space<vmem>>, vector<8x600xf32>
    %cst_25 = arith.constant dense<0.000000e+00> : vector<8x600xf32>
    %67 = tpu.matmul %65, %7, %cst_25 {dimension_numbers = #tpu.dot_dimension_numbers<[1], [0], [0], [1], [0, 0, 1, 1], [], []>} : vector<8x150xf32>, vector<150x600xf32>, vector<8x600xf32> -> vector<8x600xf32>
    %68 = arith.addf %66, %67 : vector<8x600xf32>
    %69 = vector.extract_strided_slice %68 {offsets = [0, 0], sizes = [8, 150], strides = [1, 1]} : vector<8x600xf32> to vector<8x150xf32>
    %70 = arith.negf %69 : vector<8x150xf32>
    %71 = math.exp %70 : vector<8x150xf32>
    %cst_26 = arith.constant 1.000000e+00 : f32
    %72 = vector.broadcast %cst_26 : f32 to vector<8x150xf32>
    %73 = arith.addf %72, %71 : vector<8x150xf32>
    %74 = arith.divf %72, %73 : vector<8x150xf32>
    %75 = vector.extract_strided_slice %68 {offsets = [0, 150], sizes = [8, 150], strides = [1, 1]} : vector<8x600xf32> to vector<8x150xf32>
    %76 = arith.negf %75 : vector<8x150xf32>
    %77 = math.exp %76 : vector<8x150xf32>
    %cst_27 = arith.constant 1.000000e+00 : f32
    %78 = vector.broadcast %cst_27 : f32 to vector<8x150xf32>
    %79 = arith.addf %78, %77 : vector<8x150xf32>
    %80 = arith.divf %78, %79 : vector<8x150xf32>
    %81 = vector.extract_strided_slice %68 {offsets = [0, 300], sizes = [8, 150], strides = [1, 1]} : vector<8x600xf32> to vector<8x150xf32>
    %82 = math.tanh %81 : vector<8x150xf32>
    %83 = vector.extract_strided_slice %68 {offsets = [0, 450], sizes = [8, 150], strides = [1, 1]} : vector<8x600xf32> to vector<8x150xf32>
    %84 = arith.negf %83 : vector<8x150xf32>
    %85 = math.exp %84 : vector<8x150xf32>
    %cst_28 = arith.constant 1.000000e+00 : f32
    %86 = vector.broadcast %cst_28 : f32 to vector<8x150xf32>
    %87 = arith.addf %86, %85 : vector<8x150xf32>
    %88 = arith.divf %86, %87 : vector<8x150xf32>
    %89 = arith.mulf %80, %63 : vector<8x150xf32>
    %90 = arith.mulf %74, %82 : vector<8x150xf32>
    %91 = arith.addf %89, %90 : vector<8x150xf32>
    %92 = math.tanh %91 : vector<8x150xf32>
    %93 = arith.mulf %88, %92 : vector<8x150xf32>
    %c24 = arith.constant 24 : index
    %c0_29 = arith.constant 0 : index
    %94 = vector.load %arg11[%c24, %c0_29] : memref<64x600xf32, #tpu.memory_space<vmem>>, vector<8x600xf32>
    %cst_30 = arith.constant dense<0.000000e+00> : vector<8x600xf32>
    %95 = tpu.matmul %93, %7, %cst_30 {dimension_numbers = #tpu.dot_dimension_numbers<[1], [0], [0], [1], [0, 0, 1, 1], [], []>} : vector<8x150xf32>, vector<150x600xf32>, vector<8x600xf32> -> vector<8x600xf32>
    %96 = arith.addf %94, %95 : vector<8x600xf32>
    %97 = vector.extract_strided_slice %96 {offsets = [0, 0], sizes = [8, 150], strides = [1, 1]} : vector<8x600xf32> to vector<8x150xf32>
    %98 = arith.negf %97 : vector<8x150xf32>
    %99 = math.exp %98 : vector<8x150xf32>
    %cst_31 = arith.constant 1.000000e+00 : f32
    %100 = vector.broadcast %cst_31 : f32 to vector<8x150xf32>
    %101 = arith.addf %100, %99 : vector<8x150xf32>
    %102 = arith.divf %100, %101 : vector<8x150xf32>
    %103 = vector.extract_strided_slice %96 {offsets = [0, 150], sizes = [8, 150], strides = [1, 1]} : vector<8x600xf32> to vector<8x150xf32>
    %104 = arith.negf %103 : vector<8x150xf32>
    %105 = math.exp %104 : vector<8x150xf32>
    %cst_32 = arith.constant 1.000000e+00 : f32
    %106 = vector.broadcast %cst_32 : f32 to vector<8x150xf32>
    %107 = arith.addf %106, %105 : vector<8x150xf32>
    %108 = arith.divf %106, %107 : vector<8x150xf32>
    %109 = vector.extract_strided_slice %96 {offsets = [0, 300], sizes = [8, 150], strides = [1, 1]} : vector<8x600xf32> to vector<8x150xf32>
    %110 = math.tanh %109 : vector<8x150xf32>
    %111 = vector.extract_strided_slice %96 {offsets = [0, 450], sizes = [8, 150], strides = [1, 1]} : vector<8x600xf32> to vector<8x150xf32>
    %112 = arith.negf %111 : vector<8x150xf32>
    %113 = math.exp %112 : vector<8x150xf32>
    %cst_33 = arith.constant 1.000000e+00 : f32
    %114 = vector.broadcast %cst_33 : f32 to vector<8x150xf32>
    %115 = arith.addf %114, %113 : vector<8x150xf32>
    %116 = arith.divf %114, %115 : vector<8x150xf32>
    %117 = arith.mulf %108, %91 : vector<8x150xf32>
    %118 = arith.mulf %102, %110 : vector<8x150xf32>
    %119 = arith.addf %117, %118 : vector<8x150xf32>
    %120 = math.tanh %119 : vector<8x150xf32>
    %121 = arith.mulf %116, %120 : vector<8x150xf32>
    %c32 = arith.constant 32 : index
    %c0_34 = arith.constant 0 : index
    %122 = vector.load %arg11[%c32, %c0_34] : memref<64x600xf32, #tpu.memory_space<vmem>>, vector<8x600xf32>
    %cst_35 = arith.constant dense<0.000000e+00> : vector<8x600xf32>
    %123 = tpu.matmul %121, %7, %cst_35 {dimension_numbers = #tpu.dot_dimension_numbers<[1], [0], [0], [1], [0, 0, 1, 1], [], []>} : vector<8x150xf32>, vector<150x600xf32>, vector<8x600xf32> -> vector<8x600xf32>
    %124 = arith.addf %122, %123 : vector<8x600xf32>
    %125 = vector.extract_strided_slice %124 {offsets = [0, 0], sizes = [8, 150], strides = [1, 1]} : vector<8x600xf32> to vector<8x150xf32>
    %126 = arith.negf %125 : vector<8x150xf32>
    %127 = math.exp %126 : vector<8x150xf32>
    %cst_36 = arith.constant 1.000000e+00 : f32
    %128 = vector.broadcast %cst_36 : f32 to vector<8x150xf32>
    %129 = arith.addf %128, %127 : vector<8x150xf32>
    %130 = arith.divf %128, %129 : vector<8x150xf32>
    %131 = vector.extract_strided_slice %124 {offsets = [0, 150], sizes = [8, 150], strides = [1, 1]} : vector<8x600xf32> to vector<8x150xf32>
    %132 = arith.negf %131 : vector<8x150xf32>
    %133 = math.exp %132 : vector<8x150xf32>
    %cst_37 = arith.constant 1.000000e+00 : f32
    %134 = vector.broadcast %cst_37 : f32 to vector<8x150xf32>
    %135 = arith.addf %134, %133 : vector<8x150xf32>
    %136 = arith.divf %134, %135 : vector<8x150xf32>
    %137 = vector.extract_strided_slice %124 {offsets = [0, 300], sizes = [8, 150], strides = [1, 1]} : vector<8x600xf32> to vector<8x150xf32>
    %138 = math.tanh %137 : vector<8x150xf32>
    %139 = vector.extract_strided_slice %124 {offsets = [0, 450], sizes = [8, 150], strides = [1, 1]} : vector<8x600xf32> to vector<8x150xf32>
    %140 = arith.negf %139 : vector<8x150xf32>
    %141 = math.exp %140 : vector<8x150xf32>
    %cst_38 = arith.constant 1.000000e+00 : f32
    %142 = vector.broadcast %cst_38 : f32 to vector<8x150xf32>
    %143 = arith.addf %142, %141 : vector<8x150xf32>
    %144 = arith.divf %142, %143 : vector<8x150xf32>
    %145 = arith.mulf %136, %119 : vector<8x150xf32>
    %146 = arith.mulf %130, %138 : vector<8x150xf32>
    %147 = arith.addf %145, %146 : vector<8x150xf32>
    %148 = math.tanh %147 : vector<8x150xf32>
    %149 = arith.mulf %144, %148 : vector<8x150xf32>
    %c40 = arith.constant 40 : index
    %c0_39 = arith.constant 0 : index
    %150 = vector.load %arg11[%c40, %c0_39] : memref<64x600xf32, #tpu.memory_space<vmem>>, vector<8x600xf32>
    %cst_40 = arith.constant dense<0.000000e+00> : vector<8x600xf32>
    %151 = tpu.matmul %149, %7, %cst_40 {dimension_numbers = #tpu.dot_dimension_numbers<[1], [0], [0], [1], [0, 0, 1, 1], [], []>} : vector<8x150xf32>, vector<150x600xf32>, vector<8x600xf32> -> vector<8x600xf32>
    %152 = arith.addf %150, %151 : vector<8x600xf32>
    %153 = vector.extract_strided_slice %152 {offsets = [0, 0], sizes = [8, 150], strides = [1, 1]} : vector<8x600xf32> to vector<8x150xf32>
    %154 = arith.negf %153 : vector<8x150xf32>
    %155 = math.exp %154 : vector<8x150xf32>
    %cst_41 = arith.constant 1.000000e+00 : f32
    %156 = vector.broadcast %cst_41 : f32 to vector<8x150xf32>
    %157 = arith.addf %156, %155 : vector<8x150xf32>
    %158 = arith.divf %156, %157 : vector<8x150xf32>
    %159 = vector.extract_strided_slice %152 {offsets = [0, 150], sizes = [8, 150], strides = [1, 1]} : vector<8x600xf32> to vector<8x150xf32>
    %160 = arith.negf %159 : vector<8x150xf32>
    %161 = math.exp %160 : vector<8x150xf32>
    %cst_42 = arith.constant 1.000000e+00 : f32
    %162 = vector.broadcast %cst_42 : f32 to vector<8x150xf32>
    %163 = arith.addf %162, %161 : vector<8x150xf32>
    %164 = arith.divf %162, %163 : vector<8x150xf32>
    %165 = vector.extract_strided_slice %152 {offsets = [0, 300], sizes = [8, 150], strides = [1, 1]} : vector<8x600xf32> to vector<8x150xf32>
    %166 = math.tanh %165 : vector<8x150xf32>
    %167 = vector.extract_strided_slice %152 {offsets = [0, 450], sizes = [8, 150], strides = [1, 1]} : vector<8x600xf32> to vector<8x150xf32>
    %168 = arith.negf %167 : vector<8x150xf32>
    %169 = math.exp %168 : vector<8x150xf32>
    %cst_43 = arith.constant 1.000000e+00 : f32
    %170 = vector.broadcast %cst_43 : f32 to vector<8x150xf32>
    %171 = arith.addf %170, %169 : vector<8x150xf32>
    %172 = arith.divf %170, %171 : vector<8x150xf32>
    %173 = arith.mulf %164, %147 : vector<8x150xf32>
    %174 = arith.mulf %158, %166 : vector<8x150xf32>
    %175 = arith.addf %173, %174 : vector<8x150xf32>
    %176 = math.tanh %175 : vector<8x150xf32>
    %177 = arith.mulf %172, %176 : vector<8x150xf32>
    %c48 = arith.constant 48 : index
    %c0_44 = arith.constant 0 : index
    %178 = vector.load %arg11[%c48, %c0_44] : memref<64x600xf32, #tpu.memory_space<vmem>>, vector<8x600xf32>
    %cst_45 = arith.constant dense<0.000000e+00> : vector<8x600xf32>
    %179 = tpu.matmul %177, %7, %cst_45 {dimension_numbers = #tpu.dot_dimension_numbers<[1], [0], [0], [1], [0, 0, 1, 1], [], []>} : vector<8x150xf32>, vector<150x600xf32>, vector<8x600xf32> -> vector<8x600xf32>
    %180 = arith.addf %178, %179 : vector<8x600xf32>
    %181 = vector.extract_strided_slice %180 {offsets = [0, 0], sizes = [8, 150], strides = [1, 1]} : vector<8x600xf32> to vector<8x150xf32>
    %182 = arith.negf %181 : vector<8x150xf32>
    %183 = math.exp %182 : vector<8x150xf32>
    %cst_46 = arith.constant 1.000000e+00 : f32
    %184 = vector.broadcast %cst_46 : f32 to vector<8x150xf32>
    %185 = arith.addf %184, %183 : vector<8x150xf32>
    %186 = arith.divf %184, %185 : vector<8x150xf32>
    %187 = vector.extract_strided_slice %180 {offsets = [0, 150], sizes = [8, 150], strides = [1, 1]} : vector<8x600xf32> to vector<8x150xf32>
    %188 = arith.negf %187 : vector<8x150xf32>
    %189 = math.exp %188 : vector<8x150xf32>
    %cst_47 = arith.constant 1.000000e+00 : f32
    %190 = vector.broadcast %cst_47 : f32 to vector<8x150xf32>
    %191 = arith.addf %190, %189 : vector<8x150xf32>
    %192 = arith.divf %190, %191 : vector<8x150xf32>
    %193 = vector.extract_strided_slice %180 {offsets = [0, 300], sizes = [8, 150], strides = [1, 1]} : vector<8x600xf32> to vector<8x150xf32>
    %194 = math.tanh %193 : vector<8x150xf32>
    %195 = vector.extract_strided_slice %180 {offsets = [0, 450], sizes = [8, 150], strides = [1, 1]} : vector<8x600xf32> to vector<8x150xf32>
    %196 = arith.negf %195 : vector<8x150xf32>
    %197 = math.exp %196 : vector<8x150xf32>
    %cst_48 = arith.constant 1.000000e+00 : f32
    %198 = vector.broadcast %cst_48 : f32 to vector<8x150xf32>
    %199 = arith.addf %198, %197 : vector<8x150xf32>
    %200 = arith.divf %198, %199 : vector<8x150xf32>
    %201 = arith.mulf %192, %175 : vector<8x150xf32>
    %202 = arith.mulf %186, %194 : vector<8x150xf32>
    %203 = arith.addf %201, %202 : vector<8x150xf32>
    %204 = math.tanh %203 : vector<8x150xf32>
    %205 = arith.mulf %200, %204 : vector<8x150xf32>
    %c56 = arith.constant 56 : index
    %c0_49 = arith.constant 0 : index
    %206 = vector.load %arg11[%c56, %c0_49] : memref<64x600xf32, #tpu.memory_space<vmem>>, vector<8x600xf32>
    %cst_50 = arith.constant dense<0.000000e+00> : vector<8x600xf32>
    %207 = tpu.matmul %205, %7, %cst_50 {dimension_numbers = #tpu.dot_dimension_numbers<[1], [0], [0], [1], [0, 0, 1, 1], [], []>} : vector<8x150xf32>, vector<150x600xf32>, vector<8x600xf32> -> vector<8x600xf32>
    %208 = arith.addf %206, %207 : vector<8x600xf32>
    %209 = vector.extract_strided_slice %208 {offsets = [0, 0], sizes = [8, 150], strides = [1, 1]} : vector<8x600xf32> to vector<8x150xf32>
    %210 = arith.negf %209 : vector<8x150xf32>
    %211 = math.exp %210 : vector<8x150xf32>
    %cst_51 = arith.constant 1.000000e+00 : f32
    %212 = vector.broadcast %cst_51 : f32 to vector<8x150xf32>
    %213 = arith.addf %212, %211 : vector<8x150xf32>
    %214 = arith.divf %212, %213 : vector<8x150xf32>
    %215 = vector.extract_strided_slice %208 {offsets = [0, 150], sizes = [8, 150], strides = [1, 1]} : vector<8x600xf32> to vector<8x150xf32>
    %216 = arith.negf %215 : vector<8x150xf32>
    %217 = math.exp %216 : vector<8x150xf32>
    %cst_52 = arith.constant 1.000000e+00 : f32
    %218 = vector.broadcast %cst_52 : f32 to vector<8x150xf32>
    %219 = arith.addf %218, %217 : vector<8x150xf32>
    %220 = arith.divf %218, %219 : vector<8x150xf32>
    %221 = vector.extract_strided_slice %208 {offsets = [0, 300], sizes = [8, 150], strides = [1, 1]} : vector<8x600xf32> to vector<8x150xf32>
    %222 = math.tanh %221 : vector<8x150xf32>
    %223 = vector.extract_strided_slice %208 {offsets = [0, 450], sizes = [8, 150], strides = [1, 1]} : vector<8x600xf32> to vector<8x150xf32>
    %224 = arith.negf %223 : vector<8x150xf32>
    %225 = math.exp %224 : vector<8x150xf32>
    %cst_53 = arith.constant 1.000000e+00 : f32
    %226 = vector.broadcast %cst_53 : f32 to vector<8x150xf32>
    %227 = arith.addf %226, %225 : vector<8x150xf32>
    %228 = arith.divf %226, %227 : vector<8x150xf32>
    %229 = arith.mulf %220, %203 : vector<8x150xf32>
    %230 = arith.mulf %214, %222 : vector<8x150xf32>
    %231 = arith.addf %229, %230 : vector<8x150xf32>
    %232 = math.tanh %231 : vector<8x150xf32>
    %233 = arith.mulf %228, %232 : vector<8x150xf32>
    %c0_54 = arith.constant 0 : index
    %c0_55 = arith.constant 0 : index
    %234 = vector.load %arg9[%c0_54, %c0_55] : memref<8x150xf32, #tpu.memory_space<vmem>>, vector<8x150xf32>
    tpu.vector_store %arg9[%c0_54, %c0_55], %233 {strides = array<i32>} : memref<8x150xf32, #tpu.memory_space<vmem>>, vector<8x150xf32>,
    %c0_56 = arith.constant 0 : index
    %c0_57 = arith.constant 0 : index
    %235 = vector.load %arg10[%c0_56, %c0_57] : memref<8x150xf32, #tpu.memory_space<vmem>>, vector<8x150xf32>
    tpu.vector_store %arg10[%c0_56, %c0_57], %231 {strides = array<i32>} : memref<8x150xf32, #tpu.memory_space<vmem>>, vector<8x150xf32>,
    %236 = tpu.concatenate %205, %233 in 0 : vector<8x150xf32>, vector<8x150xf32> -> vector<16x150xf32>
    %c0_58 = arith.constant 0 : index
    %c0_59 = arith.constant 0 : index
    %237 = vector.load %arg6[%c0_58, %c0_59] : memref<150x3xf32, #tpu.memory_space<vmem>>, vector<150x3xf32>
    %cst_60 = arith.constant dense<0.000000e+00> : vector<16x3xf32>
    %238 = tpu.matmul %236, %237, %cst_60 {dimension_numbers = #tpu.dot_dimension_numbers<[1], [0], [0], [1], [0, 0, 1, 1], [], []>} : vector<16x150xf32>, vector<150x3xf32>, vector<16x3xf32> -> vector<16x3xf32>
    %c0_61 = arith.constant 0 : index
    %c0_62 = arith.constant 0 : index
    %239 = vector.load %arg7[%c0_61, %c0_62] : memref<1x3xf32, #tpu.memory_space<vmem>>, vector<1x3xf32>
    %240 = vector.broadcast %239 : vector<1x3xf32> to vector<16x3xf32>
    %241 = arith.addf %238, %240 : vector<16x3xf32>
    %cst_63 = arith.constant dense<0xFF800000> : vector<16xf32>
    %242 = vector.multi_reduction <maximumf>, %241, %cst_63 [1] : vector<16x3xf32> to vector<16xf32>
    %243 = vector.shape_cast %242 : vector<16xf32> to vector<16x1xf32>
    %244 = vector.broadcast %243 : vector<16x1xf32> to vector<16x3xf32>
    %245 = arith.subf %241, %244 : vector<16x3xf32>
    %246 = math.exp %245 : vector<16x3xf32>
    %cst_64 = arith.constant dense<0.000000e+00> : vector<16xf32>
    %247 = vector.multi_reduction <add>, %246, %cst_64 [1] : vector<16x3xf32> to vector<16xf32>
    %248 = vector.shape_cast %247 : vector<16xf32> to vector<16x1xf32>
    %249 = vector.broadcast %248 : vector<16x1xf32> to vector<16x3xf32>
    %250 = arith.divf %246, %249 : vector<16x3xf32>
    %251 = vector.extract_strided_slice %250 {offsets = [0, 0], sizes = [8, 3], strides = [1, 1]} : vector<16x3xf32> to vector<8x3xf32>
    %252 = vector.extract_strided_slice %250 {offsets = [8, 0], sizes = [8, 3], strides = [1, 1]} : vector<16x3xf32> to vector<8x3xf32>
    %253 = vector.extract_strided_slice %251 {offsets = [0, 2], sizes = [8, 1], strides = [1, 1]} : vector<8x3xf32> to vector<8x1xf32>
    %254 = vector.extract_strided_slice %252 {offsets = [0, 0], sizes = [8, 2], strides = [1, 1]} : vector<8x3xf32> to vector<8x2xf32>
    %255 = tpu.concatenate %253, %254 in 1 : vector<8x1xf32>, vector<8x2xf32> -> vector<8x3xf32>
    %c0_65 = arith.constant 0 : index
    %c0_66 = arith.constant 0 : index
    %256 = vector.load %arg8[%c0_65, %c0_66] : memref<8x3xf32, #tpu.memory_space<vmem>>, vector<8x3xf32>
    tpu.vector_store %arg8[%c0_65, %c0_66], %255 {strides = array<i32>} : memref<8x3xf32, #tpu.memory_space<vmem>>, vector<8x3xf32>,
    return
  }
}

</mosaic_0001>

<llo_original>
// kernel: tpu_custom_call.1
$region0: #{tpu_custom_call.1}
  #allocation0 [shape = 'u32[]', space=smem, size = 0x4, offset = 0x4, fixed_abs, tag = 'smem constant byte address 0x4 - core index']
  #allocation1 [shape = 'u32[144,128]{1,0:T(1,128)}', space=vmem, size = 0x12000, scoped, tag = 'internal scratch']
  #allocation2 [shape = 'f32[64,600]{1,0:T(8,128)}', space=vmem, size = 0x28000, scoped, tag = 'scratch operand']
  %s0 = inlined_call_operand.hbm [shape: f32[64,300], index: 0, kind: input, shape index: {}]
  %s1 = inlined_call_operand.hbm [shape: f32[300,600], index: 1, kind: input, shape index: {}]
  %s2 = inlined_call_operand.hbm [shape: f32[150,600], index: 2, kind: input, shape index: {}]
  %s3 = inlined_call_operand.vmem [shape: f32[1,600], index: 3, kind: input, shape index: {}]
  %s4 = inlined_call_operand.vmem [shape: f32[8,150], index: 4, kind: input, shape index: {}]
  %s5 = inlined_call_operand.vmem [shape: f32[8,150], index: 5, kind: input, shape index: {}]
  %s6 = inlined_call_operand.vmem [shape: f32[150,3], index: 6, kind: input, shape index: {}]
  %s7 = inlined_call_operand.vmem [shape: f32[1,3], index: 7, kind: input, shape index: {}]
  %s8 = inlined_call_operand.vmem [shape: f32[8,3], index: 8, kind: output, shape index: {0}]
  %s9 = inlined_call_operand.hbm [shape: f32[8,150], index: 9, kind: output, shape index: {1}]
  %s10 = inlined_call_operand.hbm [shape: f32[8,150], index: 10, kind: output, shape index: {2}]
  %11 = xla_tuple %s8, %s9, %s10
  %s12 = sld [smem:[#allocation0]]
  $region70: #{tpu_custom_call.1} parent=0
    _
  %s14 = ssub.s32 1, %s12
  %s15 = scalar_select 0, %s14, %s12
  $region1: #{tpu_custom_call.1} parent=0
    #allocation3 [shape = 'u8[98304]{0}', space=vmem, size = 0x18000, scoped, tag = 'input window, operand 0, single buffered']
    #allocation4 [shape = 's32[1]{0}', space=sflag, size = 0x4, scoped, tag = 'scoped memory for tpu_custom_call.1']
    #allocation5 [shape = 's32[1]{0}', space=sflag, size = 0x4, scoped, tag = 'scoped memory for tpu_custom_call.1']
    #allocation6 [shape = 'u8[778240]{0}', space=vmem, size = 0xbe000, scoped, tag = 'input window, operand 1, single buffered']
    #allocation7 [shape = 's32[1]{0}', space=sflag, size = 0x4, scoped, tag = 'scoped memory for tpu_custom_call.1']
    #allocation8 [shape = 'u8[389120]{0}', space=vmem, size = 0x5f000, scoped, tag = 'input window, operand 2, single buffered']
    #allocation9 [shape = 'u8[8192]{0}', space=vmem, size = 0x2000, scoped, tag = 'output window, operand 1, single buffered']
    #allocation10 [shape = 'u8[8192]{0}', space=vmem, size = 0x2000, scoped, tag = 'output window, operand 2, single buffered']
    #allocation11 [shape = 's32[1]{0}', space=sflag, size = 0x4, scoped, tag = 'scoped memory for tpu_custom_call.1']
    %16 = vsyncpa [#allocation4], 0
    %17 = vsyncpa [#allocation7], 0
    %18 = vsyncpa [#allocation5], 0
    %19 = vsyncpa [#allocation11], 0
    // Predicated region
    $region2: #{tpu_custom_call.1} parent=1 // pred_check
      _
    $region3: #{tpu_custom_call.1} parent=1 // pred_check_branch
      %21 = sbr.rel (0) target = $region5
    $region4: #{tpu_custom_call.1} parent=1 // pred_region
      %s23 = ssub.s32 3072, 3072
      %24 = vsyncadd [#allocation4], %s23
      %s25 = sshll.u32 [#allocation3], 4
      %s26 = int_to_ptr.vmem [resolvable:$true] %s25
      %31 = dma.hbm_to_vmem [thread:$0]  %s0, 3072, %s26, [#allocation4], 384, 384, 24
    $region5: #{tpu_custom_call.1} parent=1 // pred_fallthru
      _
    // Predicated region
    $region6: #{tpu_custom_call.1} parent=1 // pred_check
      _
    $region7: #{tpu_custom_call.1} parent=1 // pred_check_branch
      %33 = sbr.rel (0) target = $region9
    $region8: #{tpu_custom_call.1} parent=1 // pred_region
      %s35 = ssub.s32 24320, 24320
      %36 = vsyncadd [#allocation7], %s35
      %s37 = sshll.u32 [#allocation6], 4
      %s38 = int_to_ptr.vmem [resolvable:$true] %s37
      %43 = dma.hbm_to_vmem [thread:$0]  %s1, 24320, %s38, [#allocation7], 640, 640, 40
    $region9: #{tpu_custom_call.1} parent=1 // pred_fallthru
      _
    // Predicated region
    $region10: #{tpu_custom_call.1} parent=1 // pred_check
      _
    $region11: #{tpu_custom_call.1} parent=1 // pred_check_branch
      %45 = sbr.rel (0) target = $region13
    $region12: #{tpu_custom_call.1} parent=1 // pred_region
      %s47 = ssub.s32 12160, 12160
      %48 = vsyncadd [#allocation7], %s47
      %s49 = sshll.u32 [#allocation8], 4
      %s50 = int_to_ptr.vmem [resolvable:$true] %s49
      %55 = dma.hbm_to_vmem [thread:$0]  %s2, 12160, %s50, [#allocation7], 640, 640, 40
    $region13: #{tpu_custom_call.1} parent=1 // pred_fallthru
      _
    // Predicated region
    $region14: #{tpu_custom_call.1} parent=1 // pred_check
      _
    $region15: #{tpu_custom_call.1} parent=1 // pred_check_branch
      %57 = sbr.rel (0) target = $region17
    $region16: #{tpu_custom_call.1} parent=1 // pred_region
      _
    $region17: #{tpu_custom_call.1} parent=1 // pred_fallthru
      _
    // Predicated region
    $region18: #{tpu_custom_call.1} parent=1 // pred_check
      _
    $region19: #{tpu_custom_call.1} parent=1 // pred_check_branch
      %59 = sbr.rel (0) target = $region21
    $region20: #{tpu_custom_call.1} parent=1 // pred_region
      _
    $region21: #{tpu_custom_call.1} parent=1 // pred_fallthru
      _
    // Predicated region
    $region22: #{tpu_custom_call.1} parent=1 // pred_check
      _
    $region23: #{tpu_custom_call.1} parent=1 // pred_check_branch
      %61 = sbr.rel (0) target = $region25
    $region24: #{tpu_custom_call.1} parent=1 // pred_region
      _
    $region25: #{tpu_custom_call.1} parent=1 // pred_fallthru
      _
    // Predicated region
    $region26: #{tpu_custom_call.1} parent=1 // pred_check
      _
    $region27: #{tpu_custom_call.1} parent=1 // pred_check_branch
      %63 = sbr.rel (0) target = $region29
    $region28: #{tpu_custom_call.1} parent=1 // pred_region
      _
    $region29: #{tpu_custom_call.1} parent=1 // pred_fallthru
      _
    // Predicated region
    $region30: #{tpu_custom_call.1} parent=1 // pred_check
      _
    $region31: #{tpu_custom_call.1} parent=1 // pred_check_branch
      %65 = sbr.rel (0) target = $region33
    $region32: #{tpu_custom_call.1} parent=1 // pred_region
      _
    $region33: #{tpu_custom_call.1} parent=1 // pred_fallthru
      _
    // Predicated region
    $region34: #{tpu_custom_call.1} parent=1 // pred_check
      _
    $region35: #{tpu_custom_call.1} parent=1 // pred_check_branch
      %67 = sbr.rel (0) target = $region37
    $region36: #{tpu_custom_call.1} parent=1 // pred_region
      %68 = dma.done [#allocation4], 3072
    $region37: #{tpu_custom_call.1} parent=1 // pred_fallthru
      _
    // Predicated region
    $region38: #{tpu_custom_call.1} parent=1 // pred_check
      _
    $region39: #{tpu_custom_call.1} parent=1 // pred_check_branch
      %70 = sbr.rel (0) target = $region41
    $region40: #{tpu_custom_call.1} parent=1 // pred_region
      %71 = dma.done [#allocation7], 24320
    $region41: #{tpu_custom_call.1} parent=1 // pred_fallthru
      _
    // Predicated region
    $region42: #{tpu_custom_call.1} parent=1 // pred_check
      _
    $region43: #{tpu_custom_call.1} parent=1 // pred_check_branch
      %73 = sbr.rel (0) target = $region45
    $region44: #{tpu_custom_call.1} parent=1 // pred_region
      %74 = dma.done [#allocation7], 12160
    $region45: #{tpu_custom_call.1} parent=1 // pred_fallthru
      _
    %v75 = vld [vmem:[#allocation3] sm:$0xff]
    %v76 = vld [vmem:[#allocation3 + $0x8] sm:$0xff]
    %v77 = vld [vmem:[#allocation3 + $0x10] sm:$0xff]
    %v78 = vld [vmem:[#allocation3 + $0x18] sm:$0xff]
    %v79 = vld [vmem:[#allocation3 + $0x20] sm:$0xff]
    %v80 = vld [vmem:[#allocation3 + $0x28] sm:$0xff]
    %v81 = vld [vmem:[#allocation3 + $0x30] sm:$0xff]
    %v82 = vld [vmem:[#allocation3 + $0x38] sm:$0xff]
    %v83 = vld [vmem:[#allocation3 + $0x40] sm:$0xff]
    %v84 = vld [vmem:[#allocation3 + $0x48] sm:$0xff]
    %v85 = vld [vmem:[#allocation3 + $0x50] sm:$0xff]
    %v86 = vld [vmem:[#allocation3 + $0x58] sm:$0xff]
    %v87 = vld [vmem:[#allocation3 + $0x60] sm:$0xff]
    %v88 = vld [vmem:[#allocation3 + $0x68] sm:$0xff]
    %v89 = vld [vmem:[#allocation3 + $0x70] sm:$0xff]
    %v90 = vld [vmem:[#allocation3 + $0x78] sm:$0xff]
    %v91 = vld [vmem:[#allocation3 + $0x80] sm:$0xff]
    %v92 = vld [vmem:[#allocation3 + $0x88] sm:$0xff]
    %v93 = vld [vmem:[#allocation3 + $0x90] sm:$0xff]
    %v94 = vld [vmem:[#allocation3 + $0x98] sm:$0xff]
    %v95 = vld [vmem:[#allocation3 + $0xa0] sm:$0xff]
    %v96 = vld [vmem:[#allocation3 + $0xa8] sm:$0xff]
    %v97 = vld [vmem:[#allocation3 + $0xb0] sm:$0xff]
    %v98 = vld [vmem:[#allocation3 + $0xb8] sm:$0xff]
    %v99 = vld [vmem:[#allocation6] sm:$0xff]
    %v100 = vld [vmem:[#allocation6 + $0x8] sm:$0xff]
    %v101 = vld [vmem:[#allocation6 + $0x10] sm:$0xff]
    %v102 = vld [vmem:[#allocation6 + $0x18] sm:$0xff]
    %v103 = vld [vmem:[#allocation6 + $0x20] sm:$0xff]
    %v104 = vld [vmem:[#allocation6 + $0x28] sm:$0xff]
    %v105 = vld [vmem:[#allocation6 + $0x30] sm:$0xff]
    %v106 = vld [vmem:[#allocation6 + $0x38] sm:$0xff]
    %v107 = vld [vmem:[#allocation6 + $0x40] sm:$0xff]
    %v108 = vld [vmem:[#allocation6 + $0x48] sm:$0xff]
    %v109 = vld [vmem:[#allocation6 + $0x50] sm:$0xff]
    %v110 = vld [vmem:[#allocation6 + $0x58] sm:$0xff]
    %v111 = vld [vmem:[#allocation6 + $0x60] sm:$0xff]
    %v112 = vld [vmem:[#allocation6 + $0x68] sm:$0xff]
    %v113 = vld [vmem:[#allocation6 + $0x70] sm:$0xff]
    %v114 = vld [vmem:[#allocation6 + $0x78] sm:$0xff]
    %v115 = vld [vmem:[#allocation6 + $0x80] sm:$0xff]
    %v116 = vld [vmem:[#allocation6 + $0x88] sm:$0xff]
    %v117 = vld [vmem:[#allocation6 + $0x90] sm:$0xff]
    %v118 = vld [vmem:[#allocation6 + $0x98] sm:$0xff]
    %v119 = vld [vmem:[#allocation6 + $0xa0] sm:$0xff]
    %v120 = vld [vmem:[#allocation6 + $0xa8] sm:$0xff]
    %v121 = vld [vmem:[#allocation6 + $0xb0] sm:$0xff]
    %v122 = vld [vmem:[#allocation6 + $0xb8] sm:$0xff]
    %v123 = vld [vmem:[#allocation6 + $0xc0] sm:$0xff]
    %v124 = vld [vmem:[#allocation6 + $0xc8] sm:$0xff]
    %v125 = vld [vmem:[#allocation6 + $0xd0] sm:$0xff]
    %v126 = vld [vmem:[#allocation6 + $0xd8] sm:$0xff]
    %v127 = vld [vmem:[#allocation6 + $0xe0] sm:$0xff]
    %v128 = vld [vmem:[#allocation6 + $0xe8] sm:$0xff]
    %v129 = vld [vmem:[#allocation6 + $0xf0] sm:$0xff]
    %v130 = vld [vmem:[#allocation6 + $0xf8] sm:$0xff]
    %v131 = vld [vmem:[#allocation6 + $0x100] sm:$0xff]
    %v132 = vld [vmem:[#allocation6 + $0x108] sm:$0xff]
    %v133 = vld [vmem:[#allocation6 + $0x110] sm:$0xff]
    %v134 = vld [vmem:[#allocation6 + $0x118] sm:$0xff]
    %v135 = vld [vmem:[#allocation6 + $0x120] sm:$0xff]
    %v136 = vld [vmem:[#allocation6 + $0x128] sm:$0xff]
    %v137 = vld [vmem:[#allocation6 + $0x130] sm:$0xff]
    %v138 = vld [vmem:[#allocation6 + $0x138] sm:$0xff]
    %v139 = vld [vmem:[#allocation6 + $0x140] sm:$0xff]
    %v140 = vld [vmem:[#allocation6 + $0x148] sm:$0xff]
    %v141 = vld [vmem:[#allocation6 + $0x150] sm:$0xff]
    %v142 = vld [vmem:[#allocation6 + $0x158] sm:$0xff]
    %v143 = vld [vmem:[#allocation6 + $0x160] sm:$0xff]
    %v144 = vld [vmem:[#allocation6 + $0x168] sm:$0xff]
    %v145 = vld [vmem:[#allocation6 + $0x170] sm:$0xff]
    %v146 = vld [vmem:[#allocation6 + $0x178] sm:$0xff]
    %v147 = vld [vmem:[#allocation6 + $0x180] sm:$0xff]
    %v148 = vld [vmem:[#allocation6 + $0x188] sm:$0xff]
    %v149 = vld [vmem:[#allocation6 + $0x190] sm:$0xff]
    %v150 = vld [vmem:[#allocation6 + $0x198] sm:$0xff]
    %v151 = vld [vmem:[#allocation6 + $0x1a0] sm:$0xff]
    %v152 = vld [vmem:[#allocation6 + $0x1a8] sm:$0xff]
    %v153 = vld [vmem:[#allocation6 + $0x1b0] sm:$0xff]
    %v154 = vld [vmem:[#allocation6 + $0x1b8] sm:$0xff]
    %v155 = vld [vmem:[#allocation6 + $0x1c0] sm:$0xff]
    %v156 = vld [vmem:[#allocation6 + $0x1c8] sm:$0xff]
    %v157 = vld [vmem:[#allocation6 + $0x1d0] sm:$0xff]
    %v158 = vld [vmem:[#allocation6 + $0x1d8] sm:$0xff]
    %v159 = vld [vmem:[#allocation6 + $0x1e0] sm:$0xff]
    %v160 = vld [vmem:[#allocation6 + $0x1e8] sm:$0xff]
    %v161 = vld [vmem:[#allocation6 + $0x1f0] sm:$0xff]
    %v162 = vld [vmem:[#allocation6 + $0x1f8] sm:$0xff]
    %v163 = vld [vmem:[#allocation6 + $0x200] sm:$0xff]
    %v164 = vld [vmem:[#allocation6 + $0x208] sm:$0xff]
    %v165 = vld [vmem:[#allocation6 + $0x210] sm:$0xff]
    %v166 = vld [vmem:[#allocation6 + $0x218] sm:$0xff]
    %v167 = vld [vmem:[#allocation6 + $0x220] sm:$0xff]
    %v168 = vld [vmem:[#allocation6 + $0x228] sm:$0xff]
    %v169 = vld [vmem:[#allocation6 + $0x230] sm:$0xff]
    %v170 = vld [vmem:[#allocation6 + $0x238] sm:$0xff]
    %v171 = vld [vmem:[#allocation6 + $0x240] sm:$0xff]
    %v172 = vld [vmem:[#allocation6 + $0x248] sm:$0xff]
    %v173 = vld [vmem:[#allocation6 + $0x250] sm:$0xff]
    %v174 = vld [vmem:[#allocation6 + $0x258] sm:$0xff]
    %v175 = vld [vmem:[#allocation6 + $0x260] sm:$0xff]
    %v176 = vld [vmem:[#allocation6 + $0x268] sm:$0xff]
    %v177 = vld [vmem:[#allocation6 + $0x270] sm:$0xff]
    %v178 = vld [vmem:[#allocation6 + $0x278] sm:$0xff]
    %v179 = vld [vmem:[#allocation6 + $0x280] sm:$0xff]
    %v180 = vld [vmem:[#allocation6 + $0x288] sm:$0xff]
    %v181 = vld [vmem:[#allocation6 + $0x290] sm:$0xff]
    %v182 = vld [vmem:[#allocation6 + $0x298] sm:$0xff]
    %v183 = vld [vmem:[#allocation6 + $0x2a0] sm:$0xff]
    %v184 = vld [vmem:[#allocation6 + $0x2a8] sm:$0xff]
    %v185 = vld [vmem:[#allocation6 + $0x2b0] sm:$0xff]
    %v186 = vld [vmem:[#allocation6 + $0x2b8] sm:$0xff]
    %v187 = vld [vmem:[#allocation6 + $0x2c0] sm:$0xff]
    %v188 = vld [vmem:[#allocation6 + $0x2c8] sm:$0xff]
    %v189 = vld [vmem:[#allocation6 + $0x2d0] sm:$0xff]
    %v190 = vld [vmem:[#allocation6 + $0x2d8] sm:$0xff]
    %v191 = vld [vmem:[#allocation6 + $0x2e0] sm:$0xff]
    %v192 = vld [vmem:[#allocation6 + $0x2e8] sm:$0xff]
    %v193 = vld [vmem:[#allocation6 + $0x2f0] sm:$0xff]
    %v194 = vld [vmem:[#allocation6 + $0x2f8] sm:$0xff]
    %v195 = vld [vmem:[#allocation6 + $0x300] sm:$0xff]
    %v196 = vld [vmem:[#allocation6 + $0x308] sm:$0xff]
    %v197 = vld [vmem:[#allocation6 + $0x310] sm:$0xff]
    %v198 = vld [vmem:[#allocation6 + $0x318] sm:$0xff]
    %v199 = vld [vmem:[#allocation6 + $0x320] sm:$0xff]
    %v200 = vld [vmem:[#allocation6 + $0x328] sm:$0xff]
    %v201 = vld [vmem:[#allocation6 + $0x330] sm:$0xff]
    %v202 = vld [vmem:[#allocation6 + $0x338] sm:$0xff]
    %v203 = vld [vmem:[#allocation6 + $0x340] sm:$0xff]
    %v204 = vld [vmem:[#allocation6 + $0x348] sm:$0xff]
    %v205 = vld [vmem:[#allocation6 + $0x350] sm:$0xff]
    %v206 = vld [vmem:[#allocation6 + $0x358] sm:$0xff]
    %v207 = vld [vmem:[#allocation6 + $0x360] sm:$0xff]
    %v208 = vld [vmem:[#allocation6 + $0x368] sm:$0xff]
    %v209 = vld [vmem:[#allocation6 + $0x370] sm:$0xff]
    %v210 = vld [vmem:[#allocation6 + $0x378] sm:$0xff]
    %v211 = vld [vmem:[#allocation6 + $0x380] sm:$0xff]
    %v212 = vld [vmem:[#allocation6 + $0x388] sm:$0xff]
    %v213 = vld [vmem:[#allocation6 + $0x390] sm:$0xff]
    %v214 = vld [vmem:[#allocation6 + $0x398] sm:$0xff]
    %v215 = vld [vmem:[#allocation6 + $0x3a0] sm:$0xff]
    %v216 = vld [vmem:[#allocation6 + $0x3a8] sm:$0xff]
    %v217 = vld [vmem:[#allocation6 + $0x3b0] sm:$0xff]
    %v218 = vld [vmem:[#allocation6 + $0x3b8] sm:$0xff]
    %v219 = vld [vmem:[#allocation6 + $0x3c0] sm:$0xff]
    %v220 = vld [vmem:[#allocation6 + $0x3c8] sm:$0xff]
    %v221 = vld [vmem:[#allocation6 + $0x3d0] sm:$0xff]
    %v222 = vld [vmem:[#allocation6 + $0x3d8] sm:$0xff]
    %v223 = vld [vmem:[#allocation6 + $0x3e0] sm:$0xff]
    %v224 = vld [vmem:[#allocation6 + $0x3e8] sm:$0xff]
    %v225 = vld [vmem:[#allocation6 + $0x3f0] sm:$0xff]
    %v226 = vld [vmem:[#allocation6 + $0x3f8] sm:$0xff]
    %v227 = vld [vmem:[#allocation6 + $0x400] sm:$0xff]
    %v228 = vld [vmem:[#allocation6 + $0x408] sm:$0xff]
    %v229 = vld [vmem:[#allocation6 + $0x410] sm:$0xff]
    %v230 = vld [vmem:[#allocation6 + $0x418] sm:$0xff]
    %v231 = vld [vmem:[#allocation6 + $0x420] sm:$0xff]
    %v232 = vld [vmem:[#allocation6 + $0x428] sm:$0xff]
    %v233 = vld [vmem:[#allocation6 + $0x430] sm:$0xff]
    %v234 = vld [vmem:[#allocation6 + $0x438] sm:$0xff]
    %v235 = vld [vmem:[#allocation6 + $0x440] sm:$0xff]
    %v236 = vld [vmem:[#allocation6 + $0x448] sm:$0xff]
    %v237 = vld [vmem:[#allocation6 + $0x450] sm:$0xff]
    %v238 = vld [vmem:[#allocation6 + $0x458] sm:$0xff]
    %v239 = vld [vmem:[#allocation6 + $0x460] sm:$0xff]
    %v240 = vld [vmem:[#allocation6 + $0x468] sm:$0xff]
    %v241 = vld [vmem:[#allocation6 + $0x470] sm:$0xff]
    %v242 = vld [vmem:[#allocation6 + $0x478] sm:$0xff]
    %v243 = vld [vmem:[#allocation6 + $0x480] sm:$0xff]
    %v244 = vld [vmem:[#allocation6 + $0x488] sm:$0xff]
    %v245 = vld [vmem:[#allocation6 + $0x490] sm:$0xff]
    %v246 = vld [vmem:[#allocation6 + $0x498] sm:$0xff]
    %v247 = vld [vmem:[#allocation6 + $0x4a0] sm:$0xff]
    %v248 = vld [vmem:[#allocation6 + $0x4a8] sm:$0xff]
    %v249 = vld [vmem:[#allocation6 + $0x4b0] sm:$0xff]
    %v250 = vld [vmem:[#allocation6 + $0x4b8] sm:$0xff]
    %v251 = vld [vmem:[#allocation6 + $0x4c0] sm:$0xff]
    %v252 = vld [vmem:[#allocation6 + $0x4c8] sm:$0xff]
    %v253 = vld [vmem:[#allocation6 + $0x4d0] sm:$0xff]
    %v254 = vld [vmem:[#allocation6 + $0x4d8] sm:$0xff]
    %v255 = vld [vmem:[#allocation6 + $0x4e0] sm:$0xff]
    %v256 = vld [vmem:[#allocation6 + $0x4e8] sm:$0xff]
    %v257 = vld [vmem:[#allocation6 + $0x4f0] sm:$0xff]
    %v258 = vld [vmem:[#allocation6 + $0x4f8] sm:$0xff]
    %v259 = vld [vmem:[#allocation6 + $0x500] sm:$0xff]
    %v260 = vld [vmem:[#allocation6 + $0x508] sm:$0xff]
    %v261 = vld [vmem:[#allocation6 + $0x510] sm:$0xff]
    %v262 = vld [vmem:[#allocation6 + $0x518] sm:$0xff]
    %v263 = vld [vmem:[#allocation6 + $0x520] sm:$0xff]
    %v264 = vld [vmem:[#allocation6 + $0x528] sm:$0xff]
    %v265 = vld [vmem:[#allocation6 + $0x530] sm:$0xff]
    %v266 = vld [vmem:[#allocation6 + $0x538] sm:$0xff]
    %v267 = vld [vmem:[#allocation6 + $0x540] sm:$0xff]
    %v268 = vld [vmem:[#allocation6 + $0x548] sm:$0xff]
    %v269 = vld [vmem:[#allocation6 + $0x550] sm:$0xff]
    %v270 = vld [vmem:[#allocation6 + $0x558] sm:$0xff]
    %v271 = vld [vmem:[#allocation6 + $0x560] sm:$0xff]
    %v272 = vld [vmem:[#allocation6 + $0x568] sm:$0xff]
    %v273 = vld [vmem:[#allocation6 + $0x570] sm:$0xff]
    %v274 = vld [vmem:[#allocation6 + $0x578] sm:$0xff]
    %v275 = vld [vmem:[#allocation6 + $0x580] sm:$0xff]
    %v276 = vld [vmem:[#allocation6 + $0x588] sm:$0xff]
    %v277 = vld [vmem:[#allocation6 + $0x590] sm:$0xff]
    %v278 = vld [vmem:[#allocation6 + $0x598] sm:$0xff]
    %v279 = vld [vmem:[#allocation6 + $0x5a0] sm:$0xff]
    %v280 = vld [vmem:[#allocation6 + $0x5a8] sm:$0xff]
    %v281 = vld [vmem:[#allocation6 + $0x5b0] sm:$0xff]
    %v282 = vld [vmem:[#allocation6 + $0x5b8] sm:$0xff]
    %v283 = vld [vmem:[#allocation6 + $0x5c0] sm:$0xff]
    %v284 = vld [vmem:[#allocation6 + $0x5c8] sm:$0xf]
    %v285 = vld [vmem:[#allocation6 + $0x5d0] sm:$0xf]
    %v286 = vld [vmem:[#allocation6 + $0x5d8] sm:$0xf]
    %v287 = vld [vmem:[#allocation6 + $0x5e0] sm:$0xf]
    %v288 = vld [vmem:[#allocation6 + $0x5e8] sm:$0xf]
    %v289 = vld [vmem:[%s3] sm:$0x1f]
    %v291 = vlaneseq
    %v292 = vshrl.u32 %v291, 7
    %v293 = vsub.s32 0, %v292
    %v294 = vrot.slane %v289, %v293
    %v295 = vlaneseq
    %v296 = vshrl.u32 %v295, 7
    %v297 = vsub.s32 1, %v296
    %v298 = vrot.slane %v289, %v297
    %v299 = vlaneseq
    %v300 = vshrl.u32 %v299, 7
    %v301 = vsub.s32 2, %v300
    %v302 = vrot.slane %v289, %v301
    %v303 = vlaneseq
    %v304 = vshrl.u32 %v303, 7
    %v305 = vsub.s32 3, %v304
    %v306 = vrot.slane %v289, %v305
    %v307 = vlaneseq
    %v308 = vshrl.u32 %v307, 7
    %v309 = vsub.s32 4, %v308
    %v310 = vrot.slane %v289, %v309
    %vm316 = vcmask 359424
    %v318 = vsel %vm316, %v77, 0
    %v321 = vsel %vm316, %v80, 0
    %v324 = vsel %vm316, %v83, 0
    %v327 = vsel %vm316, %v86, 0
    %v330 = vsel %vm316, %v89, 0
    %v333 = vsel %vm316, %v92, 0
    %v336 = vsel %vm316, %v95, 0
    %v339 = vsel %vm316, %v98, 0
    %vm341 = vcmask 1043456
    %v343 = vsel %vm341, %v284, 0
    %v346 = vsel %vm341, %v285, 0
    %v349 = vsel %vm341, %v286, 0
    %v352 = vsel %vm341, %v287, 0
    %v355 = vsel %vm341, %v288, 0
    %357 = vmatprep.subr.mxu0 %v100
    %358 = vmatpush1.msra.mxu0 %v99
    %359 = vmatprep.subr.mxu0 %v105
    %360 = vmatpush1.msra.mxu0 %v104
    %361 = vmatprep.subr.mxu0 %v110
    %362 = vmatpush1.msra.mxu0 %v109
    %363 = vmatprep.subr.mxu0 %v115
    %364 = vmatpush1.msra.mxu0 %v114
    %365 = vmatprep.subr.mxu0 %v120
    %366 = vmatpush1.msra.mxu0 %v119
    %367 = vmatprep.subr.mxu0 %v125
    %368 = vmatpush1.msra.mxu0 %v124
    %369 = vmatprep.subr.mxu0 %v130
    %370 = vmatpush1.msra.mxu0 %v129
    %371 = vmatprep.subr.mxu0 %v135
    %372 = vmatpush1.msra.mxu0 %v134
    %373 = vmatprep.subr.mxu0 %v140
    %374 = vmatpush1.msra.mxu0 %v139
    %375 = vmatprep.subr.mxu0 %v145
    %376 = vmatpush1.msra.mxu0 %v144
    %377 = vmatprep.subr.mxu0 %v150
    %378 = vmatpush1.msra.mxu0 %v149
    %379 = vmatprep.subr.mxu0 %v155
    %380 = vmatpush1.msra.mxu0 %v154
    %381 = vmatprep.subr.mxu0 %v160
    %382 = vmatpush1.msra.mxu0 %v159
    %383 = vmatprep.subr.mxu0 %v165
    %384 = vmatpush1.msra.mxu0 %v164
    %385 = vmatprep.subr.mxu0 %v170
    %386 = vmatpush1.msra.mxu0 %v169
    %387 = vmatprep.subr.mxu0 %v175
    %388 = vmatpush1.msra.mxu0 %v174
    %389 = vmatprep.subr.mxu0 %v180
    %390 = vmatpush1.msra.mxu0 %v179
    %391 = vmatprep.subr.mxu0 %v185
    %392 = vmatpush1.msra.mxu0 %v184
    %393 = vmatprep.subr.mxu0 %v190
    %394 = vmatpush1.msra.mxu0 %v189
    %395 = vmatprep.subr.mxu0 %v195
    %396 = vmatpush1.msra.mxu0 %v194
    %397 = vmatprep.subr.mxu0 %v200
    %398 = vmatpush1.msra.mxu0 %v199
    %399 = vmatprep.subr.mxu0 %v205
    %400 = vmatpush1.msra.mxu0 %v204
    %401 = vmatprep.subr.mxu0 %v210
    %402 = vmatpush1.msra.mxu0 %v209
    %403 = vmatprep.subr.mxu0 %v215
    %404 = vmatpush1.msra.mxu0 %v214
    %405 = vmatprep.subr.mxu0 %v220
    %406 = vmatpush1.msra.mxu0 %v219
    %407 = vmatprep.subr.mxu0 %v225
    %408 = vmatpush1.msra.mxu0 %v224
    %409 = vmatprep.subr.mxu0 %v230
    %410 = vmatpush1.msra.mxu0 %v229
    %411 = vmatprep.subr.mxu0 %v235
    %412 = vmatpush1.msra.mxu0 %v234
    %413 = vmatprep.subr.mxu0 %v240
    %414 = vmatpush1.msra.mxu0 %v239
    %415 = vmatprep.subr.mxu0 %v245
    %416 = vmatpush1.msra.mxu0 %v244
    %417 = vmatprep.subr.mxu0 %v250
    %418 = vmatpush1.msra.mxu0 %v249
    %419 = vmatprep.subr.mxu0 %v255
    %420 = vmatpush1.msra.mxu0 %v254
    %421 = vmatprep.mubr.f32.mxu0 %v76
    %422 = vmatmul.mubr.f32.gmra.mrb[0].mxu0 %v75
    %v423 = vpop.f32.mrb[0].mxu0
    %v424 = vadd.f32 %v294, %v423
    %v425 = vpop.f32.mrb[0].mxu0
    %v426 = vadd.f32 %v298, %v425
    %427 = vmatprep.mubr.f32.mxu0 %v79
    %428 = vmatmul.mubr.f32.gmra.mrb[0].mxu0 %v78
    %v429 = vpop.f32.mrb[0].mxu0
    %v430 = vadd.f32 %v294, %v429
    %v431 = vpop.f32.mrb[0].mxu0
    %v432 = vadd.f32 %v298, %v431
    %433 = vmatprep.mubr.f32.mxu0 %v82
    %434 = vmatmul.mubr.f32.gmra.mrb[0].mxu0 %v81
    %v435 = vpop.f32.mrb[0].mxu0
    %v436 = vadd.f32 %v294, %v435
    %v437 = vpop.f32.mrb[0].mxu0
    %v438 = vadd.f32 %v298, %v437
    %439 = vmatprep.mubr.f32.mxu0 %v85
    %440 = vmatmul.mubr.f32.gmra.mrb[0].mxu0 %v84
    %v441 = vpop.f32.mrb[0].mxu0
    %v442 = vadd.f32 %v294, %v441
    %v443 = vpop.f32.mrb[0].mxu0
    %v444 = vadd.f32 %v298, %v443
    %445 = vmatprep.mubr.f32.mxu0 %v88
    %446 = vmatmul.mubr.f32.gmra.mrb[0].mxu0 %v87
    %v447 = vpop.f32.mrb[0].mxu0
    %v448 = vadd.f32 %v294, %v447
    %v449 = vpop.f32.mrb[0].mxu0
    %v450 = vadd.f32 %v298, %v449
    %451 = vmatprep.mubr.f32.mxu0 %v91
    %452 = vmatmul.mubr.f32.gmra.mrb[0].mxu0 %v90
    %v453 = vpop.f32.mrb[0].mxu0
    %v454 = vadd.f32 %v294, %v453
    %v455 = vpop.f32.mrb[0].mxu0
    %v456 = vadd.f32 %v298, %v455
    %457 = vmatprep.mubr.f32.mxu0 %v94
    %458 = vmatmul.mubr.f32.gmra.mrb[0].mxu0 %v93
    %v459 = vpop.f32.mrb[0].mxu0
    %v460 = vadd.f32 %v294, %v459
    %v461 = vpop.f32.mrb[0].mxu0
    %v462 = vadd.f32 %v298, %v461
    %463 = vmatprep.mubr.f32.mxu0 %v97
    %464 = vmatmul.mubr.f32.gmra.mrb[0].mxu0 %v96
    %v465 = vpop.f32.mrb[0].mxu0
    %v466 = vadd.f32 %v294, %v465
    %v467 = vpop.f32.mrb[0].mxu0
    %v468 = vadd.f32 %v298, %v467
    %469 = vdwg.mxu0
    %470 = vmatprep.subr.mxu0 %v260
    %471 = vmatpush1.msra.mxu0 %v259
    %472 = vmatprep.subr.mxu0 %v265
    %473 = vmatpush1.msra.mxu0 %v264
    %474 = vmatprep.subr.mxu0 %v270
    %475 = vmatpush1.msra.mxu0 %v269
    %476 = vmatprep.subr.mxu0 %v275
    %477 = vmatpush1.msra.mxu0 %v274
    %478 = vmatprep.subr.mxu0 %v280
    %479 = vmatpush1.msra.mxu0 %v279
    %480 = vmatprep.subr.mxu0 %v346
    %481 = vmatpush1.msra.mxu0 %v343
    %482 = vmatprep.subr.mxu0 0.0
    %483 = vmatpush1.msra.mxu0 0.0
    %484 = vmatprep.subr.mxu0 0.0
    %485 = vmatpush1.msra.mxu0 0.0
    %486 = vmatprep.subr.mxu0 0.0
    %487 = vmatpush1.msra.mxu0 0.0
    %488 = vmatprep.subr.mxu0 0.0
    %489 = vmatpush1.msra.mxu0 0.0
    %490 = vmatprep.subr.mxu0 0.0
    %491 = vmatpush1.msra.mxu0 0.0
    %492 = vmatprep.subr.mxu0 0.0
    %493 = vmatpush1.msra.mxu0 0.0
    %494 = vmatprep.subr.mxu0 0.0
    %495 = vmatpush1.msra.mxu0 0.0
    %496 = vmatprep.subr.mxu0 0.0
    %497 = vmatpush1.msra.mxu0 0.0
    %498 = vmatprep.subr.mxu0 0.0
    %499 = vmatpush1.msra.mxu0 0.0
    %500 = vmatprep.subr.mxu0 0.0
    %501 = vmatpush1.msra.mxu0 0.0
    %502 = vmatprep.subr.mxu0 0.0
    %503 = vmatpush1.msra.mxu0 0.0
    %504 = vmatprep.subr.mxu0 0.0
    %505 = vmatpush1.msra.mxu0 0.0
    %506 = vmatprep.subr.mxu0 0.0
    %507 = vmatpush1.msra.mxu0 0.0
    %508 = vmatprep.subr.mxu0 0.0
    %509 = vmatpush1.msra.mxu0 0.0
    %510 = vmatprep.subr.mxu0 0.0
    %511 = vmatpush1.msra.mxu0 0.0
    %512 = vmatprep.subr.mxu0 0.0
    %513 = vmatpush1.msra.mxu0 0.0
    %514 = vmatprep.subr.mxu0 0.0
    %515 = vmatpush1.msra.mxu0 0.0
    %516 = vmatprep.subr.mxu0 0.0
    %517 = vmatpush1.msra.mxu0 0.0
    %518 = vmatprep.subr.mxu0 0.0
    %519 = vmatpush1.msra.mxu0 0.0
    %520 = vmatprep.subr.mxu0 0.0
    %521 = vmatpush1.msra.mxu0 0.0
    %522 = vmatprep.subr.mxu0 0.0
    %523 = vmatpush1.msra.mxu0 0.0
    %524 = vmatprep.subr.mxu0 0.0
    %525 = vmatpush1.msra.mxu0 0.0
    %526 = vmatprep.subr.mxu0 0.0
    %527 = vmatpush1.msra.mxu0 0.0
    %528 = vmatprep.subr.mxu0 0.0
    %529 = vmatpush1.msra.mxu0 0.0
    %530 = vmatprep.subr.mxu0 0.0
    %531 = vmatpush1.msra.mxu0 0.0
    %532 = vmatprep.subr.mxu0 0.0
    %533 = vmatpush1.msra.mxu0 0.0
    %534 = vmatprep.mubr.f32.mxu0 0.0
    %535 = vmatmul.mubr.f32.gmra.mrb[0].mxu0 %v318
    %v536 = vpop.f32.mrb[0].mxu0
    %v537 = vadd.f32 %v424, %v536
    %v538 = vpop.f32.mrb[0].mxu0
    %v539 = vadd.f32 %v426, %v538
    %540 = vmatprep.mubr.f32.mxu0 0.0
    %541 = vmatmul.mubr.f32.gmra.mrb[0].mxu0 %v321
    %v542 = vpop.f32.mrb[0].mxu0
    %v543 = vadd.f32 %v430, %v542
    %v544 = vpop.f32.mrb[0].mxu0
    %v545 = vadd.f32 %v432, %v544
    %546 = vmatprep.mubr.f32.mxu0 0.0
    %547 = vmatmul.mubr.f32.gmra.mrb[0].mxu0 %v324
    %v548 = vpop.f32.mrb[0].mxu0
    %v549 = vadd.f32 %v436, %v548
    %v550 = vpop.f32.mrb[0].mxu0
    %v551 = vadd.f32 %v438, %v550
    %552 = vmatprep.mubr.f32.mxu0 0.0
    %553 = vmatmul.mubr.f32.gmra.mrb[0].mxu0 %v327
    %v554 = vpop.f32.mrb[0].mxu0
    %v555 = vadd.f32 %v442, %v554
    %v556 = vpop.f32.mrb[0].mxu0
    %v557 = vadd.f32 %v444, %v556
    %558 = vmatprep.mubr.f32.mxu0 0.0
    %559 = vmatmul.mubr.f32.gmra.mrb[0].mxu0 %v330
    %v560 = vpop.f32.mrb[0].mxu0
    %v561 = vadd.f32 %v448, %v560
    %v562 = vpop.f32.mrb[0].mxu0
    %v563 = vadd.f32 %v450, %v562
    %564 = vmatprep.mubr.f32.mxu0 0.0
    %565 = vmatmul.mubr.f32.gmra.mrb[0].mxu0 %v333
    %v566 = vpop.f32.mrb[0].mxu0
    %v567 = vadd.f32 %v454, %v566
    %v568 = vpop.f32.mrb[0].mxu0
    %v569 = vadd.f32 %v456, %v568
    %570 = vmatprep.mubr.f32.mxu0 0.0
    %571 = vmatmul.mubr.f32.gmra.mrb[0].mxu0 %v336
    %v572 = vpop.f32.mrb[0].mxu0
    %v573 = vadd.f32 %v460, %v572
    %v574 = vpop.f32.mrb[0].mxu0
    %v575 = vadd.f32 %v462, %v574
    %576 = vmatprep.mubr.f32.mxu0 0.0
    %577 = vmatmul.mubr.f32.gmra.mrb[0].mxu0 %v339
    %v578 = vpop.f32.mrb[0].mxu0
    %v579 = vadd.f32 %v466, %v578
    %v580 = vpop.f32.mrb[0].mxu0
    %v581 = vadd.f32 %v468, %v580
    %582 = vdwg.mxu0
    %583 = vmatprep.subr.mxu0 %v102
    %584 = vmatpush1.msra.mxu0 %v101
    %585 = vmatprep.subr.mxu0 %v107
    %586 = vmatpush1.msra.mxu0 %v106
    %587 = vmatprep.subr.mxu0 %v112
    %588 = vmatpush1.msra.mxu0 %v111
    %589 = vmatprep.subr.mxu0 %v117
    %590 = vmatpush1.msra.mxu0 %v116
    %591 = vmatprep.subr.mxu0 %v122
    %592 = vmatpush1.msra.mxu0 %v121
    %593 = vmatprep.subr.mxu0 %v127
    %594 = vmatpush1.msra.mxu0 %v126
    %595 = vmatprep.subr.mxu0 %v132
    %596 = vmatpush1.msra.mxu0 %v131
    %597 = vmatprep.subr.mxu0 %v137
    %598 = vmatpush1.msra.mxu0 %v136
    %599 = vmatprep.subr.mxu0 %v142
    %600 = vmatpush1.msra.mxu0 %v141
    %601 = vmatprep.subr.mxu0 %v147
    %602 = vmatpush1.msra.mxu0 %v146
    %603 = vmatprep.subr.mxu0 %v152
    %604 = vmatpush1.msra.mxu0 %v151
    %605 = vmatprep.subr.mxu0 %v157
    %606 = vmatpush1.msra.mxu0 %v156
    %607 = vmatprep.subr.mxu0 %v162
    %608 = vmatpush1.msra.mxu0 %v161
    %609 = vmatprep.subr.mxu0 %v167
    %610 = vmatpush1.msra.mxu0 %v166
    %611 = vmatprep.subr.mxu0 %v172
    %612 = vmatpush1.msra.mxu0 %v171
    %613 = vmatprep.subr.mxu0 %v177
    %614 = vmatpush1.msra.mxu0 %v176
    %615 = vmatprep.subr.mxu0 %v182
    %616 = vmatpush1.msra.mxu0 %v181
    %617 = vmatprep.subr.mxu0 %v187
    %618 = vmatpush1.msra.mxu0 %v186
    %619 = vmatprep.subr.mxu0 %v192
    %620 = vmatpush1.msra.mxu0 %v191
    %621 = vmatprep.subr.mxu0 %v197
    %622 = vmatpush1.msra.mxu0 %v196
    %623 = vmatprep.subr.mxu0 %v202
    %624 = vmatpush1.msra.mxu0 %v201
    %625 = vmatprep.subr.mxu0 %v207
    %626 = vmatpush1.msra.mxu0 %v206
    %627 = vmatprep.subr.mxu0 %v212
    %628 = vmatpush1.msra.mxu0 %v211
    %629 = vmatprep.subr.mxu0 %v217
    %630 = vmatpush1.msra.mxu0 %v216
    %631 = vmatprep.subr.mxu0 %v222
    %632 = vmatpush1.msra.mxu0 %v221
    %633 = vmatprep.subr.mxu0 %v227
    %634 = vmatpush1.msra.mxu0 %v226
    %635 = vmatprep.subr.mxu0 %v232
    %636 = vmatpush1.msra.mxu0 %v231
    %637 = vmatprep.subr.mxu0 %v237
    %638 = vmatpush1.msra.mxu0 %v236
    %639 = vmatprep.subr.mxu0 %v242
    %640 = vmatpush1.msra.mxu0 %v241
    %641 = vmatprep.subr.mxu0 %v247
    %642 = vmatpush1.msra.mxu0 %v246
    %643 = vmatprep.subr.mxu0 %v252
    %644 = vmatpush1.msra.mxu0 %v251
    %645 = vmatprep.subr.mxu0 %v257
    %646 = vmatpush1.msra.mxu0 %v256
    %647 = vmatprep.mubr.f32.mxu0 %v76
    %648 = vmatmul.mubr.f32.gmra.mrb[0].mxu0 %v75
    %v649 = vpop.f32.mrb[0].mxu0
    %v650 = vadd.f32 %v302, %v649
    %v651 = vpop.f32.mrb[0].mxu0
    %v652 = vadd.f32 %v306, %v651
    %653 = vmatprep.mubr.f32.mxu0 %v79
    %654 = vmatmul.mubr.f32.gmra.mrb[0].mxu0 %v78
    %v655 = vpop.f32.mrb[0].mxu0
    %v656 = vadd.f32 %v302, %v655
    %v657 = vpop.f32.mrb[0].mxu0
    %v658 = vadd.f32 %v306, %v657
    %659 = vmatprep.mubr.f32.mxu0 %v82
    %660 = vmatmul.mubr.f32.gmra.mrb[0].mxu0 %v81
    %v661 = vpop.f32.mrb[0].mxu0
    %v662 = vadd.f32 %v302, %v661
    %v663 = vpop.f32.mrb[0].mxu0
    %v664 = vadd.f32 %v306, %v663
    %665 = vmatprep.mubr.f32.mxu0 %v85
    %666 = vmatmul.mubr.f32.gmra.mrb[0].mxu0 %v84
    %v667 = vpop.f32.mrb[0].mxu0
    %v668 = vadd.f32 %v302, %v667
    %v669 = vpop.f32.mrb[0].mxu0
    %v670 = vadd.f32 %v306, %v669
    %671 = vmatprep.mubr.f32.mxu0 %v88
    %672 = vmatmul.mubr.f32.gmra.mrb[0].mxu0 %v87
    %v673 = vpop.f32.mrb[0].mxu0
    %v674 = vadd.f32 %v302, %v673
    %v675 = vpop.f32.mrb[0].mxu0
    %v676 = vadd.f32 %v306, %v675
    %677 = vmatprep.mubr.f32.mxu0 %v91
    %678 = vmatmul.mubr.f32.gmra.mrb[0].mxu0 %v90
    %v679 = vpop.f32.mrb[0].mxu0
    %v680 = vadd.f32 %v302, %v679
    %v681 = vpop.f32.mrb[0].mxu0
    %v682 = vadd.f32 %v306, %v681
    %683 = vmatprep.mubr.f32.mxu0 %v94
    %684 = vmatmul.mubr.f32.gmra.mrb[0].mxu0 %v93
    %v685 = vpop.f32.mrb[0].mxu0
    %v686 = vadd.f32 %v302, %v685
    %v687 = vpop.f32.mrb[0].mxu0
    %v688 = vadd.f32 %v306, %v687
    %689 = vmatprep.mubr.f32.mxu0 %v97
    %690 = vmatmul.mubr.f32.gmra.mrb[0].mxu0 %v96
    %v691 = vpop.f32.mrb[0].mxu0
    %v692 = vadd.f32 %v302, %v691
    %v693 = vpop.f32.mrb[0].mxu0
    %v694 = vadd.f32 %v306, %v693
    %695 = vdwg.mxu0
    %696 = vmatprep.subr.mxu0 %v262
    %697 = vmatpush1.msra.mxu0 %v261
    %698 = vmatprep.subr.mxu0 %v267
    %699 = vmatpush1.msra.mxu0 %v266
    %700 = vmatprep.subr.mxu0 %v272
    %701 = vmatpush1.msra.mxu0 %v271
    %702 = vmatprep.subr.mxu0 %v277
    %703 = vmatpush1.msra.mxu0 %v276
    %704 = vmatprep.subr.mxu0 %v282
    %705 = vmatpush1.msra.mxu0 %v281
    %706 = vmatprep.subr.mxu0 %v352
    %707 = vmatpush1.msra.mxu0 %v349
    %708 = vmatprep.subr.mxu0 0.0
    %709 = vmatpush1.msra.mxu0 0.0
    %710 = vmatprep.subr.mxu0 0.0
    %711 = vmatpush1.msra.mxu0 0.0
    %712 = vmatprep.subr.mxu0 0.0
    %713 = vmatpush1.msra.mxu0 0.0
    %714 = vmatprep.subr.mxu0 0.0
    %715 = vmatpush1.msra.mxu0 0.0
    %716 = vmatprep.subr.mxu0 0.0
    %717 = vmatpush1.msra.mxu0 0.0
    %718 = vmatprep.subr.mxu0 0.0
    %719 = vmatpush1.msra.mxu0 0.0
    %720 = vmatprep.subr.mxu0 0.0
    %721 = vmatpush1.msra.mxu0 0.0
    %722 = vmatprep.subr.mxu0 0.0
    %723 = vmatpush1.msra.mxu0 0.0
    %724 = vmatprep.subr.mxu0 0.0
    %725 = vmatpush1.msra.mxu0 0.0
    %726 = vmatprep.subr.mxu0 0.0
    %727 = vmatpush1.msra.mxu0 0.0
    %728 = vmatprep.subr.mxu0 0.0
    %729 = vmatpush1.msra.mxu0 0.0
    %730 = vmatprep.subr.mxu0 0.0
    %731 = vmatpush1.msra.mxu0 0.0
    %732 = vmatprep.subr.mxu0 0.0
    %733 = vmatpush1.msra.mxu0 0.0
    %734 = vmatprep.subr.mxu0 0.0
    %735 = vmatpush1.msra.mxu0 0.0
    %736 = vmatprep.subr.mxu0 0.0
    %737 = vmatpush1.msra.mxu0 0.0
    %738 = vmatprep.subr.mxu0 0.0
    %739 = vmatpush1.msra.mxu0 0.0
    %740 = vmatprep.subr.mxu0 0.0
    %741 = vmatpush1.msra.mxu0 0.0
    %742 = vmatprep.subr.mxu0 0.0
    %743 = vmatpush1.msra.mxu0 0.0
    %744 = vmatprep.subr.mxu0 0.0
    %745 = vmatpush1.msra.mxu0 0.0
    %746 = vmatprep.subr.mxu0 0.0
    %747 = vmatpush1.msra.mxu0 0.0
    %748 = vmatprep.subr.mxu0 0.0
    %749 = vmatpush1.msra.mxu0 0.0
    %750 = vmatprep.subr.mxu0 0.0
    %751 = vmatpush1.msra.mxu0 0.0
    %752 = vmatprep.subr.mxu0 0.0
    %753 = vmatpush1.msra.mxu0 0.0
    %754 = vmatprep.subr.mxu0 0.0
    %755 = vmatpush1.msra.mxu0 0.0
    %756 = vmatprep.subr.mxu0 0.0
    %757 = vmatpush1.msra.mxu0 0.0
    %758 = vmatprep.subr.mxu0 0.0
    %759 = vmatpush1.msra.mxu0 0.0
    %760 = vmatprep.mubr.f32.mxu0 0.0
    %761 = vmatmul.mubr.f32.gmra.mrb[0].mxu0 %v318
    %v762 = vpop.f32.mrb[0].mxu0
    %v763 = vadd.f32 %v650, %v762
    %v764 = vpop.f32.mrb[0].mxu0
    %v765 = vadd.f32 %v652, %v764
    %766 = vmatprep.mubr.f32.mxu0 0.0
    %767 = vmatmul.mubr.f32.gmra.mrb[0].mxu0 %v321
    %v768 = vpop.f32.mrb[0].mxu0
    %v769 = vadd.f32 %v656, %v768
    %v770 = vpop.f32.mrb[0].mxu0
    %v771 = vadd.f32 %v658, %v770
    %772 = vmatprep.mubr.f32.mxu0 0.0
    %773 = vmatmul.mubr.f32.gmra.mrb[0].mxu0 %v324
    %v774 = vpop.f32.mrb[0].mxu0
    %v775 = vadd.f32 %v662, %v774
    %v776 = vpop.f32.mrb[0].mxu0
    %v777 = vadd.f32 %v664, %v776
    %778 = vmatprep.mubr.f32.mxu0 0.0
    %779 = vmatmul.mubr.f32.gmra.mrb[0].mxu0 %v327
    %v780 = vpop.f32.mrb[0].mxu0
    %v781 = vadd.f32 %v668, %v780
    %v782 = vpop.f32.mrb[0].mxu0
    %v783 = vadd.f32 %v670, %v782
    %784 = vmatprep.mubr.f32.mxu0 0.0
    %785 = vmatmul.mubr.f32.gmra.mrb[0].mxu0 %v330
    %v786 = vpop.f32.mrb[0].mxu0
    %v787 = vadd.f32 %v674, %v786
    %v788 = vpop.f32.mrb[0].mxu0
    %v789 = vadd.f32 %v676, %v788
    %790 = vmatprep.mubr.f32.mxu0 0.0
    %791 = vmatmul.mubr.f32.gmra.mrb[0].mxu0 %v333
    %v792 = vpop.f32.mrb[0].mxu0
    %v793 = vadd.f32 %v680, %v792
    %v794 = vpop.f32.mrb[0].mxu0
    %v795 = vadd.f32 %v682, %v794
    %796 = vmatprep.mubr.f32.mxu0 0.0
    %797 = vmatmul.mubr.f32.gmra.mrb[0].mxu0 %v336
    %v798 = vpop.f32.mrb[0].mxu0
    %v799 = vadd.f32 %v686, %v798
    %v800 = vpop.f32.mrb[0].mxu0
    %v801 = vadd.f32 %v688, %v800
    %802 = vmatprep.mubr.f32.mxu0 0.0
    %803 = vmatmul.mubr.f32.gmra.mrb[0].mxu0 %v339
    %v804 = vpop.f32.mrb[0].mxu0
    %v805 = vadd.f32 %v692, %v804
    %v806 = vpop.f32.mrb[0].mxu0
    %v807 = vadd.f32 %v694, %v806
    %808 = vdwg.mxu0
    %809 = vmatprep.subr.mxu0 0.0
    %810 = vmatpush1.msra.mxu0 %v103
    %811 = vmatprep.subr.mxu0 0.0
    %812 = vmatpush1.msra.mxu0 %v108
    %813 = vmatprep.subr.mxu0 0.0
    %814 = vmatpush1.msra.mxu0 %v113
    %815 = vmatprep.subr.mxu0 0.0
    %816 = vmatpush1.msra.mxu0 %v118
    %817 = vmatprep.subr.mxu0 0.0
    %818 = vmatpush1.msra.mxu0 %v123
    %819 = vmatprep.subr.mxu0 0.0
    %820 = vmatpush1.msra.mxu0 %v128
    %821 = vmatprep.subr.mxu0 0.0
    %822 = vmatpush1.msra.mxu0 %v133
    %823 = vmatprep.subr.mxu0 0.0
    %824 = vmatpush1.msra.mxu0 %v138
    %825 = vmatprep.subr.mxu0 0.0
    %826 = vmatpush1.msra.mxu0 %v143
    %827 = vmatprep.subr.mxu0 0.0
    %828 = vmatpush1.msra.mxu0 %v148
    %829 = vmatprep.subr.mxu0 0.0
    %830 = vmatpush1.msra.mxu0 %v153
    %831 = vmatprep.subr.mxu0 0.0
    %832 = vmatpush1.msra.mxu0 %v158
    %833 = vmatprep.subr.mxu0 0.0
    %834 = vmatpush1.msra.mxu0 %v163
    %835 = vmatprep.subr.mxu0 0.0
    %836 = vmatpush1.msra.mxu0 %v168
    %837 = vmatprep.subr.mxu0 0.0
    %838 = vmatpush1.msra.mxu0 %v173
    %839 = vmatprep.subr.mxu0 0.0
    %840 = vmatpush1.msra.mxu0 %v178
    %841 = vmatprep.subr.mxu0 0.0
    %842 = vmatpush1.msra.mxu0 %v183
    %843 = vmatprep.subr.mxu0 0.0
    %844 = vmatpush1.msra.mxu0 %v188
    %845 = vmatprep.subr.mxu0 0.0
    %846 = vmatpush1.msra.mxu0 %v193
    %847 = vmatprep.subr.mxu0 0.0
    %848 = vmatpush1.msra.mxu0 %v198
    %849 = vmatprep.subr.mxu0 0.0
    %850 = vmatpush1.msra.mxu0 %v203
    %851 = vmatprep.subr.mxu0 0.0
    %852 = vmatpush1.msra.mxu0 %v208
    %853 = vmatprep.subr.mxu0 0.0
    %854 = vmatpush1.msra.mxu0 %v213
    %855 = vmatprep.subr.mxu0 0.0
    %856 = vmatpush1.msra.mxu0 %v218
    %857 = vmatprep.subr.mxu0 0.0
    %858 = vmatpush1.msra.mxu0 %v223
    %859 = vmatprep.subr.mxu0 0.0
    %860 = vmatpush1.msra.mxu0 %v228
    %861 = vmatprep.subr.mxu0 0.0
    %862 = vmatpush1.msra.mxu0 %v233
    %863 = vmatprep.subr.mxu0 0.0
    %864 = vmatpush1.msra.mxu0 %v238
    %865 = vmatprep.subr.mxu0 0.0
    %866 = vmatpush1.msra.mxu0 %v243
    %867 = vmatprep.subr.mxu0 0.0
    %868 = vmatpush1.msra.mxu0 %v248
    %869 = vmatprep.subr.mxu0 0.0
    %870 = vmatpush1.msra.mxu0 %v253
    %871 = vmatprep.subr.mxu0 0.0
    %872 = vmatpush1.msra.mxu0 %v258
    %873 = vmatprep.mubr.f32.mxu0 %v76
    %874 = vmatmul.mubr.f32.gmra.mrb[0].mxu0 %v75
    %v875 = vpop.f32.mrb[0].mxu0
    %v876 = vadd.f32 %v310, %v875
    %v877 = vpop.f32.mrb[0].mxu0
    %878 = vmatprep.mubr.f32.mxu0 %v79
    %879 = vmatmul.mubr.f32.gmra.mrb[0].mxu0 %v78
    %v880 = vpop.f32.mrb[0].mxu0
    %v881 = vadd.f32 %v310, %v880
    %v882 = vpop.f32.mrb[0].mxu0
    %883 = vmatprep.mubr.f32.mxu0 %v82
    %884 = vmatmul.mubr.f32.gmra.mrb[0].mxu0 %v81
    %v885 = vpop.f32.mrb[0].mxu0
    %v886 = vadd.f32 %v310, %v885
    %v887 = vpop.f32.mrb[0].mxu0
    %888 = vmatprep.mubr.f32.mxu0 %v85
    %889 = vmatmul.mubr.f32.gmra.mrb[0].mxu0 %v84
    %v890 = vpop.f32.mrb[0].mxu0
    %v891 = vadd.f32 %v310, %v890
    %v892 = vpop.f32.mrb[0].mxu0
    %893 = vmatprep.mubr.f32.mxu0 %v88
    %894 = vmatmul.mubr.f32.gmra.mrb[0].mxu0 %v87
    %v895 = vpop.f32.mrb[0].mxu0
    %v896 = vadd.f32 %v310, %v895
    %v897 = vpop.f32.mrb[0].mxu0
    %898 = vmatprep.mubr.f32.mxu0 %v91
    %899 = vmatmul.mubr.f32.gmra.mrb[0].mxu0 %v90
    %v900 = vpop.f32.mrb[0].mxu0
    %v901 = vadd.f32 %v310, %v900
    %v902 = vpop.f32.mrb[0].mxu0
    %903 = vmatprep.mubr.f32.mxu0 %v94
    %904 = vmatmul.mubr.f32.gmra.mrb[0].mxu0 %v93
    %v905 = vpop.f32.mrb[0].mxu0
    %v906 = vadd.f32 %v310, %v905
    %v907 = vpop.f32.mrb[0].mxu0
    %908 = vmatprep.mubr.f32.mxu0 %v97
    %909 = vmatmul.mubr.f32.gmra.mrb[0].mxu0 %v96
    %v910 = vpop.f32.mrb[0].mxu0
    %v911 = vadd.f32 %v310, %v910
    %v912 = vpop.f32.mrb[0].mxu0
    %913 = vdwg.mxu0
    %914 = vmatprep.subr.mxu0 0.0
    %915 = vmatpush1.msra.mxu0 %v263
    %916 = vmatprep.subr.mxu0 0.0
    %917 = vmatpush1.msra.mxu0 %v268
    %918 = vmatprep.subr.mxu0 0.0
    %919 = vmatpush1.msra.mxu0 %v273
    %920 = vmatprep.subr.mxu0 0.0
    %921 = vmatpush1.msra.mxu0 %v278
    %922 = vmatprep.subr.mxu0 0.0
    %923 = vmatpush1.msra.mxu0 %v283
    %924 = vmatprep.subr.mxu0 0.0
    %925 = vmatpush1.msra.mxu0 %v355
    %926 = vmatprep.subr.mxu0 0.0
    %927 = vmatpush1.msra.mxu0 0.0
    %928 = vmatprep.subr.mxu0 0.0
    %929 = vmatpush1.msra.mxu0 0.0
    %930 = vmatprep.subr.mxu0 0.0
    %931 = vmatpush1.msra.mxu0 0.0
    %932 = vmatprep.subr.mxu0 0.0
    %933 = vmatpush1.msra.mxu0 0.0
    %934 = vmatprep.subr.mxu0 0.0
    %935 = vmatpush1.msra.mxu0 0.0
    %936 = vmatprep.subr.mxu0 0.0
    %937 = vmatpush1.msra.mxu0 0.0
    %938 = vmatprep.subr.mxu0 0.0
    %939 = vmatpush1.msra.mxu0 0.0
    %940 = vmatprep.subr.mxu0 0.0
    %941 = vmatpush1.msra.mxu0 0.0
    %942 = vmatprep.subr.mxu0 0.0
    %943 = vmatpush1.msra.mxu0 0.0
    %944 = vmatprep.subr.mxu0 0.0
    %945 = vmatpush1.msra.mxu0 0.0
    %946 = vmatprep.subr.mxu0 0.0
    %947 = vmatpush1.msra.mxu0 0.0
    %948 = vmatprep.subr.mxu0 0.0
    %949 = vmatpush1.msra.mxu0 0.0
    %950 = vmatprep.subr.mxu0 0.0
    %951 = vmatpush1.msra.mxu0 0.0
    %952 = vmatprep.subr.mxu0 0.0
    %953 = vmatpush1.msra.mxu0 0.0
    %954 = vmatprep.subr.mxu0 0.0
    %955 = vmatpush1.msra.mxu0 0.0
    %956 = vmatprep.subr.mxu0 0.0
    %957 = vmatpush1.msra.mxu0 0.0
    %958 = vmatprep.subr.mxu0 0.0
    %959 = vmatpush1.msra.mxu0 0.0
    %960 = vmatprep.subr.mxu0 0.0
    %961 = vmatpush1.msra.mxu0 0.0
    %962 = vmatprep.subr.mxu0 0.0
    %963 = vmatpush1.msra.mxu0 0.0
    %964 = vmatprep.subr.mxu0 0.0
    %965 = vmatpush1.msra.mxu0 0.0
    %966 = vmatprep.subr.mxu0 0.0
    %967 = vmatpush1.msra.mxu0 0.0
    %968 = vmatprep.subr.mxu0 0.0
    %969 = vmatpush1.msra.mxu0 0.0
    %970 = vmatprep.subr.mxu0 0.0
    %971 = vmatpush1.msra.mxu0 0.0
    %972 = vmatprep.subr.mxu0 0.0
    %973 = vmatpush1.msra.mxu0 0.0
    %974 = vmatprep.subr.mxu0 0.0
    %975 = vmatpush1.msra.mxu0 0.0
    %976 = vmatprep.subr.mxu0 0.0
    %977 = vmatpush1.msra.mxu0 0.0
    %978 = vmatprep.mubr.f32.mxu0 0.0
    %979 = vmatmul.mubr.f32.gmra.mrb[0].mxu0 %v318
    %v980 = vpop.f32.mrb[0].mxu0
    %v981 = vadd.f32 %v876, %v980
    %v982 = vpop.f32.mrb[0].mxu0
    %983 = vmatprep.mubr.f32.mxu0 0.0
    %984 = vmatmul.mubr.f32.gmra.mrb[0].mxu0 %v321
    %v985 = vpop.f32.mrb[0].mxu0
    %v986 = vadd.f32 %v881, %v985
    %v987 = vpop.f32.mrb[0].mxu0
    %988 = vmatprep.mubr.f32.mxu0 0.0
    %989 = vmatmul.mubr.f32.gmra.mrb[0].mxu0 %v324
    %v990 = vpop.f32.mrb[0].mxu0
    %v991 = vadd.f32 %v886, %v990
    %v992 = vpop.f32.mrb[0].mxu0
    %993 = vmatprep.mubr.f32.mxu0 0.0
    %994 = vmatmul.mubr.f32.gmra.mrb[0].mxu0 %v327
    %v995 = vpop.f32.mrb[0].mxu0
    %v996 = vadd.f32 %v891, %v995
    %v997 = vpop.f32.mrb[0].mxu0
    %998 = vmatprep.mubr.f32.mxu0 0.0
    %999 = vmatmul.mubr.f32.gmra.mrb[0].mxu0 %v330
    %v1000 = vpop.f32.mrb[0].mxu0
    %v1001 = vadd.f32 %v896, %v1000
    %v1002 = vpop.f32.mrb[0].mxu0
    %1003 = vmatprep.mubr.f32.mxu0 0.0
    %1004 = vmatmul.mubr.f32.gmra.mrb[0].mxu0 %v333
    %v1005 = vpop.f32.mrb[0].mxu0
    %v1006 = vadd.f32 %v901, %v1005
    %v1007 = vpop.f32.mrb[0].mxu0
    %1008 = vmatprep.mubr.f32.mxu0 0.0
    %1009 = vmatmul.mubr.f32.gmra.mrb[0].mxu0 %v336
    %v1010 = vpop.f32.mrb[0].mxu0
    %v1011 = vadd.f32 %v906, %v1010
    %v1012 = vpop.f32.mrb[0].mxu0
    %1013 = vmatprep.mubr.f32.mxu0 0.0
    %1014 = vmatmul.mubr.f32.gmra.mrb[0].mxu0 %v339
    %v1015 = vpop.f32.mrb[0].mxu0
    %v1016 = vadd.f32 %v911, %v1015
    %v1017 = vpop.f32.mrb[0].mxu0
    %1018 = vdwg.mxu0
    %1019 = vst [vmem:[#allocation2] sm:$0xff] %v537
    %1020 = vst [vmem:[#allocation2 + $0x8] sm:$0xff] %v539
    %1021 = vst [vmem:[#allocation2 + $0x10] sm:$0xff] %v763
    %1022 = vst [vmem:[#allocation2 + $0x18] sm:$0xff] %v765
    %vm1023 = vcmask 719872
    %1024 = vst.msk [vmem:[#allocation2 + $0x20] sm:$0xff] %vm1023, %v981
    %1025 = vst [vmem:[#allocation2 + $0x28] sm:$0xff] %v543
    %1026 = vst [vmem:[#allocation2 + $0x30] sm:$0xff] %v545
    %1027 = vst [vmem:[#allocation2 + $0x38] sm:$0xff] %v769
    %1028 = vst [vmem:[#allocation2 + $0x40] sm:$0xff] %v771
    %1029 = vst.msk [vmem:[#allocation2 + $0x48] sm:$0xff] %vm1023, %v986
    %1030 = vst [vmem:[#allocation2 + $0x50] sm:$0xff] %v549
    %1031 = vst [vmem:[#allocation2 + $0x58] sm:$0xff] %v551
    %1032 = vst [vmem:[#allocation2 + $0x60] sm:$0xff] %v775
    %1033 = vst [vmem:[#allocation2 + $0x68] sm:$0xff] %v777
    %1034 = vst.msk [vmem:[#allocation2 + $0x70] sm:$0xff] %vm1023, %v991
    %1035 = vst [vmem:[#allocation2 + $0x78] sm:$0xff] %v555
    %1036 = vst [vmem:[#allocation2 + $0x80] sm:$0xff] %v557
    %1037 = vst [vmem:[#allocation2 + $0x88] sm:$0xff] %v781
    %1038 = vst [vmem:[#allocation2 + $0x90] sm:$0xff] %v783
    %1039 = vst.msk [vmem:[#allocation2 + $0x98] sm:$0xff] %vm1023, %v996
    %1040 = vst [vmem:[#allocation2 + $0xa0] sm:$0xff] %v561
    %1041 = vst [vmem:[#allocation2 + $0xa8] sm:$0xff] %v563
    %1042 = vst [vmem:[#allocation2 + $0xb0] sm:$0xff] %v787
    %1043 = vst [vmem:[#allocation2 + $0xb8] sm:$0xff] %v789
    %1044 = vst.msk [vmem:[#allocation2 + $0xc0] sm:$0xff] %vm1023, %v1001
    %1045 = vst [vmem:[#allocation2 + $0xc8] sm:$0xff] %v567
    %1046 = vst [vmem:[#allocation2 + $0xd0] sm:$0xff] %v569
    %1047 = vst [vmem:[#allocation2 + $0xd8] sm:$0xff] %v793
    %1048 = vst [vmem:[#allocation2 + $0xe0] sm:$0xff] %v795
    %1049 = vst.msk [vmem:[#allocation2 + $0xe8] sm:$0xff] %vm1023, %v1006
    %1050 = vst [vmem:[#allocation2 + $0xf0] sm:$0xff] %v573
    %1051 = vst [vmem:[#allocation2 + $0xf8] sm:$0xff] %v575
    %1052 = vst [vmem:[#allocation2 + $0x100] sm:$0xff] %v799
    %1053 = vst [vmem:[#allocation2 + $0x108] sm:$0xff] %v801
    %1054 = vst.msk [vmem:[#allocation2 + $0x110] sm:$0xff] %vm1023, %v1011
    %1055 = vst [vmem:[#allocation2 + $0x118] sm:$0xff] %v579
    %1056 = vst [vmem:[#allocation2 + $0x120] sm:$0xff] %v581
    %1057 = vst [vmem:[#allocation2 + $0x128] sm:$0xff] %v805
    %1058 = vst [vmem:[#allocation2 + $0x130] sm:$0xff] %v807
    %1059 = vst.msk [vmem:[#allocation2 + $0x138] sm:$0xff] %vm1023, %v1016
    %v1060 = vld [vmem:[#allocation8] sm:$0xff]
    %v1061 = vld [vmem:[#allocation8 + $0x8] sm:$0xff]
    %v1062 = vld [vmem:[#allocation8 + $0x10] sm:$0xff]
    %v1063 = vld [vmem:[#allocation8 + $0x18] sm:$0xff]
    %v1064 = vld [vmem:[#allocation8 + $0x20] sm:$0xff]
    %v1065 = vld [vmem:[#allocation8 + $0x28] sm:$0xff]
    %v1066 = vld [vmem:[#allocation8 + $0x30] sm:$0xff]
    %v1067 = vld [vmem:[#allocation8 + $0x38] sm:$0xff]
    %v1068 = vld [vmem:[#allocation8 + $0x40] sm:$0xff]
    %v1069 = vld [vmem:[#allocation8 + $0x48] sm:$0xff]
    %v1070 = vld [vmem:[#allocation8 + $0x50] sm:$0xff]
    %v1071 = vld [vmem:[#allocation8 + $0x58] sm:$0xff]
    %v1072 = vld [vmem:[#allocation8 + $0x60] sm:$0xff]
    %v1073 = vld [vmem:[#allocation8 + $0x68] sm:$0xff]
    %v1074 = vld [vmem:[#allocation8 + $0x70] sm:$0xff]
    %v1075 = vld [vmem:[#allocation8 + $0x78] sm:$0xff]
    %v1076 = vld [vmem:[#allocation8 + $0x80] sm:$0xff]
    %v1077 = vld [vmem:[#allocation8 + $0x88] sm:$0xff]
    %v1078 = vld [vmem:[#allocation8 + $0x90] sm:$0xff]
    %v1079 = vld [vmem:[#allocation8 + $0x98] sm:$0xff]
    %v1080 = vld [vmem:[#allocation8 + $0xa0] sm:$0xff]
    %v1081 = vld [vmem:[#allocation8 + $0xa8] sm:$0xff]
    %v1082 = vld [vmem:[#allocation8 + $0xb0] sm:$0xff]
    %v1083 = vld [vmem:[#allocation8 + $0xb8] sm:$0xff]
    %v1084 = vld [vmem:[#allocation8 + $0xc0] sm:$0xff]
    %v1085 = vld [vmem:[#allocation8 + $0xc8] sm:$0xff]
    %v1086 = vld [vmem:[#allocation8 + $0xd0] sm:$0xff]
    %v1087 = vld [vmem:[#allocation8 + $0xd8] sm:$0xff]
    %v1088 = vld [vmem:[#allocation8 + $0xe0] sm:$0xff]
    %v1089 = vld [vmem:[#allocation8 + $0xe8] sm:$0xff]
    %v1090 = vld [vmem:[#allocation8 + $0xf0] sm:$0xff]
    %v1091 = vld [vmem:[#allocation8 + $0xf8] sm:$0xff]
    %v1092 = vld [vmem:[#allocation8 + $0x100] sm:$0xff]
    %v1093 = vld [vmem:[#allocation8 + $0x108] sm:$0xff]
    %v1094 = vld [vmem:[#allocation8 + $0x110] sm:$0xff]
    %v1095 = vld [vmem:[#allocation8 + $0x118] sm:$0xff]
    %v1096 = vld [vmem:[#allocation8 + $0x120] sm:$0xff]
    %v1097 = vld [vmem:[#allocation8 + $0x128] sm:$0xff]
    %v1098 = vld [vmem:[#allocation8 + $0x130] sm:$0xff]
    %v1099 = vld [vmem:[#allocation8 + $0x138] sm:$0xff]
    %v1100 = vld [vmem:[#allocation8 + $0x140] sm:$0xff]
    %v1101 = vld [vmem:[#allocation8 + $0x148] sm:$0xff]
    %v1102 = vld [vmem:[#allocation8 + $0x150] sm:$0xff]
    %v1103 = vld [vmem:[#allocation8 + $0x158] sm:$0xff]
    %v1104 = vld [vmem:[#allocation8 + $0x160] sm:$0xff]
    %v1105 = vld [vmem:[#allocation8 + $0x168] sm:$0xff]
    %v1106 = vld [vmem:[#allocation8 + $0x170] sm:$0xff]
    %v1107 = vld [vmem:[#allocation8 + $0x178] sm:$0xff]
    %v1108 = vld [vmem:[#allocation8 + $0x180] sm:$0xff]
    %v1109 = vld [vmem:[#allocation8 + $0x188] sm:$0xff]
    %v1110 = vld [vmem:[#allocation8 + $0x190] sm:$0xff]
    %v1111 = vld [vmem:[#allocation8 + $0x198] sm:$0xff]
    %v1112 = vld [vmem:[#allocation8 + $0x1a0] sm:$0xff]
    %v1113 = vld [vmem:[#allocation8 + $0x1a8] sm:$0xff]
    %v1114 = vld [vmem:[#allocation8 + $0x1b0] sm:$0xff]
    %v1115 = vld [vmem:[#allocation8 + $0x1b8] sm:$0xff]
    %v1116 = vld [vmem:[#allocation8 + $0x1c0] sm:$0xff]
    %v1117 = vld [vmem:[#allocation8 + $0x1c8] sm:$0xff]
    %v1118 = vld [vmem:[#allocation8 + $0x1d0] sm:$0xff]
    %v1119 = vld [vmem:[#allocation8 + $0x1d8] sm:$0xff]
    %v1120 = vld [vmem:[#allocation8 + $0x1e0] sm:$0xff]
    %v1121 = vld [vmem:[#allocation8 + $0x1e8] sm:$0xff]
    %v1122 = vld [vmem:[#allocation8 + $0x1f0] sm:$0xff]
    %v1123 = vld [vmem:[#allocation8 + $0x1f8] sm:$0xff]
    %v1124 = vld [vmem:[#allocation8 + $0x200] sm:$0xff]
    %v1125 = vld [vmem:[#allocation8 + $0x208] sm:$0xff]
    %v1126 = vld [vmem:[#allocation8 + $0x210] sm:$0xff]
    %v1127 = vld [vmem:[#allocation8 + $0x218] sm:$0xff]
    %v1128 = vld [vmem:[#allocation8 + $0x220] sm:$0xff]
    %v1129 = vld [vmem:[#allocation8 + $0x228] sm:$0xff]
    %v1130 = vld [vmem:[#allocation8 + $0x230] sm:$0xff]
    %v1131 = vld [vmem:[#allocation8 + $0x238] sm:$0xff]
    %v1132 = vld [vmem:[#allocation8 + $0x240] sm:$0xff]
    %v1133 = vld [vmem:[#allocation8 + $0x248] sm:$0xff]
    %v1134 = vld [vmem:[#allocation8 + $0x250] sm:$0xff]
    %v1135 = vld [vmem:[#allocation8 + $0x258] sm:$0xff]
    %v1136 = vld [vmem:[#allocation8 + $0x260] sm:$0xff]
    %v1137 = vld [vmem:[#allocation8 + $0x268] sm:$0xff]
    %v1138 = vld [vmem:[#allocation8 + $0x270] sm:$0xff]
    %v1139 = vld [vmem:[#allocation8 + $0x278] sm:$0xff]
    %v1140 = vld [vmem:[#allocation8 + $0x280] sm:$0xff]
    %v1141 = vld [vmem:[#allocation8 + $0x288] sm:$0xff]
    %v1142 = vld [vmem:[#allocation8 + $0x290] sm:$0xff]
    %v1143 = vld [vmem:[#allocation8 + $0x298] sm:$0xff]
    %v1144 = vld [vmem:[#allocation8 + $0x2a0] sm:$0xff]
    %v1145 = vld [vmem:[#allocation8 + $0x2a8] sm:$0xff]
    %v1146 = vld [vmem:[#allocation8 + $0x2b0] sm:$0xff]
    %v1147 = vld [vmem:[#allocation8 + $0x2b8] sm:$0xff]
    %v1148 = vld [vmem:[#allocation8 + $0x2c0] sm:$0xff]
    %v1149 = vld [vmem:[#allocation8 + $0x2c8] sm:$0xff]
    %v1150 = vld [vmem:[#allocation8 + $0x2d0] sm:$0x3f]
    %v1151 = vld [vmem:[#allocation8 + $0x2d8] sm:$0x3f]
    %v1152 = vld [vmem:[#allocation8 + $0x2e0] sm:$0x3f]
    %v1153 = vld [vmem:[#allocation8 + $0x2e8] sm:$0x3f]
    %v1154 = vld [vmem:[#allocation8 + $0x2f0] sm:$0x3f]
    %v1155 = vld [vmem:[%s4] sm:$0xff]
    %v1156 = vld [vmem:[%s4 + $0x8] sm:$0xff]
    %v1157 = vld [vmem:[%s5] sm:$0xff]
    %v1158 = vld [vmem:[%s5 + $0x8] sm:$0xff]
    %v1159 = vld [vmem:[#allocation2] sm:$0xff]
    %v1160 = vld [vmem:[#allocation2 + $0x8] sm:$0xff]
    %v1161 = vld [vmem:[#allocation2 + $0x10] sm:$0xff]
    %v1162 = vld [vmem:[#allocation2 + $0x18] sm:$0xff]
    %v1163 = vld [vmem:[#allocation2 + $0x20] sm:$0xff]
    %vm1164 = vcmask 179200
    %v1166 = vsel %vm1164, %v1156, 0
    %vm1168 = vcmask 1045504
    %v1170 = vsel %vm1168, %v1150, 0
    %v1173 = vsel %vm1168, %v1151, 0
    %v1176 = vsel %vm1168, %v1152, 0
    %v1179 = vsel %vm1168, %v1153, 0
    %v1182 = vsel %vm1168, %v1154, 0
    %1184 = vmatprep.subr.mxu0 %v1061
    %1185 = vmatpush1.msra.mxu0 %v1060
    %1186 = vmatprep.subr.mxu0 %v1066
    %1187 = vmatpush1.msra.mxu0 %v1065
    %1188 = vmatprep.subr.mxu0 %v1071
    %1189 = vmatpush1.msra.mxu0 %v1070
    %1190 = vmatprep.subr.mxu0 %v1076
    %1191 = vmatpush1.msra.mxu0 %v1075
    %1192 = vmatprep.subr.mxu0 %v1081
    %1193 = vmatpush1.msra.mxu0 %v1080
    %1194 = vmatprep.subr.mxu0 %v1086
    %1195 = vmatpush1.msra.mxu0 %v1085
    %1196 = vmatprep.subr.mxu0 %v1091
    %1197 = vmatpush1.msra.mxu0 %v1090
    %1198 = vmatprep.subr.mxu0 %v1096
    %1199 = vmatpush1.msra.mxu0 %v1095
    %1200 = vmatprep.subr.mxu0 %v1101
    %1201 = vmatpush1.msra.mxu0 %v1100
    %1202 = vmatprep.subr.mxu0 %v1106
    %1203 = vmatpush1.msra.mxu0 %v1105
    %1204 = vmatprep.subr.mxu0 %v1111
    %1205 = vmatpush1.msra.mxu0 %v1110
    %1206 = vmatprep.subr.mxu0 %v1116
    %1207 = vmatpush1.msra.mxu0 %v1115
    %1208 = vmatprep.subr.mxu0 %v1121
    %1209 = vmatpush1.msra.mxu0 %v1120
    %1210 = vmatprep.subr.mxu0 %v1126
    %1211 = vmatpush1.msra.mxu0 %v1125
    %1212 = vmatprep.subr.mxu0 %v1131
    %1213 = vmatpush1.msra.mxu0 %v1130
    %1214 = vmatprep.subr.mxu0 %v1136
    %1215 = vmatpush1.msra.mxu0 %v1135
    %1216 = vmatprep.subr.mxu0 %v1141
    %1217 = vmatpush1.msra.mxu0 %v1140
    %1218 = vmatprep.subr.mxu0 %v1146
    %1219 = vmatpush1.msra.mxu0 %v1145
    %1220 = vmatprep.subr.mxu0 %v1173
    %1221 = vmatpush1.msra.mxu0 %v1170
    %1222 = vmatprep.subr.mxu0 0.0
    %1223 = vmatpush1.msra.mxu0 0.0
    %1224 = vmatprep.subr.mxu0 0.0
    %1225 = vmatpush1.msra.mxu0 0.0
    %1226 = vmatprep.subr.mxu0 0.0
    %1227 = vmatpush1.msra.mxu0 0.0
    %1228 = vmatprep.subr.mxu0 0.0
    %1229 = vmatpush1.msra.mxu0 0.0
    %1230 = vmatprep.subr.mxu0 0.0
    %1231 = vmatpush1.msra.mxu0 0.0
    %1232 = vmatprep.subr.mxu0 0.0
    %1233 = vmatpush1.msra.mxu0 0.0
    %1234 = vmatprep.subr.mxu0 0.0
    %1235 = vmatpush1.msra.mxu0 0.0
    %1236 = vmatprep.subr.mxu0 0.0
    %1237 = vmatpush1.msra.mxu0 0.0
    %1238 = vmatprep.subr.mxu0 0.0
    %1239 = vmatpush1.msra.mxu0 0.0
    %1240 = vmatprep.subr.mxu0 0.0
    %1241 = vmatpush1.msra.mxu0 0.0
    %1242 = vmatprep.subr.mxu0 0.0
    %1243 = vmatpush1.msra.mxu0 0.0
    %1244 = vmatprep.subr.mxu0 0.0
    %1245 = vmatpush1.msra.mxu0 0.0
    %1246 = vmatprep.subr.mxu0 0.0
    %1247 = vmatpush1.msra.mxu0 0.0
    %1248 = vmatprep.mubr.f32.mxu0 %v1166
    %1249 = vmatmul.mubr.f32.gmra.mrb[0].mxu0 %v1155
    %v1250 = vpop.f32.mrb[0].mxu0
    %v1251 = vadd.f32 0.0, %v1250
    %v1252 = vpop.f32.mrb[0].mxu0
    %v1253 = vadd.f32 0.0, %v1252
    %1254 = vdwg.mxu0
    %1255 = vmatprep.subr.mxu0 %v1063
    %1256 = vmatpush1.msra.mxu0 %v1062
    %1257 = vmatprep.subr.mxu0 %v1068
    %1258 = vmatpush1.msra.mxu0 %v1067
    %1259 = vmatprep.subr.mxu0 %v1073
    %1260 = vmatpush1.msra.mxu0 %v1072
    %1261 = vmatprep.subr.mxu0 %v1078
    %1262 = vmatpush1.msra.mxu0 %v1077
    %1263 = vmatprep.subr.mxu0 %v1083
    %1264 = vmatpush1.msra.mxu0 %v1082
    %1265 = vmatprep.subr.mxu0 %v1088
    %1266 = vmatpush1.msra.mxu0 %v1087
    %1267 = vmatprep.subr.mxu0 %v1093
    %1268 = vmatpush1.msra.mxu0 %v1092
    %1269 = vmatprep.subr.mxu0 %v1098
    %1270 = vmatpush1.msra.mxu0 %v1097
    %1271 = vmatprep.subr.mxu0 %v1103
    %1272 = vmatpush1.msra.mxu0 %v1102
    %1273 = vmatprep.subr.mxu0 %v1108
    %1274 = vmatpush1.msra.mxu0 %v1107
    %1275 = vmatprep.subr.mxu0 %v1113
    %1276 = vmatpush1.msra.mxu0 %v1112
    %1277 = vmatprep.subr.mxu0 %v1118
    %1278 = vmatpush1.msra.mxu0 %v1117
    %1279 = vmatprep.subr.mxu0 %v1123
    %1280 = vmatpush1.msra.mxu0 %v1122
    %1281 = vmatprep.subr.mxu0 %v1128
    %1282 = vmatpush1.msra.mxu0 %v1127
    %1283 = vmatprep.subr.mxu0 %v1133
    %1284 = vmatpush1.msra.mxu0 %v1132
    %1285 = vmatprep.subr.mxu0 %v1138
    %1286 = vmatpush1.msra.mxu0 %v1137
    %1287 = vmatprep.subr.mxu0 %v1143
    %1288 = vmatpush1.msra.mxu0 %v1142
    %1289 = vmatprep.subr.mxu0 %v1148
    %1290 = vmatpush1.msra.mxu0 %v1147
    %1291 = vmatprep.subr.mxu0 %v1179
    %1292 = vmatpush1.msra.mxu0 %v1176
    %1293 = vmatprep.subr.mxu0 0.0
    %1294 = vmatpush1.msra.mxu0 0.0
    %1295 = vmatprep.subr.mxu0 0.0
    %1296 = vmatpush1.msra.mxu0 0.0
    %1297 = vmatprep.subr.mxu0 0.0
    %1298 = vmatpush1.msra.mxu0 0.0
    %1299 = vmatprep.subr.mxu0 0.0
    %1300 = vmatpush1.msra.mxu0 0.0
    %1301 = vmatprep.subr.mxu0 0.0
    %1302 = vmatpush1.msra.mxu0 0.0
    %1303 = vmatprep.subr.mxu0 0.0
    %1304 = vmatpush1.msra.mxu0 0.0
    %1305 = vmatprep.subr.mxu0 0.0
    %1306 = vmatpush1.msra.mxu0 0.0
    %1307 = vmatprep.subr.mxu0 0.0
    %1308 = vmatpush1.msra.mxu0 0.0
    %1309 = vmatprep.subr.mxu0 0.0
    %1310 = vmatpush1.msra.mxu0 0.0
    %1311 = vmatprep.subr.mxu0 0.0
    %1312 = vmatpush1.msra.mxu0 0.0
    %1313 = vmatprep.subr.mxu0 0.0
    %1314 = vmatpush1.msra.mxu0 0.0
    %1315 = vmatprep.subr.mxu0 0.0
    %1316 = vmatpush1.msra.mxu0 0.0
    %1317 = vmatprep.subr.mxu0 0.0
    %1318 = vmatpush1.msra.mxu0 0.0
    %1319 = vmatprep.mubr.f32.mxu0 %v1166
    %1320 = vmatmul.mubr.f32.gmra.mrb[0].mxu0 %v1155
    %v1321 = vpop.f32.mrb[0].mxu0
    %v1322 = vadd.f32 0.0, %v1321
    %v1323 = vpop.f32.mrb[0].mxu0
    %v1324 = vadd.f32 0.0, %v1323
    %1325 = vdwg.mxu0
    %1326 = vmatprep.subr.mxu0 0.0
    %1327 = vmatpush1.msra.mxu0 %v1064
    %1328 = vmatprep.subr.mxu0 0.0
    %1329 = vmatpush1.msra.mxu0 %v1069
    %1330 = vmatprep.subr.mxu0 0.0
    %1331 = vmatpush1.msra.mxu0 %v1074
    %1332 = vmatprep.subr.mxu0 0.0
    %1333 = vmatpush1.msra.mxu0 %v1079
    %1334 = vmatprep.subr.mxu0 0.0
    %1335 = vmatpush1.msra.mxu0 %v1084
    %1336 = vmatprep.subr.mxu0 0.0
    %1337 = vmatpush1.msra.mxu0 %v1089
    %1338 = vmatprep.subr.mxu0 0.0
    %1339 = vmatpush1.msra.mxu0 %v1094
    %1340 = vmatprep.subr.mxu0 0.0
    %1341 = vmatpush1.msra.mxu0 %v1099
    %1342 = vmatprep.subr.mxu0 0.0
    %1343 = vmatpush1.msra.mxu0 %v1104
    %1344 = vmatprep.subr.mxu0 0.0
    %1345 = vmatpush1.msra.mxu0 %v1109
    %1346 = vmatprep.subr.mxu0 0.0
    %1347 = vmatpush1.msra.mxu0 %v1114
    %1348 = vmatprep.subr.mxu0 0.0
    %1349 = vmatpush1.msra.mxu0 %v1119
    %1350 = vmatprep.subr.mxu0 0.0
    %1351 = vmatpush1.msra.mxu0 %v1124
    %1352 = vmatprep.subr.mxu0 0.0
    %1353 = vmatpush1.msra.mxu0 %v1129
    %1354 = vmatprep.subr.mxu0 0.0
    %1355 = vmatpush1.msra.mxu0 %v1134
    %1356 = vmatprep.subr.mxu0 0.0
    %1357 = vmatpush1.msra.mxu0 %v1139
    %1358 = vmatprep.subr.mxu0 0.0
    %1359 = vmatpush1.msra.mxu0 %v1144
    %1360 = vmatprep.subr.mxu0 0.0
    %1361 = vmatpush1.msra.mxu0 %v1149
    %1362 = vmatprep.subr.mxu0 0.0
    %1363 = vmatpush1.msra.mxu0 %v1182
    %1364 = vmatprep.subr.mxu0 0.0
    %1365 = vmatpush1.msra.mxu0 0.0
    %1366 = vmatprep.subr.mxu0 0.0
    %1367 = vmatpush1.msra.mxu0 0.0
    %1368 = vmatprep.subr.mxu0 0.0
    %1369 = vmatpush1.msra.mxu0 0.0
    %1370 = vmatprep.subr.mxu0 0.0
    %1371 = vmatpush1.msra.mxu0 0.0
    %1372 = vmatprep.subr.mxu0 0.0
    %1373 = vmatpush1.msra.mxu0 0.0
    %1374 = vmatprep.subr.mxu0 0.0
    %1375 = vmatpush1.msra.mxu0 0.0
    %1376 = vmatprep.subr.mxu0 0.0
    %1377 = vmatpush1.msra.mxu0 0.0
    %1378 = vmatprep.subr.mxu0 0.0
    %1379 = vmatpush1.msra.mxu0 0.0
    %1380 = vmatprep.subr.mxu0 0.0
    %1381 = vmatpush1.msra.mxu0 0.0
    %1382 = vmatprep.subr.mxu0 0.0
    %1383 = vmatpush1.msra.mxu0 0.0
    %1384 = vmatprep.subr.mxu0 0.0
    %1385 = vmatpush1.msra.mxu0 0.0
    %1386 = vmatprep.subr.mxu0 0.0
    %1387 = vmatpush1.msra.mxu0 0.0
    %1388 = vmatprep.subr.mxu0 0.0
    %1389 = vmatpush1.msra.mxu0 0.0
    %1390 = vmatprep.mubr.f32.mxu0 %v1166
    %1391 = vmatmul.mubr.f32.gmra.mrb[0].mxu0 %v1155
    %v1392 = vpop.f32.mrb[0].mxu0
    %v1393 = vadd.f32 0.0, %v1392
    %v1394 = vpop.f32.mrb[0].mxu0
    %1395 = vdwg.mxu0
    %v1396 = vadd.f32 %v1159, %v1251
    %v1397 = vadd.f32 %v1160, %v1253
    %v1398 = vadd.f32 %v1161, %v1322
    %v1399 = vadd.f32 %v1162, %v1324
    %v1400 = vadd.f32 %v1163, %v1393
    %v1401 = vxor.u32 %v1396, 2147483648
    %v1402 = vxor.u32 %v1397, 2147483648
    %v1403 = vmul.f32 %v1401, 1.442695
    %v1404 = vpow.pop %v1403
    %v1405 = vmul.f32 %v1402, 1.442695
    %v1406 = vpow.pop %v1405
    %v1407 = vadd.f32 %v1404, 1.0
    %v1408 = vadd.f32 %v1406, 1.0
    %v1409 = vrcp.pop %v1407
    %v1410 = vmul.f32 1.0, %v1409
    %v1411 = vrcp.pop %v1408
    %v1412 = vmul.f32 1.0, %v1411
    %v1413 = vxor.u32 %v1398, 2147483648
    %v1414 = vmul.f32 %v1413, 1.442695
    %v1415 = vpow.pop %v1414
    %v1416 = vadd.f32 %v1415, 1.0
    %v1417 = vrcp.pop %v1416
    %v1418 = vmul.f32 1.0, %v1417
    %v1419 = vtanh.pop %v1398
    %v1420 = vtanh.pop %v1399
    %v1421 = vxor.u32 %v1399, 2147483648
    %v1422 = vxor.u32 %v1400, 2147483648
    %v1423 = vmul.f32 %v1421, 1.442695
    %v1424 = vpow.pop %v1423
    %v1425 = vmul.f32 %v1422, 1.442695
    %v1426 = vpow.pop %v1425
    %v1427 = vadd.f32 %v1424, 1.0
    %v1428 = vadd.f32 %v1426, 1.0
    %v1429 = vrcp.pop %v1427
    %v1430 = vmul.f32 1.0, %v1429
    %v1431 = vrcp.pop %v1428
    %v1432 = vmul.f32 1.0, %v1431
    %1435 = vrot.lane.b32.xlu0 %v1157, 22
    %v1436 = vpop.permute.xlu0 %1435
    %1437 = vrot.lane.b32.xlu0 %v1158, 22
    %v1438 = vpop.permute.xlu0 %1437
    %v1439 = vsel %vm1164, %v1436, %v1438
    %v1442 = vmul.f32 %v1412, %v1436
    %v1443 = vmul.f32 %v1418, %v1439
    %1446 = vrot.lane.b32.xlu0 %v1419, 84
    %v1447 = vpop.permute.xlu0 %1446
    %1448 = vrot.lane.b32.xlu0 %v1420, 84
    %v1449 = vpop.permute.xlu0 %1448
    %vm1450 = vcmask 687104
    %v1451 = vsel %vm1450, %v1447, %v1449
    %v1454 = vmul.f32 %v1410, %v1451
    %v1455 = vmul.f32 %v1412, %v1449
    %1458 = vrot.lane.b32.xlu0 %v1454, 22
    %v1459 = vpop.permute.xlu0 %1458
    %1460 = vrot.lane.b32.xlu0 %v1455, 22
    %v1461 = vpop.permute.xlu0 %1460
    %v1462 = vsel %vm1164, %v1459, %v1461
    %v1465 = vadd.f32 %v1442, %v1459
    %v1466 = vadd.f32 %v1443, %v1462
    %v1467 = vtanh.pop %v1465
    %v1468 = vtanh.pop %v1466
    %1471 = vrot.lane.b32.xlu0 %v1467, 44
    %v1472 = vpop.permute.xlu0 %1471
    %1473 = vrot.lane.b32.xlu0 %v1468, 44
    %v1474 = vpop.permute.xlu0 %1473
    %v1475 = vsel %vm316, %v1472, %v1474
    %v1478 = vmul.f32 %v1430, %v1472
    %v1479 = vmul.f32 %v1432, %v1475
    %v1480 = vld [vmem:[#allocation2 + $0x28] sm:$0xff]
    %v1481 = vld [vmem:[#allocation2 + $0x30] sm:$0xff]
    %v1482 = vld [vmem:[#allocation2 + $0x38] sm:$0xff]
    %v1483 = vld [vmem:[#allocation2 + $0x40] sm:$0xff]
    %v1484 = vld [vmem:[#allocation2 + $0x48] sm:$0xff]
    %1487 = vrot.lane.b32.xlu0 %v1478, 62
    %v1488 = vpop.permute.xlu0 %1487
    %1489 = vrot.lane.b32.xlu0 %v1479, 62
    %v1490 = vpop.permute.xlu0 %1489
    %vm1491 = vcmask 506880
    %v1492 = vsel %vm1491, %v1488, %v1490
    %v1494 = vsel %vm1164, %v1490, 0
    %1496 = vmatprep.subr.mxu0 %v1061
    %1497 = vmatpush1.msra.mxu0 %v1060
    %1498 = vmatprep.subr.mxu0 %v1066
    %1499 = vmatpush1.msra.mxu0 %v1065
    %1500 = vmatprep.subr.mxu0 %v1071
    %1501 = vmatpush1.msra.mxu0 %v1070
    %1502 = vmatprep.subr.mxu0 %v1076
    %1503 = vmatpush1.msra.mxu0 %v1075
    %1504 = vmatprep.subr.mxu0 %v1081
    %1505 = vmatpush1.msra.mxu0 %v1080
    %1506 = vmatprep.subr.mxu0 %v1086
    %1507 = vmatpush1.msra.mxu0 %v1085
    %1508 = vmatprep.subr.mxu0 %v1091
    %1509 = vmatpush1.msra.mxu0 %v1090
    %1510 = vmatprep.subr.mxu0 %v1096
    %1511 = vmatpush1.msra.mxu0 %v1095
    %1512 = vmatprep.subr.mxu0 %v1101
    %1513 = vmatpush1.msra.mxu0 %v1100
    %1514 = vmatprep.subr.mxu0 %v1106
    %1515 = vmatpush1.msra.mxu0 %v1105
    %1516 = vmatprep.subr.mxu0 %v1111
    %1517 = vmatpush1.msra.mxu0 %v1110
    %1518 = vmatprep.subr.mxu0 %v1116
    %1519 = vmatpush1.msra.mxu0 %v1115
    %1520 = vmatprep.subr.mxu0 %v1121
    %1521 = vmatpush1.msra.mxu0 %v1120
    %1522 = vmatprep.subr.mxu0 %v1126
    %1523 = vmatpush1.msra.mxu0 %v1125
    %1524 = vmatprep.subr.mxu0 %v1131
    %1525 = vmatpush1.msra.mxu0 %v1130
    %1526 = vmatprep.subr.mxu0 %v1136
    %1527 = vmatpush1.msra.mxu0 %v1135
    %1528 = vmatprep.subr.mxu0 %v1141
    %1529 = vmatpush1.msra.mxu0 %v1140
    %1530 = vmatprep.subr.mxu0 %v1146
    %1531 = vmatpush1.msra.mxu0 %v1145
    %1532 = vmatprep.subr.mxu0 %v1173
    %1533 = vmatpush1.msra.mxu0 %v1170
    %1534 = vmatprep.subr.mxu0 0.0
    %1535 = vmatpush1.msra.mxu0 0.0
    %1536 = vmatprep.subr.mxu0 0.0
    %1537 = vmatpush1.msra.mxu0 0.0
    %1538 = vmatprep.subr.mxu0 0.0
    %1539 = vmatpush1.msra.mxu0 0.0
    %1540 = vmatprep.subr.mxu0 0.0
    %1541 = vmatpush1.msra.mxu0 0.0
    %1542 = vmatprep.subr.mxu0 0.0
    %1543 = vmatpush1.msra.mxu0 0.0
    %1544 = vmatprep.subr.mxu0 0.0
    %1545 = vmatpush1.msra.mxu0 0.0
    %1546 = vmatprep.subr.mxu0 0.0
    %1547 = vmatpush1.msra.mxu0 0.0
    %1548 = vmatprep.subr.mxu0 0.0
    %1549 = vmatpush1.msra.mxu0 0.0
    %1550 = vmatprep.subr.mxu0 0.0
    %1551 = vmatpush1.msra.mxu0 0.0
    %1552 = vmatprep.subr.mxu0 0.0
    %1553 = vmatpush1.msra.mxu0 0.0
    %1554 = vmatprep.subr.mxu0 0.0
    %1555 = vmatpush1.msra.mxu0 0.0
    %1556 = vmatprep.subr.mxu0 0.0
    %1557 = vmatpush1.msra.mxu0 0.0
    %1558 = vmatprep.subr.mxu0 0.0
    %1559 = vmatpush1.msra.mxu0 0.0
    %1560 = vmatprep.mubr.f32.mxu0 %v1494
    %1561 = vmatmul.mubr.f32.gmra.mrb[0].mxu0 %v1492
    %v1562 = vpop.f32.mrb[0].mxu0
    %v1563 = vadd.f32 0.0, %v1562
    %v1564 = vpop.f32.mrb[0].mxu0
    %v1565 = vadd.f32 0.0, %v1564
    %1566 = vdwg.mxu0
    %1567 = vmatprep.subr.mxu0 %v1063
    %1568 = vmatpush1.msra.mxu0 %v1062
    %1569 = vmatprep.subr.mxu0 %v1068
    %1570 = vmatpush1.msra.mxu0 %v1067
    %1571 = vmatprep.subr.mxu0 %v1073
    %1572 = vmatpush1.msra.mxu0 %v1072
    %1573 = vmatprep.subr.mxu0 %v1078
    %1574 = vmatpush1.msra.mxu0 %v1077
    %1575 = vmatprep.subr.mxu0 %v1083
    %1576 = vmatpush1.msra.mxu0 %v1082
    %1577 = vmatprep.subr.mxu0 %v1088
    %1578 = vmatpush1.msra.mxu0 %v1087
    %1579 = vmatprep.subr.mxu0 %v1093
    %1580 = vmatpush1.msra.mxu0 %v1092
    %1581 = vmatprep.subr.mxu0 %v1098
    %1582 = vmatpush1.msra.mxu0 %v1097
    %1583 = vmatprep.subr.mxu0 %v1103
    %1584 = vmatpush1.msra.mxu0 %v1102
    %1585 = vmatprep.subr.mxu0 %v1108
    %1586 = vmatpush1.msra.mxu0 %v1107
    %1587 = vmatprep.subr.mxu0 %v1113
    %1588 = vmatpush1.msra.mxu0 %v1112
    %1589 = vmatprep.subr.mxu0 %v1118
    %1590 = vmatpush1.msra.mxu0 %v1117
    %1591 = vmatprep.subr.mxu0 %v1123
    %1592 = vmatpush1.msra.mxu0 %v1122
    %1593 = vmatprep.subr.mxu0 %v1128
    %1594 = vmatpush1.msra.mxu0 %v1127
    %1595 = vmatprep.subr.mxu0 %v1133
    %1596 = vmatpush1.msra.mxu0 %v1132
    %1597 = vmatprep.subr.mxu0 %v1138
    %1598 = vmatpush1.msra.mxu0 %v1137
    %1599 = vmatprep.subr.mxu0 %v1143
    %1600 = vmatpush1.msra.mxu0 %v1142
    %1601 = vmatprep.subr.mxu0 %v1148
    %1602 = vmatpush1.msra.mxu0 %v1147
    %1603 = vmatprep.subr.mxu0 %v1179
    %1604 = vmatpush1.msra.mxu0 %v1176
    %1605 = vmatprep.subr.mxu0 0.0
    %1606 = vmatpush1.msra.mxu0 0.0
    %1607 = vmatprep.subr.mxu0 0.0
    %1608 = vmatpush1.msra.mxu0 0.0
    %1609 = vmatprep.subr.mxu0 0.0
    %1610 = vmatpush1.msra.mxu0 0.0
    %1611 = vmatprep.subr.mxu0 0.0
    %1612 = vmatpush1.msra.mxu0 0.0
    %1613 = vmatprep.subr.mxu0 0.0
    %1614 = vmatpush1.msra.mxu0 0.0
    %1615 = vmatprep.subr.mxu0 0.0
    %1616 = vmatpush1.msra.mxu0 0.0
    %1617 = vmatprep.subr.mxu0 0.0
    %1618 = vmatpush1.msra.mxu0 0.0
    %1619 = vmatprep.subr.mxu0 0.0
    %1620 = vmatpush1.msra.mxu0 0.0
    %1621 = vmatprep.subr.mxu0 0.0
    %1622 = vmatpush1.msra.mxu0 0.0
    %1623 = vmatprep.subr.mxu0 0.0
    %1624 = vmatpush1.msra.mxu0 0.0
    %1625 = vmatprep.subr.mxu0 0.0
    %1626 = vmatpush1.msra.mxu0 0.0
    %1627 = vmatprep.subr.mxu0 0.0
    %1628 = vmatpush1.msra.mxu0 0.0
    %1629 = vmatprep.subr.mxu0 0.0
    %1630 = vmatpush1.msra.mxu0 0.0
    %1631 = vmatprep.mubr.f32.mxu0 %v1494
    %1632 = vmatmul.mubr.f32.gmra.mrb[0].mxu0 %v1492
    %v1633 = vpop.f32.mrb[0].mxu0
    %v1634 = vadd.f32 0.0, %v1633
    %v1635 = vpop.f32.mrb[0].mxu0
    %v1636 = vadd.f32 0.0, %v1635
    %1637 = vdwg.mxu0
    %1638 = vmatprep.subr.mxu0 0.0
    %1639 = vmatpush1.msra.mxu0 %v1064
    %1640 = vmatprep.subr.mxu0 0.0
    %1641 = vmatpush1.msra.mxu0 %v1069
    %1642 = vmatprep.subr.mxu0 0.0
    %1643 = vmatpush1.msra.mxu0 %v1074
    %1644 = vmatprep.subr.mxu0 0.0
    %1645 = vmatpush1.msra.mxu0 %v1079
    %1646 = vmatprep.subr.mxu0 0.0
    %1647 = vmatpush1.msra.mxu0 %v1084
    %1648 = vmatprep.subr.mxu0 0.0
    %1649 = vmatpush1.msra.mxu0 %v1089
    %1650 = vmatprep.subr.mxu0 0.0
    %1651 = vmatpush1.msra.mxu0 %v1094
    %1652 = vmatprep.subr.mxu0 0.0
    %1653 = vmatpush1.msra.mxu0 %v1099
    %1654 = vmatprep.subr.mxu0 0.0
    %1655 = vmatpush1.msra.mxu0 %v1104
    %1656 = vmatprep.subr.mxu0 0.0
    %1657 = vmatpush1.msra.mxu0 %v1109
    %1658 = vmatprep.subr.mxu0 0.0
    %1659 = vmatpush1.msra.mxu0 %v1114
    %1660 = vmatprep.subr.mxu0 0.0
    %1661 = vmatpush1.msra.mxu0 %v1119
    %1662 = vmatprep.subr.mxu0 0.0
    %1663 = vmatpush1.msra.mxu0 %v1124
    %1664 = vmatprep.subr.mxu0 0.0
    %1665 = vmatpush1.msra.mxu0 %v1129
    %1666 = vmatprep.subr.mxu0 0.0
    %1667 = vmatpush1.msra.mxu0 %v1134
    %1668 = vmatprep.subr.mxu0 0.0
    %1669 = vmatpush1.msra.mxu0 %v1139
    %1670 = vmatprep.subr.mxu0 0.0
    %1671 = vmatpush1.msra.mxu0 %v1144
    %1672 = vmatprep.subr.mxu0 0.0
    %1673 = vmatpush1.msra.mxu0 %v1149
    %1674 = vmatprep.subr.mxu0 0.0
    %1675 = vmatpush1.msra.mxu0 %v1182
    %1676 = vmatprep.subr.mxu0 0.0
    %1677 = vmatpush1.msra.mxu0 0.0
    %1678 = vmatprep.subr.mxu0 0.0
    %1679 = vmatpush1.msra.mxu0 0.0
    %1680 = vmatprep.subr.mxu0 0.0
    %1681 = vmatpush1.msra.mxu0 0.0
    %1682 = vmatprep.subr.mxu0 0.0
    %1683 = vmatpush1.msra.mxu0 0.0
    %1684 = vmatprep.subr.mxu0 0.0
    %1685 = vmatpush1.msra.mxu0 0.0
    %1686 = vmatprep.subr.mxu0 0.0
    %1687 = vmatpush1.msra.mxu0 0.0
    %1688 = vmatprep.subr.mxu0 0.0
    %1689 = vmatpush1.msra.mxu0 0.0
    %1690 = vmatprep.subr.mxu0 0.0
    %1691 = vmatpush1.msra.mxu0 0.0
    %1692 = vmatprep.subr.mxu0 0.0
    %1693 = vmatpush1.msra.mxu0 0.0
    %1694 = vmatprep.subr.mxu0 0.0
    %1695 = vmatpush1.msra.mxu0 0.0
    %1696 = vmatprep.subr.mxu0 0.0
    %1697 = vmatpush1.msra.mxu0 0.0
    %1698 = vmatprep.subr.mxu0 0.0
    %1699 = vmatpush1.msra.mxu0 0.0
    %1700 = vmatprep.subr.mxu0 0.0
    %1701 = vmatpush1.msra.mxu0 0.0
    %1702 = vmatprep.mubr.f32.mxu0 %v1494
    %1703 = vmatmul.mubr.f32.gmra.mrb[0].mxu0 %v1492
    %v1704 = vpop.f32.mrb[0].mxu0
    %v1705 = vadd.f32 0.0, %v1704
    %v1706 = vpop.f32.mrb[0].mxu0
    %1707 = vdwg.mxu0
    %v1708 = vadd.f32 %v1480, %v1563
    %v1709 = vadd.f32 %v1481, %v1565
    %v1710 = vadd.f32 %v1482, %v1634
    %v1711 = vadd.f32 %v1483, %v1636
    %v1712 = vadd.f32 %v1484, %v1705
    %v1713 = vxor.u32 %v1708, 2147483648
    %v1714 = vxor.u32 %v1709, 2147483648
    %v1715 = vmul.f32 %v1713, 1.442695
    %v1716 = vpow.pop %v1715
    %v1717 = vmul.f32 %v1714, 1.442695
    %v1718 = vpow.pop %v1717
    %v1719 = vadd.f32 %v1716, 1.0
    %v1720 = vadd.f32 %v1718, 1.0
    %v1721 = vrcp.pop %v1719
    %v1722 = vmul.f32 1.0, %v1721
    %v1723 = vrcp.pop %v1720
    %v1724 = vmul.f32 1.0, %v1723
    %v1725 = vxor.u32 %v1710, 2147483648
    %v1726 = vmul.f32 %v1725, 1.442695
    %v1727 = vpow.pop %v1726
    %v1728 = vadd.f32 %v1727, 1.0
    %v1729 = vrcp.pop %v1728
    %v1730 = vmul.f32 1.0, %v1729
    %v1731 = vtanh.pop %v1710
    %v1732 = vtanh.pop %v1711
    %v1733 = vxor.u32 %v1711, 2147483648
    %v1734 = vxor.u32 %v1712, 2147483648
    %v1735 = vmul.f32 %v1733, 1.442695
    %v1736 = vpow.pop %v1735
    %v1737 = vmul.f32 %v1734, 1.442695
    %v1738 = vpow.pop %v1737
    %v1739 = vadd.f32 %v1736, 1.0
    %v1740 = vadd.f32 %v1738, 1.0
    %v1741 = vrcp.pop %v1739
    %v1742 = vmul.f32 1.0, %v1741
    %v1743 = vrcp.pop %v1740
    %v1744 = vmul.f32 1.0, %v1743
    %v1745 = vmul.f32 %v1724, %v1465
    %v1746 = vmul.f32 %v1730, %v1466
    %1749 = vrot.lane.b32.xlu0 %v1731, 84
    %v1750 = vpop.permute.xlu0 %1749
    %1751 = vrot.lane.b32.xlu0 %v1732, 84
    %v1752 = vpop.permute.xlu0 %1751
    %v1753 = vsel %vm1450, %v1750, %v1752
    %v1756 = vmul.f32 %v1722, %v1753
    %v1757 = vmul.f32 %v1724, %v1752
    %1760 = vrot.lane.b32.xlu0 %v1756, 22
    %v1761 = vpop.permute.xlu0 %1760
    %1762 = vrot.lane.b32.xlu0 %v1757, 22
    %v1763 = vpop.permute.xlu0 %1762
    %v1764 = vsel %vm1164, %v1761, %v1763
    %v1767 = vadd.f32 %v1745, %v1761
    %v1768 = vadd.f32 %v1746, %v1764
    %v1769 = vtanh.pop %v1767
    %v1770 = vtanh.pop %v1768
    %1773 = vrot.lane.b32.xlu0 %v1769, 44
    %v1774 = vpop.permute.xlu0 %1773
    %1775 = vrot.lane.b32.xlu0 %v1770, 44
    %v1776 = vpop.permute.xlu0 %1775
    %v1777 = vsel %vm316, %v1774, %v1776
    %v1780 = vmul.f32 %v1742, %v1774
    %v1781 = vmul.f32 %v1744, %v1777
    %v1782 = vld [vmem:[#allocation2 + $0x50] sm:$0xff]
    %v1783 = vld [vmem:[#allocation2 + $0x58] sm:$0xff]
    %v1784 = vld [vmem:[#allocation2 + $0x60] sm:$0xff]
    %v1785 = vld [vmem:[#allocation2 + $0x68] sm:$0xff]
    %v1786 = vld [vmem:[#allocation2 + $0x70] sm:$0xff]
    %1789 = vrot.lane.b32.xlu0 %v1780, 62
    %v1790 = vpop.permute.xlu0 %1789
    %1791 = vrot.lane.b32.xlu0 %v1781, 62
    %v1792 = vpop.permute.xlu0 %1791
    %v1793 = vsel %vm1491, %v1790, %v1792
    %v1795 = vsel %vm1164, %v1792, 0
    %1797 = vmatprep.subr.mxu0 %v1061
    %1798 = vmatpush1.msra.mxu0 %v1060
    %1799 = vmatprep.subr.mxu0 %v1066
    %1800 = vmatpush1.msra.mxu0 %v1065
    %1801 = vmatprep.subr.mxu0 %v1071
    %1802 = vmatpush1.msra.mxu0 %v1070
    %1803 = vmatprep.subr.mxu0 %v1076
    %1804 = vmatpush1.msra.mxu0 %v1075
    %1805 = vmatprep.subr.mxu0 %v1081
    %1806 = vmatpush1.msra.mxu0 %v1080
    %1807 = vmatprep.subr.mxu0 %v1086
    %1808 = vmatpush1.msra.mxu0 %v1085
    %1809 = vmatprep.subr.mxu0 %v1091
    %1810 = vmatpush1.msra.mxu0 %v1090
    %1811 = vmatprep.subr.mxu0 %v1096
    %1812 = vmatpush1.msra.mxu0 %v1095
    %1813 = vmatprep.subr.mxu0 %v1101
    %1814 = vmatpush1.msra.mxu0 %v1100
    %1815 = vmatprep.subr.mxu0 %v1106
    %1816 = vmatpush1.msra.mxu0 %v1105
    %1817 = vmatprep.subr.mxu0 %v1111
    %1818 = vmatpush1.msra.mxu0 %v1110
    %1819 = vmatprep.subr.mxu0 %v1116
    %1820 = vmatpush1.msra.mxu0 %v1115
    %1821 = vmatprep.subr.mxu0 %v1121
    %1822 = vmatpush1.msra.mxu0 %v1120
    %1823 = vmatprep.subr.mxu0 %v1126
    %1824 = vmatpush1.msra.mxu0 %v1125
    %1825 = vmatprep.subr.mxu0 %v1131
    %1826 = vmatpush1.msra.mxu0 %v1130
    %1827 = vmatprep.subr.mxu0 %v1136
    %1828 = vmatpush1.msra.mxu0 %v1135
    %1829 = vmatprep.subr.mxu0 %v1141
    %1830 = vmatpush1.msra.mxu0 %v1140
    %1831 = vmatprep.subr.mxu0 %v1146
    %1832 = vmatpush1.msra.mxu0 %v1145
    %1833 = vmatprep.subr.mxu0 %v1173
    %1834 = vmatpush1.msra.mxu0 %v1170
    %1835 = vmatprep.subr.mxu0 0.0
    %1836 = vmatpush1.msra.mxu0 0.0
    %1837 = vmatprep.subr.mxu0 0.0
    %1838 = vmatpush1.msra.mxu0 0.0
    %1839 = vmatprep.subr.mxu0 0.0
    %1840 = vmatpush1.msra.mxu0 0.0
    %1841 = vmatprep.subr.mxu0 0.0
    %1842 = vmatpush1.msra.mxu0 0.0
    %1843 = vmatprep.subr.mxu0 0.0
    %1844 = vmatpush1.msra.mxu0 0.0
    %1845 = vmatprep.subr.mxu0 0.0
    %1846 = vmatpush1.msra.mxu0 0.0
    %1847 = vmatprep.subr.mxu0 0.0
    %1848 = vmatpush1.msra.mxu0 0.0
    %1849 = vmatprep.subr.mxu0 0.0
    %1850 = vmatpush1.msra.mxu0 0.0
    %1851 = vmatprep.subr.mxu0 0.0
    %1852 = vmatpush1.msra.mxu0 0.0
    %1853 = vmatprep.subr.mxu0 0.0
    %1854 = vmatpush1.msra.mxu0 0.0
    %1855 = vmatprep.subr.mxu0 0.0
    %1856 = vmatpush1.msra.mxu0 0.0
    %1857 = vmatprep.subr.mxu0 0.0
    %1858 = vmatpush1.msra.mxu0 0.0
    %1859 = vmatprep.subr.mxu0 0.0
    %1860 = vmatpush1.msra.mxu0 0.0
    %1861 = vmatprep.mubr.f32.mxu0 %v1795
    %1862 = vmatmul.mubr.f32.gmra.mrb[0].mxu0 %v1793
    %v1863 = vpop.f32.mrb[0].mxu0
    %v1864 = vadd.f32 0.0, %v1863
    %v1865 = vpop.f32.mrb[0].mxu0
    %v1866 = vadd.f32 0.0, %v1865
    %1867 = vdwg.mxu0
    %1868 = vmatprep.subr.mxu0 %v1063
    %1869 = vmatpush1.msra.mxu0 %v1062
    %1870 = vmatprep.subr.mxu0 %v1068
    %1871 = vmatpush1.msra.mxu0 %v1067
    %1872 = vmatprep.subr.mxu0 %v1073
    %1873 = vmatpush1.msra.mxu0 %v1072
    %1874 = vmatprep.subr.mxu0 %v1078
    %1875 = vmatpush1.msra.mxu0 %v1077
    %1876 = vmatprep.subr.mxu0 %v1083
    %1877 = vmatpush1.msra.mxu0 %v1082
    %1878 = vmatprep.subr.mxu0 %v1088
    %1879 = vmatpush1.msra.mxu0 %v1087
    %1880 = vmatprep.subr.mxu0 %v1093
    %1881 = vmatpush1.msra.mxu0 %v1092
    %1882 = vmatprep.subr.mxu0 %v1098
    %1883 = vmatpush1.msra.mxu0 %v1097
    %1884 = vmatprep.subr.mxu0 %v1103
    %1885 = vmatpush1.msra.mxu0 %v1102
    %1886 = vmatprep.subr.mxu0 %v1108
    %1887 = vmatpush1.msra.mxu0 %v1107
    %1888 = vmatprep.subr.mxu0 %v1113
    %1889 = vmatpush1.msra.mxu0 %v1112
    %1890 = vmatprep.subr.mxu0 %v1118
    %1891 = vmatpush1.msra.mxu0 %v1117
    %1892 = vmatprep.subr.mxu0 %v1123
    %1893 = vmatpush1.msra.mxu0 %v1122
    %1894 = vmatprep.subr.mxu0 %v1128
    %1895 = vmatpush1.msra.mxu0 %v1127
    %1896 = vmatprep.subr.mxu0 %v1133
    %1897 = vmatpush1.msra.mxu0 %v1132
    %1898 = vmatprep.subr.mxu0 %v1138
    %1899 = vmatpush1.msra.mxu0 %v1137
    %1900 = vmatprep.subr.mxu0 %v1143
    %1901 = vmatpush1.msra.mxu0 %v1142
    %1902 = vmatprep.subr.mxu0 %v1148
    %1903 = vmatpush1.msra.mxu0 %v1147
    %1904 = vmatprep.subr.mxu0 %v1179
    %1905 = vmatpush1.msra.mxu0 %v1176
    %1906 = vmatprep.subr.mxu0 0.0
    %1907 = vmatpush1.msra.mxu0 0.0
    %1908 = vmatprep.subr.mxu0 0.0
    %1909 = vmatpush1.msra.mxu0 0.0
    %1910 = vmatprep.subr.mxu0 0.0
    %1911 = vmatpush1.msra.mxu0 0.0
    %1912 = vmatprep.subr.mxu0 0.0
    %1913 = vmatpush1.msra.mxu0 0.0
    %1914 = vmatprep.subr.mxu0 0.0
    %1915 = vmatpush1.msra.mxu0 0.0
    %1916 = vmatprep.subr.mxu0 0.0
    %1917 = vmatpush1.msra.mxu0 0.0
    %1918 = vmatprep.subr.mxu0 0.0
    %1919 = vmatpush1.msra.mxu0 0.0
    %1920 = vmatprep.subr.mxu0 0.0
    %1921 = vmatpush1.msra.mxu0 0.0
    %1922 = vmatprep.subr.mxu0 0.0
    %1923 = vmatpush1.msra.mxu0 0.0
    %1924 = vmatprep.subr.mxu0 0.0
    %1925 = vmatpush1.msra.mxu0 0.0
    %1926 = vmatprep.subr.mxu0 0.0
    %1927 = vmatpush1.msra.mxu0 0.0
    %1928 = vmatprep.subr.mxu0 0.0
    %1929 = vmatpush1.msra.mxu0 0.0
    %1930 = vmatprep.subr.mxu0 0.0
    %1931 = vmatpush1.msra.mxu0 0.0
    %1932 = vmatprep.mubr.f32.mxu0 %v1795
    %1933 = vmatmul.mubr.f32.gmra.mrb[0].mxu0 %v1793
    %v1934 = vpop.f32.mrb[0].mxu0
    %v1935 = vadd.f32 0.0, %v1934
    %v1936 = vpop.f32.mrb[0].mxu0
    %v1937 = vadd.f32 0.0, %v1936
    %1938 = vdwg.mxu0
    %1939 = vmatprep.subr.mxu0 0.0
    %1940 = vmatpush1.msra.mxu0 %v1064
    %1941 = vmatprep.subr.mxu0 0.0
    %1942 = vmatpush1.msra.mxu0 %v1069
    %1943 = vmatprep.subr.mxu0 0.0
    %1944 = vmatpush1.msra.mxu0 %v1074
    %1945 = vmatprep.subr.mxu0 0.0
    %1946 = vmatpush1.msra.mxu0 %v1079
    %1947 = vmatprep.subr.mxu0 0.0
    %1948 = vmatpush1.msra.mxu0 %v1084
    %1949 = vmatprep.subr.mxu0 0.0
    %1950 = vmatpush1.msra.mxu0 %v1089
    %1951 = vmatprep.subr.mxu0 0.0
    %1952 = vmatpush1.msra.mxu0 %v1094
    %1953 = vmatprep.subr.mxu0 0.0
    %1954 = vmatpush1.msra.mxu0 %v1099
    %1955 = vmatprep.subr.mxu0 0.0
    %1956 = vmatpush1.msra.mxu0 %v1104
    %1957 = vmatprep.subr.mxu0 0.0
    %1958 = vmatpush1.msra.mxu0 %v1109
    %1959 = vmatprep.subr.mxu0 0.0
    %1960 = vmatpush1.msra.mxu0 %v1114
    %1961 = vmatprep.subr.mxu0 0.0
    %1962 = vmatpush1.msra.mxu0 %v1119
    %1963 = vmatprep.subr.mxu0 0.0
    %1964 = vmatpush1.msra.mxu0 %v1124
    %1965 = vmatprep.subr.mxu0 0.0
    %1966 = vmatpush1.msra.mxu0 %v1129
    %1967 = vmatprep.subr.mxu0 0.0
    %1968 = vmatpush1.msra.mxu0 %v1134
    %1969 = vmatprep.subr.mxu0 0.0
    %1970 = vmatpush1.msra.mxu0 %v1139
    %1971 = vmatprep.subr.mxu0 0.0
    %1972 = vmatpush1.msra.mxu0 %v1144
    %1973 = vmatprep.subr.mxu0 0.0
    %1974 = vmatpush1.msra.mxu0 %v1149
    %1975 = vmatprep.subr.mxu0 0.0
    %1976 = vmatpush1.msra.mxu0 %v1182
    %1977 = vmatprep.subr.mxu0 0.0
    %1978 = vmatpush1.msra.mxu0 0.0
    %1979 = vmatprep.subr.mxu0 0.0
    %1980 = vmatpush1.msra.mxu0 0.0
    %1981 = vmatprep.subr.mxu0 0.0
    %1982 = vmatpush1.msra.mxu0 0.0
    %1983 = vmatprep.subr.mxu0 0.0
    %1984 = vmatpush1.msra.mxu0 0.0
    %1985 = vmatprep.subr.mxu0 0.0
    %1986 = vmatpush1.msra.mxu0 0.0
    %1987 = vmatprep.subr.mxu0 0.0
    %1988 = vmatpush1.msra.mxu0 0.0
    %1989 = vmatprep.subr.mxu0 0.0
    %1990 = vmatpush1.msra.mxu0 0.0
    %1991 = vmatprep.subr.mxu0 0.0
    %1992 = vmatpush1.msra.mxu0 0.0
    %1993 = vmatprep.subr.mxu0 0.0
    %1994 = vmatpush1.msra.mxu0 0.0
    %1995 = vmatprep.subr.mxu0 0.0
    %1996 = vmatpush1.msra.mxu0 0.0
    %1997 = vmatprep.subr.mxu0 0.0
    %1998 = vmatpush1.msra.mxu0 0.0
    %1999 = vmatprep.subr.mxu0 0.0
    %2000 = vmatpush1.msra.mxu0 0.0
    %2001 = vmatprep.subr.mxu0 0.0
    %2002 = vmatpush1.msra.mxu0 0.0
    %2003 = vmatprep.mubr.f32.mxu0 %v1795
    %2004 = vmatmul.mubr.f32.gmra.mrb[0].mxu0 %v1793
    %v2005 = vpop.f32.mrb[0].mxu0
    %v2006 = vadd.f32 0.0, %v2005
    %v2007 = vpop.f32.mrb[0].mxu0
    %2008 = vdwg.mxu0
    %v2009 = vadd.f32 %v1782, %v1864
    %v2010 = vadd.f32 %v1783, %v1866
    %v2011 = vadd.f32 %v1784, %v1935
    %v2012 = vadd.f32 %v1785, %v1937
    %v2013 = vadd.f32 %v1786, %v2006
    %v2014 = vxor.u32 %v2009, 2147483648
    %v2015 = vxor.u32 %v2010, 2147483648
    %v2016 = vmul.f32 %v2014, 1.442695
    %v2017 = vpow.pop %v2016
    %v2018 = vmul.f32 %v2015, 1.442695
    %v2019 = vpow.pop %v2018
    %v2020 = vadd.f32 %v2017, 1.0
    %v2021 = vadd.f32 %v2019, 1.0
    %v2022 = vrcp.pop %v2020
    %v2023 = vmul.f32 1.0, %v2022
    %v2024 = vrcp.pop %v2021
    %v2025 = vmul.f32 1.0, %v2024
    %v2026 = vxor.u32 %v2011, 2147483648
    %v2027 = vmul.f32 %v2026, 1.442695
    %v2028 = vpow.pop %v2027
    %v2029 = vadd.f32 %v2028, 1.0
    %v2030 = vrcp.pop %v2029
    %v2031 = vmul.f32 1.0, %v2030
    %v2032 = vtanh.pop %v2011
    %v2033 = vtanh.pop %v2012
    %v2034 = vxor.u32 %v2012, 2147483648
    %v2035 = vxor.u32 %v2013, 2147483648
    %v2036 = vmul.f32 %v2034, 1.442695
    %v2037 = vpow.pop %v2036
    %v2038 = vmul.f32 %v2035, 1.442695
    %v2039 = vpow.pop %v2038
    %v2040 = vadd.f32 %v2037, 1.0
    %v2041 = vadd.f32 %v2039, 1.0
    %v2042 = vrcp.pop %v2040
    %v2043 = vmul.f32 1.0, %v2042
    %v2044 = vrcp.pop %v2041
    %v2045 = vmul.f32 1.0, %v2044
    %v2046 = vmul.f32 %v2025, %v1767
    %v2047 = vmul.f32 %v2031, %v1768
    %2050 = vrot.lane.b32.xlu0 %v2032, 84
    %v2051 = vpop.permute.xlu0 %2050
    %2052 = vrot.lane.b32.xlu0 %v2033, 84
    %v2053 = vpop.permute.xlu0 %2052
    %v2054 = vsel %vm1450, %v2051, %v2053
    %v2057 = vmul.f32 %v2023, %v2054
    %v2058 = vmul.f32 %v2025, %v2053
    %2061 = vrot.lane.b32.xlu0 %v2057, 22
    %v2062 = vpop.permute.xlu0 %2061
    %2063 = vrot.lane.b32.xlu0 %v2058, 22
    %v2064 = vpop.permute.xlu0 %2063
    %v2065 = vsel %vm1164, %v2062, %v2064
    %v2068 = vadd.f32 %v2046, %v2062
    %v2069 = vadd.f32 %v2047, %v2065
    %v2070 = vtanh.pop %v2068
    %v2071 = vtanh.pop %v2069
    %2074 = vrot.lane.b32.xlu0 %v2070, 44
    %v2075 = vpop.permute.xlu0 %2074
    %2076 = vrot.lane.b32.xlu0 %v2071, 44
    %v2077 = vpop.permute.xlu0 %2076
    %v2078 = vsel %vm316, %v2075, %v2077
    %v2081 = vmul.f32 %v2043, %v2075
    %v2082 = vmul.f32 %v2045, %v2078
    %v2083 = vld [vmem:[#allocation2 + $0x78] sm:$0xff]
    %v2084 = vld [vmem:[#allocation2 + $0x80] sm:$0xff]
    %v2085 = vld [vmem:[#allocation2 + $0x88] sm:$0xff]
    %v2086 = vld [vmem:[#allocation2 + $0x90] sm:$0xff]
    %v2087 = vld [vmem:[#allocation2 + $0x98] sm:$0xff]
    %2090 = vrot.lane.b32.xlu0 %v2081, 62
    %v2091 = vpop.permute.xlu0 %2090
    %2092 = vrot.lane.b32.xlu0 %v2082, 62
    %v2093 = vpop.permute.xlu0 %2092
    %v2094 = vsel %vm1491, %v2091, %v2093
    %v2096 = vsel %vm1164, %v2093, 0
    %2098 = vmatprep.subr.mxu0 %v1061
    %2099 = vmatpush1.msra.mxu0 %v1060
    %2100 = vmatprep.subr.mxu0 %v1066
    %2101 = vmatpush1.msra.mxu0 %v1065
    %2102 = vmatprep.subr.mxu0 %v1071
    %2103 = vmatpush1.msra.mxu0 %v1070
    %2104 = vmatprep.subr.mxu0 %v1076
    %2105 = vmatpush1.msra.mxu0 %v1075
    %2106 = vmatprep.subr.mxu0 %v1081
    %2107 = vmatpush1.msra.mxu0 %v1080
    %2108 = vmatprep.subr.mxu0 %v1086
    %2109 = vmatpush1.msra.mxu0 %v1085
    %2110 = vmatprep.subr.mxu0 %v1091
    %2111 = vmatpush1.msra.mxu0 %v1090
    %2112 = vmatprep.subr.mxu0 %v1096
    %2113 = vmatpush1.msra.mxu0 %v1095
    %2114 = vmatprep.subr.mxu0 %v1101
    %2115 = vmatpush1.msra.mxu0 %v1100
    %2116 = vmatprep.subr.mxu0 %v1106
    %2117 = vmatpush1.msra.mxu0 %v1105
    %2118 = vmatprep.subr.mxu0 %v1111
    %2119 = vmatpush1.msra.mxu0 %v1110
    %2120 = vmatprep.subr.mxu0 %v1116
    %2121 = vmatpush1.msra.mxu0 %v1115
    %2122 = vmatprep.subr.mxu0 %v1121
    %2123 = vmatpush1.msra.mxu0 %v1120
    %2124 = vmatprep.subr.mxu0 %v1126
    %2125 = vmatpush1.msra.mxu0 %v1125
    %2126 = vmatprep.subr.mxu0 %v1131
    %2127 = vmatpush1.msra.mxu0 %v1130
    %2128 = vmatprep.subr.mxu0 %v1136
    %2129 = vmatpush1.msra.mxu0 %v1135
    %2130 = vmatprep.subr.mxu0 %v1141
    %2131 = vmatpush1.msra.mxu0 %v1140
    %2132 = vmatprep.subr.mxu0 %v1146
    %2133 = vmatpush1.msra.mxu0 %v1145
    %2134 = vmatprep.subr.mxu0 %v1173
    %2135 = vmatpush1.msra.mxu0 %v1170
    %2136 = vmatprep.subr.mxu0 0.0
    %2137 = vmatpush1.msra.mxu0 0.0
    %2138 = vmatprep.subr.mxu0 0.0
    %2139 = vmatpush1.msra.mxu0 0.0
    %2140 = vmatprep.subr.mxu0 0.0
    %2141 = vmatpush1.msra.mxu0 0.0
    %2142 = vmatprep.subr.mxu0 0.0
    %2143 = vmatpush1.msra.mxu0 0.0
    %2144 = vmatprep.subr.mxu0 0.0
    %2145 = vmatpush1.msra.mxu0 0.0
    %2146 = vmatprep.subr.mxu0 0.0
    %2147 = vmatpush1.msra.mxu0 0.0
    %2148 = vmatprep.subr.mxu0 0.0
    %2149 = vmatpush1.msra.mxu0 0.0
    %2150 = vmatprep.subr.mxu0 0.0
    %2151 = vmatpush1.msra.mxu0 0.0
    %2152 = vmatprep.subr.mxu0 0.0
    %2153 = vmatpush1.msra.mxu0 0.0
    %2154 = vmatprep.subr.mxu0 0.0
    %2155 = vmatpush1.msra.mxu0 0.0
    %2156 = vmatprep.subr.mxu0 0.0
    %2157 = vmatpush1.msra.mxu0 0.0
    %2158 = vmatprep.subr.mxu0 0.0
    %2159 = vmatpush1.msra.mxu0 0.0
    %2160 = vmatprep.subr.mxu0 0.0
    %2161 = vmatpush1.msra.mxu0 0.0
    %2162 = vmatprep.mubr.f32.mxu0 %v2096
    %2163 = vmatmul.mubr.f32.gmra.mrb[0].mxu0 %v2094
    %v2164 = vpop.f32.mrb[0].mxu0
    %v2165 = vadd.f32 0.0, %v2164
    %v2166 = vpop.f32.mrb[0].mxu0
    %v2167 = vadd.f32 0.0, %v2166
    %2168 = vdwg.mxu0
    %2169 = vmatprep.subr.mxu0 %v1063
    %2170 = vmatpush1.msra.mxu0 %v1062
    %2171 = vmatprep.subr.mxu0 %v1068
    %2172 = vmatpush1.msra.mxu0 %v1067
    %2173 = vmatprep.subr.mxu0 %v1073
    %2174 = vmatpush1.msra.mxu0 %v1072
    %2175 = vmatprep.subr.mxu0 %v1078
    %2176 = vmatpush1.msra.mxu0 %v1077
    %2177 = vmatprep.subr.mxu0 %v1083
    %2178 = vmatpush1.msra.mxu0 %v1082
    %2179 = vmatprep.subr.mxu0 %v1088
    %2180 = vmatpush1.msra.mxu0 %v1087
    %2181 = vmatprep.subr.mxu0 %v1093
    %2182 = vmatpush1.msra.mxu0 %v1092
    %2183 = vmatprep.subr.mxu0 %v1098
    %2184 = vmatpush1.msra.mxu0 %v1097
    %2185 = vmatprep.subr.mxu0 %v1103
    %2186 = vmatpush1.msra.mxu0 %v1102
    %2187 = vmatprep.subr.mxu0 %v1108
    %2188 = vmatpush1.msra.mxu0 %v1107
    %2189 = vmatprep.subr.mxu0 %v1113
    %2190 = vmatpush1.msra.mxu0 %v1112
    %2191 = vmatprep.subr.mxu0 %v1118
    %2192 = vmatpush1.msra.mxu0 %v1117
    %2193 = vmatprep.subr.mxu0 %v1123
    %2194 = vmatpush1.msra.mxu0 %v1122
    %2195 = vmatprep.subr.mxu0 %v1128
    %2196 = vmatpush1.msra.mxu0 %v1127
    %2197 = vmatprep.subr.mxu0 %v1133
    %2198 = vmatpush1.msra.mxu0 %v1132
    %2199 = vmatprep.subr.mxu0 %v1138
    %2200 = vmatpush1.msra.mxu0 %v1137
    %2201 = vmatprep.subr.mxu0 %v1143
    %2202 = vmatpush1.msra.mxu0 %v1142
    %2203 = vmatprep.subr.mxu0 %v1148
    %2204 = vmatpush1.msra.mxu0 %v1147
    %2205 = vmatprep.subr.mxu0 %v1179
    %2206 = vmatpush1.msra.mxu0 %v1176
    %2207 = vmatprep.subr.mxu0 0.0
    %2208 = vmatpush1.msra.mxu0 0.0
    %2209 = vmatprep.subr.mxu0 0.0
    %2210 = vmatpush1.msra.mxu0 0.0
    %2211 = vmatprep.subr.mxu0 0.0
    %2212 = vmatpush1.msra.mxu0 0.0
    %2213 = vmatprep.subr.mxu0 0.0
    %2214 = vmatpush1.msra.mxu0 0.0
    %2215 = vmatprep.subr.mxu0 0.0
    %2216 = vmatpush1.msra.mxu0 0.0
    %2217 = vmatprep.subr.mxu0 0.0
    %2218 = vmatpush1.msra.mxu0 0.0
    %2219 = vmatprep.subr.mxu0 0.0
    %2220 = vmatpush1.msra.mxu0 0.0
    %2221 = vmatprep.subr.mxu0 0.0
    %2222 = vmatpush1.msra.mxu0 0.0
    %2223 = vmatprep.subr.mxu0 0.0
    %2224 = vmatpush1.msra.mxu0 0.0
    %2225 = vmatprep.subr.mxu0 0.0
    %2226 = vmatpush1.msra.mxu0 0.0
    %2227 = vmatprep.subr.mxu0 0.0
    %2228 = vmatpush1.msra.mxu0 0.0
    %2229 = vmatprep.subr.mxu0 0.0
    %2230 = vmatpush1.msra.mxu0 0.0
    %2231 = vmatprep.subr.mxu0 0.0
    %2232 = vmatpush1.msra.mxu0 0.0
    %2233 = vmatprep.mubr.f32.mxu0 %v2096
    %2234 = vmatmul.mubr.f32.gmra.mrb[0].mxu0 %v2094
    %v2235 = vpop.f32.mrb[0].mxu0
    %v2236 = vadd.f32 0.0, %v2235
    %v2237 = vpop.f32.mrb[0].mxu0
    %v2238 = vadd.f32 0.0, %v2237
    %2239 = vdwg.mxu0
    %2240 = vmatprep.subr.mxu0 0.0
    %2241 = vmatpush1.msra.mxu0 %v1064
    %2242 = vmatprep.subr.mxu0 0.0
    %2243 = vmatpush1.msra.mxu0 %v1069
    %2244 = vmatprep.subr.mxu0 0.0
    %2245 = vmatpush1.msra.mxu0 %v1074
    %2246 = vmatprep.subr.mxu0 0.0
    %2247 = vmatpush1.msra.mxu0 %v1079
    %2248 = vmatprep.subr.mxu0 0.0
    %2249 = vmatpush1.msra.mxu0 %v1084
    %2250 = vmatprep.subr.mxu0 0.0
    %2251 = vmatpush1.msra.mxu0 %v1089
    %2252 = vmatprep.subr.mxu0 0.0
    %2253 = vmatpush1.msra.mxu0 %v1094
    %2254 = vmatprep.subr.mxu0 0.0
    %2255 = vmatpush1.msra.mxu0 %v1099
    %2256 = vmatprep.subr.mxu0 0.0
    %2257 = vmatpush1.msra.mxu0 %v1104
    %2258 = vmatprep.subr.mxu0 0.0
    %2259 = vmatpush1.msra.mxu0 %v1109
    %2260 = vmatprep.subr.mxu0 0.0
    %2261 = vmatpush1.msra.mxu0 %v1114
    %2262 = vmatprep.subr.mxu0 0.0
    %2263 = vmatpush1.msra.mxu0 %v1119
    %2264 = vmatprep.subr.mxu0 0.0
    %2265 = vmatpush1.msra.mxu0 %v1124
    %2266 = vmatprep.subr.mxu0 0.0
    %2267 = vmatpush1.msra.mxu0 %v1129
    %2268 = vmatprep.subr.mxu0 0.0
    %2269 = vmatpush1.msra.mxu0 %v1134
    %2270 = vmatprep.subr.mxu0 0.0
    %2271 = vmatpush1.msra.mxu0 %v1139
    %2272 = vmatprep.subr.mxu0 0.0
    %2273 = vmatpush1.msra.mxu0 %v1144
    %2274 = vmatprep.subr.mxu0 0.0
    %2275 = vmatpush1.msra.mxu0 %v1149
    %2276 = vmatprep.subr.mxu0 0.0
    %2277 = vmatpush1.msra.mxu0 %v1182
    %2278 = vmatprep.subr.mxu0 0.0
    %2279 = vmatpush1.msra.mxu0 0.0
    %2280 = vmatprep.subr.mxu0 0.0
    %2281 = vmatpush1.msra.mxu0 0.0
    %2282 = vmatprep.subr.mxu0 0.0
    %2283 = vmatpush1.msra.mxu0 0.0
    %2284 = vmatprep.subr.mxu0 0.0
    %2285 = vmatpush1.msra.mxu0 0.0
    %2286 = vmatprep.subr.mxu0 0.0
    %2287 = vmatpush1.msra.mxu0 0.0
    %2288 = vmatprep.subr.mxu0 0.0
    %2289 = vmatpush1.msra.mxu0 0.0
    %2290 = vmatprep.subr.mxu0 0.0
    %2291 = vmatpush1.msra.mxu0 0.0
    %2292 = vmatprep.subr.mxu0 0.0
    %2293 = vmatpush1.msra.mxu0 0.0
    %2294 = vmatprep.subr.mxu0 0.0
    %2295 = vmatpush1.msra.mxu0 0.0
    %2296 = vmatprep.subr.mxu0 0.0
    %2297 = vmatpush1.msra.mxu0 0.0
    %2298 = vmatprep.subr.mxu0 0.0
    %2299 = vmatpush1.msra.mxu0 0.0
    %2300 = vmatprep.subr.mxu0 0.0
    %2301 = vmatpush1.msra.mxu0 0.0
    %2302 = vmatprep.subr.mxu0 0.0
    %2303 = vmatpush1.msra.mxu0 0.0
    %2304 = vmatprep.mubr.f32.mxu0 %v2096
    %2305 = vmatmul.mubr.f32.gmra.mrb[0].mxu0 %v2094
    %v2306 = vpop.f32.mrb[0].mxu0
    %v2307 = vadd.f32 0.0, %v2306
    %v2308 = vpop.f32.mrb[0].mxu0
    %2309 = vdwg.mxu0
    %v2310 = vadd.f32 %v2083, %v2165
    %v2311 = vadd.f32 %v2084, %v2167
    %v2312 = vadd.f32 %v2085, %v2236
    %v2313 = vadd.f32 %v2086, %v2238
    %v2314 = vadd.f32 %v2087, %v2307
    %v2315 = vxor.u32 %v2310, 2147483648
    %v2316 = vxor.u32 %v2311, 2147483648
    %v2317 = vmul.f32 %v2315, 1.442695
    %v2318 = vpow.pop %v2317
    %v2319 = vmul.f32 %v2316, 1.442695
    %v2320 = vpow.pop %v2319
    %v2321 = vadd.f32 %v2318, 1.0
    %v2322 = vadd.f32 %v2320, 1.0
    %v2323 = vrcp.pop %v2321
    %v2324 = vmul.f32 1.0, %v2323
    %v2325 = vrcp.pop %v2322
    %v2326 = vmul.f32 1.0, %v2325
    %v2327 = vxor.u32 %v2312, 2147483648
    %v2328 = vmul.f32 %v2327, 1.442695
    %v2329 = vpow.pop %v2328
    %v2330 = vadd.f32 %v2329, 1.0
    %v2331 = vrcp.pop %v2330
    %v2332 = vmul.f32 1.0, %v2331
    %v2333 = vtanh.pop %v2312
    %v2334 = vtanh.pop %v2313
    %v2335 = vxor.u32 %v2313, 2147483648
    %v2336 = vxor.u32 %v2314, 2147483648
    %v2337 = vmul.f32 %v2335, 1.442695
    %v2338 = vpow.pop %v2337
    %v2339 = vmul.f32 %v2336, 1.442695
    %v2340 = vpow.pop %v2339
    %v2341 = vadd.f32 %v2338, 1.0
    %v2342 = vadd.f32 %v2340, 1.0
    %v2343 = vrcp.pop %v2341
    %v2344 = vmul.f32 1.0, %v2343
    %v2345 = vrcp.pop %v2342
    %v2346 = vmul.f32 1.0, %v2345
    %v2347 = vmul.f32 %v2326, %v2068
    %v2348 = vmul.f32 %v2332, %v2069
    %2351 = vrot.lane.b32.xlu0 %v2333, 84
    %v2352 = vpop.permute.xlu0 %2351
    %2353 = vrot.lane.b32.xlu0 %v2334, 84
    %v2354 = vpop.permute.xlu0 %2353
    %v2355 = vsel %vm1450, %v2352, %v2354
    %v2358 = vmul.f32 %v2324, %v2355
    %v2359 = vmul.f32 %v2326, %v2354
    %2362 = vrot.lane.b32.xlu0 %v2358, 22
    %v2363 = vpop.permute.xlu0 %2362
    %2364 = vrot.lane.b32.xlu0 %v2359, 22
    %v2365 = vpop.permute.xlu0 %2364
    %v2366 = vsel %vm1164, %v2363, %v2365
    %v2369 = vadd.f32 %v2347, %v2363
    %v2370 = vadd.f32 %v2348, %v2366
    %v2371 = vtanh.pop %v2369
    %v2372 = vtanh.pop %v2370
    %2375 = vrot.lane.b32.xlu0 %v2371, 44
    %v2376 = vpop.permute.xlu0 %2375
    %2377 = vrot.lane.b32.xlu0 %v2372, 44
    %v2378 = vpop.permute.xlu0 %2377
    %v2379 = vsel %vm316, %v2376, %v2378
    %v2382 = vmul.f32 %v2344, %v2376
    %v2383 = vmul.f32 %v2346, %v2379
    %v2384 = vld [vmem:[#allocation2 + $0xa0] sm:$0xff]
    %v2385 = vld [vmem:[#allocation2 + $0xa8] sm:$0xff]
    %v2386 = vld [vmem:[#allocation2 + $0xb0] sm:$0xff]
    %v2387 = vld [vmem:[#allocation2 + $0xb8] sm:$0xff]
    %v2388 = vld [vmem:[#allocation2 + $0xc0] sm:$0xff]
    %2391 = vrot.lane.b32.xlu0 %v2382, 62
    %v2392 = vpop.permute.xlu0 %2391
    %2393 = vrot.lane.b32.xlu0 %v2383, 62
    %v2394 = vpop.permute.xlu0 %2393
    %v2395 = vsel %vm1491, %v2392, %v2394
    %v2397 = vsel %vm1164, %v2394, 0
    %2399 = vmatprep.subr.mxu0 %v1061
    %2400 = vmatpush1.msra.mxu0 %v1060
    %2401 = vmatprep.subr.mxu0 %v1066
    %2402 = vmatpush1.msra.mxu0 %v1065
    %2403 = vmatprep.subr.mxu0 %v1071
    %2404 = vmatpush1.msra.mxu0 %v1070
    %2405 = vmatprep.subr.mxu0 %v1076
    %2406 = vmatpush1.msra.mxu0 %v1075
    %2407 = vmatprep.subr.mxu0 %v1081
    %2408 = vmatpush1.msra.mxu0 %v1080
    %2409 = vmatprep.subr.mxu0 %v1086
    %2410 = vmatpush1.msra.mxu0 %v1085
    %2411 = vmatprep.subr.mxu0 %v1091
    %2412 = vmatpush1.msra.mxu0 %v1090
    %2413 = vmatprep.subr.mxu0 %v1096
    %2414 = vmatpush1.msra.mxu0 %v1095
    %2415 = vmatprep.subr.mxu0 %v1101
    %2416 = vmatpush1.msra.mxu0 %v1100
    %2417 = vmatprep.subr.mxu0 %v1106
    %2418 = vmatpush1.msra.mxu0 %v1105
    %2419 = vmatprep.subr.mxu0 %v1111
    %2420 = vmatpush1.msra.mxu0 %v1110
    %2421 = vmatprep.subr.mxu0 %v1116
    %2422 = vmatpush1.msra.mxu0 %v1115
    %2423 = vmatprep.subr.mxu0 %v1121
    %2424 = vmatpush1.msra.mxu0 %v1120
    %2425 = vmatprep.subr.mxu0 %v1126
    %2426 = vmatpush1.msra.mxu0 %v1125
    %2427 = vmatprep.subr.mxu0 %v1131
    %2428 = vmatpush1.msra.mxu0 %v1130
    %2429 = vmatprep.subr.mxu0 %v1136
    %2430 = vmatpush1.msra.mxu0 %v1135
    %2431 = vmatprep.subr.mxu0 %v1141
    %2432 = vmatpush1.msra.mxu0 %v1140
    %2433 = vmatprep.subr.mxu0 %v1146
    %2434 = vmatpush1.msra.mxu0 %v1145
    %2435 = vmatprep.subr.mxu0 %v1173
    %2436 = vmatpush1.msra.mxu0 %v1170
    %2437 = vmatprep.subr.mxu0 0.0
    %2438 = vmatpush1.msra.mxu0 0.0
    %2439 = vmatprep.subr.mxu0 0.0
    %2440 = vmatpush1.msra.mxu0 0.0
    %2441 = vmatprep.subr.mxu0 0.0
    %2442 = vmatpush1.msra.mxu0 0.0
    %2443 = vmatprep.subr.mxu0 0.0
    %2444 = vmatpush1.msra.mxu0 0.0
    %2445 = vmatprep.subr.mxu0 0.0
    %2446 = vmatpush1.msra.mxu0 0.0
    %2447 = vmatprep.subr.mxu0 0.0
    %2448 = vmatpush1.msra.mxu0 0.0
    %2449 = vmatprep.subr.mxu0 0.0
    %2450 = vmatpush1.msra.mxu0 0.0
    %2451 = vmatprep.subr.mxu0 0.0
    %2452 = vmatpush1.msra.mxu0 0.0
    %2453 = vmatprep.subr.mxu0 0.0
    %2454 = vmatpush1.msra.mxu0 0.0
    %2455 = vmatprep.subr.mxu0 0.0
    %2456 = vmatpush1.msra.mxu0 0.0
    %2457 = vmatprep.subr.mxu0 0.0
    %2458 = vmatpush1.msra.mxu0 0.0
    %2459 = vmatprep.subr.mxu0 0.0
    %2460 = vmatpush1.msra.mxu0 0.0
    %2461 = vmatprep.subr.mxu0 0.0
    %2462 = vmatpush1.msra.mxu0 0.0
    %2463 = vmatprep.mubr.f32.mxu0 %v2397
    %2464 = vmatmul.mubr.f32.gmra.mrb[0].mxu0 %v2395
    %v2465 = vpop.f32.mrb[0].mxu0
    %v2466 = vadd.f32 0.0, %v2465
    %v2467 = vpop.f32.mrb[0].mxu0
    %v2468 = vadd.f32 0.0, %v2467
    %2469 = vdwg.mxu0
    %2470 = vmatprep.subr.mxu0 %v1063
    %2471 = vmatpush1.msra.mxu0 %v1062
    %2472 = vmatprep.subr.mxu0 %v1068
    %2473 = vmatpush1.msra.mxu0 %v1067
    %2474 = vmatprep.subr.mxu0 %v1073
    %2475 = vmatpush1.msra.mxu0 %v1072
    %2476 = vmatprep.subr.mxu0 %v1078
    %2477 = vmatpush1.msra.mxu0 %v1077
    %2478 = vmatprep.subr.mxu0 %v1083
    %2479 = vmatpush1.msra.mxu0 %v1082
    %2480 = vmatprep.subr.mxu0 %v1088
    %2481 = vmatpush1.msra.mxu0 %v1087
    %2482 = vmatprep.subr.mxu0 %v1093
    %2483 = vmatpush1.msra.mxu0 %v1092
    %2484 = vmatprep.subr.mxu0 %v1098
    %2485 = vmatpush1.msra.mxu0 %v1097
    %2486 = vmatprep.subr.mxu0 %v1103
    %2487 = vmatpush1.msra.mxu0 %v1102
    %2488 = vmatprep.subr.mxu0 %v1108
    %2489 = vmatpush1.msra.mxu0 %v1107
    %2490 = vmatprep.subr.mxu0 %v1113
    %2491 = vmatpush1.msra.mxu0 %v1112
    %2492 = vmatprep.subr.mxu0 %v1118
    %2493 = vmatpush1.msra.mxu0 %v1117
    %2494 = vmatprep.subr.mxu0 %v1123
    %2495 = vmatpush1.msra.mxu0 %v1122
    %2496 = vmatprep.subr.mxu0 %v1128
    %2497 = vmatpush1.msra.mxu0 %v1127
    %2498 = vmatprep.subr.mxu0 %v1133
    %2499 = vmatpush1.msra.mxu0 %v1132
    %2500 = vmatprep.subr.mxu0 %v1138
    %2501 = vmatpush1.msra.mxu0 %v1137
    %2502 = vmatprep.subr.mxu0 %v1143
    %2503 = vmatpush1.msra.mxu0 %v1142
    %2504 = vmatprep.subr.mxu0 %v1148
    %2505 = vmatpush1.msra.mxu0 %v1147
    %2506 = vmatprep.subr.mxu0 %v1179
    %2507 = vmatpush1.msra.mxu0 %v1176
    %2508 = vmatprep.subr.mxu0 0.0
    %2509 = vmatpush1.msra.mxu0 0.0
    %2510 = vmatprep.subr.mxu0 0.0
    %2511 = vmatpush1.msra.mxu0 0.0
    %2512 = vmatprep.subr.mxu0 0.0
    %2513 = vmatpush1.msra.mxu0 0.0
    %2514 = vmatprep.subr.mxu0 0.0
    %2515 = vmatpush1.msra.mxu0 0.0
    %2516 = vmatprep.subr.mxu0 0.0
    %2517 = vmatpush1.msra.mxu0 0.0
    %2518 = vmatprep.subr.mxu0 0.0
    %2519 = vmatpush1.msra.mxu0 0.0
    %2520 = vmatprep.subr.mxu0 0.0
    %2521 = vmatpush1.msra.mxu0 0.0
    %2522 = vmatprep.subr.mxu0 0.0
    %2523 = vmatpush1.msra.mxu0 0.0
    %2524 = vmatprep.subr.mxu0 0.0
    %2525 = vmatpush1.msra.mxu0 0.0
    %2526 = vmatprep.subr.mxu0 0.0
    %2527 = vmatpush1.msra.mxu0 0.0
    %2528 = vmatprep.subr.mxu0 0.0
    %2529 = vmatpush1.msra.mxu0 0.0
    %2530 = vmatprep.subr.mxu0 0.0
    %2531 = vmatpush1.msra.mxu0 0.0
    %2532 = vmatprep.subr.mxu0 0.0
    %2533 = vmatpush1.msra.mxu0 0.0
    %2534 = vmatprep.mubr.f32.mxu0 %v2397
    %2535 = vmatmul.mubr.f32.gmra.mrb[0].mxu0 %v2395
    %v2536 = vpop.f32.mrb[0].mxu0
    %v2537 = vadd.f32 0.0, %v2536
    %v2538 = vpop.f32.mrb[0].mxu0
    %v2539 = vadd.f32 0.0, %v2538
    %2540 = vdwg.mxu0
    %2541 = vmatprep.subr.mxu0 0.0
    %2542 = vmatpush1.msra.mxu0 %v1064
    %2543 = vmatprep.subr.mxu0 0.0
    %2544 = vmatpush1.msra.mxu0 %v1069
    %2545 = vmatprep.subr.mxu0 0.0
    %2546 = vmatpush1.msra.mxu0 %v1074
    %2547 = vmatprep.subr.mxu0 0.0
    %2548 = vmatpush1.msra.mxu0 %v1079
    %2549 = vmatprep.subr.mxu0 0.0
    %2550 = vmatpush1.msra.mxu0 %v1084
    %2551 = vmatprep.subr.mxu0 0.0
    %2552 = vmatpush1.msra.mxu0 %v1089
    %2553 = vmatprep.subr.mxu0 0.0
    %2554 = vmatpush1.msra.mxu0 %v1094
    %2555 = vmatprep.subr.mxu0 0.0
    %2556 = vmatpush1.msra.mxu0 %v1099
    %2557 = vmatprep.subr.mxu0 0.0
    %2558 = vmatpush1.msra.mxu0 %v1104
    %2559 = vmatprep.subr.mxu0 0.0
    %2560 = vmatpush1.msra.mxu0 %v1109
    %2561 = vmatprep.subr.mxu0 0.0
    %2562 = vmatpush1.msra.mxu0 %v1114
    %2563 = vmatprep.subr.mxu0 0.0
    %2564 = vmatpush1.msra.mxu0 %v1119
    %2565 = vmatprep.subr.mxu0 0.0
    %2566 = vmatpush1.msra.mxu0 %v1124
    %2567 = vmatprep.subr.mxu0 0.0
    %2568 = vmatpush1.msra.mxu0 %v1129
    %2569 = vmatprep.subr.mxu0 0.0
    %2570 = vmatpush1.msra.mxu0 %v1134
    %2571 = vmatprep.subr.mxu0 0.0
    %2572 = vmatpush1.msra.mxu0 %v1139
    %2573 = vmatprep.subr.mxu0 0.0
    %2574 = vmatpush1.msra.mxu0 %v1144
    %2575 = vmatprep.subr.mxu0 0.0
    %2576 = vmatpush1.msra.mxu0 %v1149
    %2577 = vmatprep.subr.mxu0 0.0
    %2578 = vmatpush1.msra.mxu0 %v1182
    %2579 = vmatprep.subr.mxu0 0.0
    %2580 = vmatpush1.msra.mxu0 0.0
    %2581 = vmatprep.subr.mxu0 0.0
    %2582 = vmatpush1.msra.mxu0 0.0
    %2583 = vmatprep.subr.mxu0 0.0
    %2584 = vmatpush1.msra.mxu0 0.0
    %2585 = vmatprep.subr.mxu0 0.0
    %2586 = vmatpush1.msra.mxu0 0.0
    %2587 = vmatprep.subr.mxu0 0.0
    %2588 = vmatpush1.msra.mxu0 0.0
    %2589 = vmatprep.subr.mxu0 0.0
    %2590 = vmatpush1.msra.mxu0 0.0
    %2591 = vmatprep.subr.mxu0 0.0
    %2592 = vmatpush1.msra.mxu0 0.0
    %2593 = vmatprep.subr.mxu0 0.0
    %2594 = vmatpush1.msra.mxu0 0.0
    %2595 = vmatprep.subr.mxu0 0.0
    %2596 = vmatpush1.msra.mxu0 0.0
    %2597 = vmatprep.subr.mxu0 0.0
    %2598 = vmatpush1.msra.mxu0 0.0
    %2599 = vmatprep.subr.mxu0 0.0
    %2600 = vmatpush1.msra.mxu0 0.0
    %2601 = vmatprep.subr.mxu0 0.0
    %2602 = vmatpush1.msra.mxu0 0.0
    %2603 = vmatprep.subr.mxu0 0.0
    %2604 = vmatpush1.msra.mxu0 0.0
    %2605 = vmatprep.mubr.f32.mxu0 %v2397
    %2606 = vmatmul.mubr.f32.gmra.mrb[0].mxu0 %v2395
    %v2607 = vpop.f32.mrb[0].mxu0
    %v2608 = vadd.f32 0.0, %v2607
    %v2609 = vpop.f32.mrb[0].mxu0
    %2610 = vdwg.mxu0
    %v2611 = vadd.f32 %v2384, %v2466
    %v2612 = vadd.f32 %v2385, %v2468
    %v2613 = vadd.f32 %v2386, %v2537
    %v2614 = vadd.f32 %v2387, %v2539
    %v2615 = vadd.f32 %v2388, %v2608
    %v2616 = vxor.u32 %v2611, 2147483648
    %v2617 = vxor.u32 %v2612, 2147483648
    %v2618 = vmul.f32 %v2616, 1.442695
    %v2619 = vpow.pop %v2618
    %v2620 = vmul.f32 %v2617, 1.442695
    %v2621 = vpow.pop %v2620
    %v2622 = vadd.f32 %v2619, 1.0
    %v2623 = vadd.f32 %v2621, 1.0
    %v2624 = vrcp.pop %v2622
    %v2625 = vmul.f32 1.0, %v2624
    %v2626 = vrcp.pop %v2623
    %v2627 = vmul.f32 1.0, %v2626
    %v2628 = vxor.u32 %v2613, 2147483648
    %v2629 = vmul.f32 %v2628, 1.442695
    %v2630 = vpow.pop %v2629
    %v2631 = vadd.f32 %v2630, 1.0
    %v2632 = vrcp.pop %v2631
    %v2633 = vmul.f32 1.0, %v2632
    %v2634 = vtanh.pop %v2613
    %v2635 = vtanh.pop %v2614
    %v2636 = vxor.u32 %v2614, 2147483648
    %v2637 = vxor.u32 %v2615, 2147483648
    %v2638 = vmul.f32 %v2636, 1.442695
    %v2639 = vpow.pop %v2638
    %v2640 = vmul.f32 %v2637, 1.442695
    %v2641 = vpow.pop %v2640
    %v2642 = vadd.f32 %v2639, 1.0
    %v2643 = vadd.f32 %v2641, 1.0
    %v2644 = vrcp.pop %v2642
    %v2645 = vmul.f32 1.0, %v2644
    %v2646 = vrcp.pop %v2643
    %v2647 = vmul.f32 1.0, %v2646
    %v2648 = vmul.f32 %v2627, %v2369
    %v2649 = vmul.f32 %v2633, %v2370
    %2652 = vrot.lane.b32.xlu0 %v2634, 84
    %v2653 = vpop.permute.xlu0 %2652
    %2654 = vrot.lane.b32.xlu0 %v2635, 84
    %v2655 = vpop.permute.xlu0 %2654
    %v2656 = vsel %vm1450, %v2653, %v2655
    %v2659 = vmul.f32 %v2625, %v2656
    %v2660 = vmul.f32 %v2627, %v2655
    %2663 = vrot.lane.b32.xlu0 %v2659, 22
    %v2664 = vpop.permute.xlu0 %2663
    %2665 = vrot.lane.b32.xlu0 %v2660, 22
    %v2666 = vpop.permute.xlu0 %2665
    %v2667 = vsel %vm1164, %v2664, %v2666
    %v2670 = vadd.f32 %v2648, %v2664
    %v2671 = vadd.f32 %v2649, %v2667
    %v2672 = vtanh.pop %v2670
    %v2673 = vtanh.pop %v2671
    %2676 = vrot.lane.b32.xlu0 %v2672, 44
    %v2677 = vpop.permute.xlu0 %2676
    %2678 = vrot.lane.b32.xlu0 %v2673, 44
    %v2679 = vpop.permute.xlu0 %2678
    %v2680 = vsel %vm316, %v2677, %v2679
    %v2683 = vmul.f32 %v2645, %v2677
    %v2684 = vmul.f32 %v2647, %v2680
    %v2685 = vld [vmem:[#allocation2 + $0xc8] sm:$0xff]
    %v2686 = vld [vmem:[#allocation2 + $0xd0] sm:$0xff]
    %v2687 = vld [vmem:[#allocation2 + $0xd8] sm:$0xff]
    %v2688 = vld [vmem:[#allocation2 + $0xe0] sm:$0xff]
    %v2689 = vld [vmem:[#allocation2 + $0xe8] sm:$0xff]
    %2692 = vrot.lane.b32.xlu0 %v2683, 62
    %v2693 = vpop.permute.xlu0 %2692
    %2694 = vrot.lane.b32.xlu0 %v2684, 62
    %v2695 = vpop.permute.xlu0 %2694
    %v2696 = vsel %vm1491, %v2693, %v2695
    %v2698 = vsel %vm1164, %v2695, 0
    %2700 = vmatprep.subr.mxu0 %v1061
    %2701 = vmatpush1.msra.mxu0 %v1060
    %2702 = vmatprep.subr.mxu0 %v1066
    %2703 = vmatpush1.msra.mxu0 %v1065
    %2704 = vmatprep.subr.mxu0 %v1071
    %2705 = vmatpush1.msra.mxu0 %v1070
    %2706 = vmatprep.subr.mxu0 %v1076
    %2707 = vmatpush1.msra.mxu0 %v1075
    %2708 = vmatprep.subr.mxu0 %v1081
    %2709 = vmatpush1.msra.mxu0 %v1080
    %2710 = vmatprep.subr.mxu0 %v1086
    %2711 = vmatpush1.msra.mxu0 %v1085
    %2712 = vmatprep.subr.mxu0 %v1091
    %2713 = vmatpush1.msra.mxu0 %v1090
    %2714 = vmatprep.subr.mxu0 %v1096
    %2715 = vmatpush1.msra.mxu0 %v1095
    %2716 = vmatprep.subr.mxu0 %v1101
    %2717 = vmatpush1.msra.mxu0 %v1100
    %2718 = vmatprep.subr.mxu0 %v1106
    %2719 = vmatpush1.msra.mxu0 %v1105
    %2720 = vmatprep.subr.mxu0 %v1111
    %2721 = vmatpush1.msra.mxu0 %v1110
    %2722 = vmatprep.subr.mxu0 %v1116
    %2723 = vmatpush1.msra.mxu0 %v1115
    %2724 = vmatprep.subr.mxu0 %v1121
    %2725 = vmatpush1.msra.mxu0 %v1120
    %2726 = vmatprep.subr.mxu0 %v1126
    %2727 = vmatpush1.msra.mxu0 %v1125
    %2728 = vmatprep.subr.mxu0 %v1131
    %2729 = vmatpush1.msra.mxu0 %v1130
    %2730 = vmatprep.subr.mxu0 %v1136
    %2731 = vmatpush1.msra.mxu0 %v1135
    %2732 = vmatprep.subr.mxu0 %v1141
    %2733 = vmatpush1.msra.mxu0 %v1140
    %2734 = vmatprep.subr.mxu0 %v1146
    %2735 = vmatpush1.msra.mxu0 %v1145
    %2736 = vmatprep.subr.mxu0 %v1173
    %2737 = vmatpush1.msra.mxu0 %v1170
    %2738 = vmatprep.subr.mxu0 0.0
    %2739 = vmatpush1.msra.mxu0 0.0
    %2740 = vmatprep.subr.mxu0 0.0
    %2741 = vmatpush1.msra.mxu0 0.0
    %2742 = vmatprep.subr.mxu0 0.0
    %2743 = vmatpush1.msra.mxu0 0.0
    %2744 = vmatprep.subr.mxu0 0.0
    %2745 = vmatpush1.msra.mxu0 0.0
    %2746 = vmatprep.subr.mxu0 0.0
    %2747 = vmatpush1.msra.mxu0 0.0
    %2748 = vmatprep.subr.mxu0 0.0
    %2749 = vmatpush1.msra.mxu0 0.0
    %2750 = vmatprep.subr.mxu0 0.0
    %2751 = vmatpush1.msra.mxu0 0.0
    %2752 = vmatprep.subr.mxu0 0.0
    %2753 = vmatpush1.msra.mxu0 0.0
    %2754 = vmatprep.subr.mxu0 0.0
    %2755 = vmatpush1.msra.mxu0 0.0
    %2756 = vmatprep.subr.mxu0 0.0
    %2757 = vmatpush1.msra.mxu0 0.0
    %2758 = vmatprep.subr.mxu0 0.0
    %2759 = vmatpush1.msra.mxu0 0.0
    %2760 = vmatprep.subr.mxu0 0.0
    %2761 = vmatpush1.msra.mxu0 0.0
    %2762 = vmatprep.subr.mxu0 0.0
    %2763 = vmatpush1.msra.mxu0 0.0
    %2764 = vmatprep.mubr.f32.mxu0 %v2698
    %2765 = vmatmul.mubr.f32.gmra.mrb[0].mxu0 %v2696
    %v2766 = vpop.f32.mrb[0].mxu0
    %v2767 = vadd.f32 0.0, %v2766
    %v2768 = vpop.f32.mrb[0].mxu0
    %v2769 = vadd.f32 0.0, %v2768
    %2770 = vdwg.mxu0
    %2771 = vmatprep.subr.mxu0 %v1063
    %2772 = vmatpush1.msra.mxu0 %v1062
    %2773 = vmatprep.subr.mxu0 %v1068
    %2774 = vmatpush1.msra.mxu0 %v1067
    %2775 = vmatprep.subr.mxu0 %v1073
    %2776 = vmatpush1.msra.mxu0 %v1072
    %2777 = vmatprep.subr.mxu0 %v1078
    %2778 = vmatpush1.msra.mxu0 %v1077
    %2779 = vmatprep.subr.mxu0 %v1083
    %2780 = vmatpush1.msra.mxu0 %v1082
    %2781 = vmatprep.subr.mxu0 %v1088
    %2782 = vmatpush1.msra.mxu0 %v1087
    %2783 = vmatprep.subr.mxu0 %v1093
    %2784 = vmatpush1.msra.mxu0 %v1092
    %2785 = vmatprep.subr.mxu0 %v1098
    %2786 = vmatpush1.msra.mxu0 %v1097
    %2787 = vmatprep.subr.mxu0 %v1103
    %2788 = vmatpush1.msra.mxu0 %v1102
    %2789 = vmatprep.subr.mxu0 %v1108
    %2790 = vmatpush1.msra.mxu0 %v1107
    %2791 = vmatprep.subr.mxu0 %v1113
    %2792 = vmatpush1.msra.mxu0 %v1112
    %2793 = vmatprep.subr.mxu0 %v1118
    %2794 = vmatpush1.msra.mxu0 %v1117
    %2795 = vmatprep.subr.mxu0 %v1123
    %2796 = vmatpush1.msra.mxu0 %v1122
    %2797 = vmatprep.subr.mxu0 %v1128
    %2798 = vmatpush1.msra.mxu0 %v1127
    %2799 = vmatprep.subr.mxu0 %v1133
    %2800 = vmatpush1.msra.mxu0 %v1132
    %2801 = vmatprep.subr.mxu0 %v1138
    %2802 = vmatpush1.msra.mxu0 %v1137
    %2803 = vmatprep.subr.mxu0 %v1143
    %2804 = vmatpush1.msra.mxu0 %v1142
    %2805 = vmatprep.subr.mxu0 %v1148
    %2806 = vmatpush1.msra.mxu0 %v1147
    %2807 = vmatprep.subr.mxu0 %v1179
    %2808 = vmatpush1.msra.mxu0 %v1176
    %2809 = vmatprep.subr.mxu0 0.0
    %2810 = vmatpush1.msra.mxu0 0.0
    %2811 = vmatprep.subr.mxu0 0.0
    %2812 = vmatpush1.msra.mxu0 0.0
    %2813 = vmatprep.subr.mxu0 0.0
    %2814 = vmatpush1.msra.mxu0 0.0
    %2815 = vmatprep.subr.mxu0 0.0
    %2816 = vmatpush1.msra.mxu0 0.0
    %2817 = vmatprep.subr.mxu0 0.0
    %2818 = vmatpush1.msra.mxu0 0.0
    %2819 = vmatprep.subr.mxu0 0.0
    %2820 = vmatpush1.msra.mxu0 0.0
    %2821 = vmatprep.subr.mxu0 0.0
    %2822 = vmatpush1.msra.mxu0 0.0
    %2823 = vmatprep.subr.mxu0 0.0
    %2824 = vmatpush1.msra.mxu0 0.0
    %2825 = vmatprep.subr.mxu0 0.0
    %2826 = vmatpush1.msra.mxu0 0.0
    %2827 = vmatprep.subr.mxu0 0.0
    %2828 = vmatpush1.msra.mxu0 0.0
    %2829 = vmatprep.subr.mxu0 0.0
    %2830 = vmatpush1.msra.mxu0 0.0
    %2831 = vmatprep.subr.mxu0 0.0
    %2832 = vmatpush1.msra.mxu0 0.0
    %2833 = vmatprep.subr.mxu0 0.0
    %2834 = vmatpush1.msra.mxu0 0.0
    %2835 = vmatprep.mubr.f32.mxu0 %v2698
    %2836 = vmatmul.mubr.f32.gmra.mrb[0].mxu0 %v2696
    %v2837 = vpop.f32.mrb[0].mxu0
    %v2838 = vadd.f32 0.0, %v2837
    %v2839 = vpop.f32.mrb[0].mxu0
    %v2840 = vadd.f32 0.0, %v2839
    %2841 = vdwg.mxu0
    %2842 = vmatprep.subr.mxu0 0.0
    %2843 = vmatpush1.msra.mxu0 %v1064
    %2844 = vmatprep.subr.mxu0 0.0
    %2845 = vmatpush1.msra.mxu0 %v1069
    %2846 = vmatprep.subr.mxu0 0.0
    %2847 = vmatpush1.msra.mxu0 %v1074
    %2848 = vmatprep.subr.mxu0 0.0
    %2849 = vmatpush1.msra.mxu0 %v1079
    %2850 = vmatprep.subr.mxu0 0.0
    %2851 = vmatpush1.msra.mxu0 %v1084
    %2852 = vmatprep.subr.mxu0 0.0
    %2853 = vmatpush1.msra.mxu0 %v1089
    %2854 = vmatprep.subr.mxu0 0.0
    %2855 = vmatpush1.msra.mxu0 %v1094
    %2856 = vmatprep.subr.mxu0 0.0
    %2857 = vmatpush1.msra.mxu0 %v1099
    %2858 = vmatprep.subr.mxu0 0.0
    %2859 = vmatpush1.msra.mxu0 %v1104
    %2860 = vmatprep.subr.mxu0 0.0
    %2861 = vmatpush1.msra.mxu0 %v1109
    %2862 = vmatprep.subr.mxu0 0.0
    %2863 = vmatpush1.msra.mxu0 %v1114
    %2864 = vmatprep.subr.mxu0 0.0
    %2865 = vmatpush1.msra.mxu0 %v1119
    %2866 = vmatprep.subr.mxu0 0.0
    %2867 = vmatpush1.msra.mxu0 %v1124
    %2868 = vmatprep.subr.mxu0 0.0
    %2869 = vmatpush1.msra.mxu0 %v1129
    %2870 = vmatprep.subr.mxu0 0.0
    %2871 = vmatpush1.msra.mxu0 %v1134
    %2872 = vmatprep.subr.mxu0 0.0
    %2873 = vmatpush1.msra.mxu0 %v1139
    %2874 = vmatprep.subr.mxu0 0.0
    %2875 = vmatpush1.msra.mxu0 %v1144
    %2876 = vmatprep.subr.mxu0 0.0
    %2877 = vmatpush1.msra.mxu0 %v1149
    %2878 = vmatprep.subr.mxu0 0.0
    %2879 = vmatpush1.msra.mxu0 %v1182
    %2880 = vmatprep.subr.mxu0 0.0
    %2881 = vmatpush1.msra.mxu0 0.0
    %2882 = vmatprep.subr.mxu0 0.0
    %2883 = vmatpush1.msra.mxu0 0.0
    %2884 = vmatprep.subr.mxu0 0.0
    %2885 = vmatpush1.msra.mxu0 0.0
    %2886 = vmatprep.subr.mxu0 0.0
    %2887 = vmatpush1.msra.mxu0 0.0
    %2888 = vmatprep.subr.mxu0 0.0
    %2889 = vmatpush1.msra.mxu0 0.0
    %2890 = vmatprep.subr.mxu0 0.0
    %2891 = vmatpush1.msra.mxu0 0.0
    %2892 = vmatprep.subr.mxu0 0.0
    %2893 = vmatpush1.msra.mxu0 0.0
    %2894 = vmatprep.subr.mxu0 0.0
    %2895 = vmatpush1.msra.mxu0 0.0
    %2896 = vmatprep.subr.mxu0 0.0
    %2897 = vmatpush1.msra.mxu0 0.0
    %2898 = vmatprep.subr.mxu0 0.0
    %2899 = vmatpush1.msra.mxu0 0.0
    %2900 = vmatprep.subr.mxu0 0.0
    %2901 = vmatpush1.msra.mxu0 0.0
    %2902 = vmatprep.subr.mxu0 0.0
    %2903 = vmatpush1.msra.mxu0 0.0
    %2904 = vmatprep.subr.mxu0 0.0
    %2905 = vmatpush1.msra.mxu0 0.0
    %2906 = vmatprep.mubr.f32.mxu0 %v2698
    %2907 = vmatmul.mubr.f32.gmra.mrb[0].mxu0 %v2696
    %v2908 = vpop.f32.mrb[0].mxu0
    %v2909 = vadd.f32 0.0, %v2908
    %v2910 = vpop.f32.mrb[0].mxu0
    %2911 = vdwg.mxu0
    %v2912 = vadd.f32 %v2685, %v2767
    %v2913 = vadd.f32 %v2686, %v2769
    %v2914 = vadd.f32 %v2687, %v2838
    %v2915 = vadd.f32 %v2688, %v2840
    %v2916 = vadd.f32 %v2689, %v2909
    %v2917 = vxor.u32 %v2912, 2147483648
    %v2918 = vxor.u32 %v2913, 2147483648
    %v2919 = vmul.f32 %v2917, 1.442695
    %v2920 = vpow.pop %v2919
    %v2921 = vmul.f32 %v2918, 1.442695
    %v2922 = vpow.pop %v2921
    %v2923 = vadd.f32 %v2920, 1.0
    %v2924 = vadd.f32 %v2922, 1.0
    %v2925 = vrcp.pop %v2923
    %v2926 = vmul.f32 1.0, %v2925
    %v2927 = vrcp.pop %v2924
    %v2928 = vmul.f32 1.0, %v2927
    %v2929 = vxor.u32 %v2914, 2147483648
    %v2930 = vmul.f32 %v2929, 1.442695
    %v2931 = vpow.pop %v2930
    %v2932 = vadd.f32 %v2931, 1.0
    %v2933 = vrcp.pop %v2932
    %v2934 = vmul.f32 1.0, %v2933
    %v2935 = vtanh.pop %v2914
    %v2936 = vtanh.pop %v2915
    %v2937 = vxor.u32 %v2915, 2147483648
    %v2938 = vxor.u32 %v2916, 2147483648
    %v2939 = vmul.f32 %v2937, 1.442695
    %v2940 = vpow.pop %v2939
    %v2941 = vmul.f32 %v2938, 1.442695
    %v2942 = vpow.pop %v2941
    %v2943 = vadd.f32 %v2940, 1.0
    %v2944 = vadd.f32 %v2942, 1.0
    %v2945 = vrcp.pop %v2943
    %v2946 = vmul.f32 1.0, %v2945
    %v2947 = vrcp.pop %v2944
    %v2948 = vmul.f32 1.0, %v2947
    %v2949 = vmul.f32 %v2928, %v2670
    %v2950 = vmul.f32 %v2934, %v2671
    %2953 = vrot.lane.b32.xlu0 %v2935, 84
    %v2954 = vpop.permute.xlu0 %2953
    %2955 = vrot.lane.b32.xlu0 %v2936, 84
    %v2956 = vpop.permute.xlu0 %2955
    %v2957 = vsel %vm1450, %v2954, %v2956
    %v2960 = vmul.f32 %v2926, %v2957
    %v2961 = vmul.f32 %v2928, %v2956
    %2964 = vrot.lane.b32.xlu0 %v2960, 22
    %v2965 = vpop.permute.xlu0 %2964
    %2966 = vrot.lane.b32.xlu0 %v2961, 22
    %v2967 = vpop.permute.xlu0 %2966
    %v2968 = vsel %vm1164, %v2965, %v2967
    %v2971 = vadd.f32 %v2949, %v2965
    %v2972 = vadd.f32 %v2950, %v2968
    %v2973 = vtanh.pop %v2971
    %v2974 = vtanh.pop %v2972
    %2977 = vrot.lane.b32.xlu0 %v2973, 44
    %v2978 = vpop.permute.xlu0 %2977
    %2979 = vrot.lane.b32.xlu0 %v2974, 44
    %v2980 = vpop.permute.xlu0 %2979
    %v2981 = vsel %vm316, %v2978, %v2980
    %v2984 = vmul.f32 %v2946, %v2978
    %v2985 = vmul.f32 %v2948, %v2981
    %v2986 = vld [vmem:[#allocation2 + $0xf0] sm:$0xff]
    %v2987 = vld [vmem:[#allocation2 + $0xf8] sm:$0xff]
    %v2988 = vld [vmem:[#allocation2 + $0x100] sm:$0xff]
    %v2989 = vld [vmem:[#allocation2 + $0x108] sm:$0xff]
    %v2990 = vld [vmem:[#allocation2 + $0x110] sm:$0xff]
    %2993 = vrot.lane.b32.xlu0 %v2984, 62
    %v2994 = vpop.permute.xlu0 %2993
    %2995 = vrot.lane.b32.xlu0 %v2985, 62
    %v2996 = vpop.permute.xlu0 %2995
    %v2997 = vsel %vm1491, %v2994, %v2996
    %v2999 = vsel %vm1164, %v2996, 0
    %3001 = vmatprep.subr.mxu0 %v1061
    %3002 = vmatpush1.msra.mxu0 %v1060
    %3003 = vmatprep.subr.mxu0 %v1066
    %3004 = vmatpush1.msra.mxu0 %v1065
    %3005 = vmatprep.subr.mxu0 %v1071
    %3006 = vmatpush1.msra.mxu0 %v1070
    %3007 = vmatprep.subr.mxu0 %v1076
    %3008 = vmatpush1.msra.mxu0 %v1075
    %3009 = vmatprep.subr.mxu0 %v1081
    %3010 = vmatpush1.msra.mxu0 %v1080
    %3011 = vmatprep.subr.mxu0 %v1086
    %3012 = vmatpush1.msra.mxu0 %v1085
    %3013 = vmatprep.subr.mxu0 %v1091
    %3014 = vmatpush1.msra.mxu0 %v1090
    %3015 = vmatprep.subr.mxu0 %v1096
    %3016 = vmatpush1.msra.mxu0 %v1095
    %3017 = vmatprep.subr.mxu0 %v1101
    %3018 = vmatpush1.msra.mxu0 %v1100
    %3019 = vmatprep.subr.mxu0 %v1106
    %3020 = vmatpush1.msra.mxu0 %v1105
    %3021 = vmatprep.subr.mxu0 %v1111
    %3022 = vmatpush1.msra.mxu0 %v1110
    %3023 = vmatprep.subr.mxu0 %v1116
    %3024 = vmatpush1.msra.mxu0 %v1115
    %3025 = vmatprep.subr.mxu0 %v1121
    %3026 = vmatpush1.msra.mxu0 %v1120
    %3027 = vmatprep.subr.mxu0 %v1126
    %3028 = vmatpush1.msra.mxu0 %v1125
    %3029 = vmatprep.subr.mxu0 %v1131
    %3030 = vmatpush1.msra.mxu0 %v1130
    %3031 = vmatprep.subr.mxu0 %v1136
    %3032 = vmatpush1.msra.mxu0 %v1135
    %3033 = vmatprep.subr.mxu0 %v1141
    %3034 = vmatpush1.msra.mxu0 %v1140
    %3035 = vmatprep.subr.mxu0 %v1146
    %3036 = vmatpush1.msra.mxu0 %v1145
    %3037 = vmatprep.subr.mxu0 %v1173
    %3038 = vmatpush1.msra.mxu0 %v1170
    %3039 = vmatprep.subr.mxu0 0.0
    %3040 = vmatpush1.msra.mxu0 0.0
    %3041 = vmatprep.subr.mxu0 0.0
    %3042 = vmatpush1.msra.mxu0 0.0
    %3043 = vmatprep.subr.mxu0 0.0
    %3044 = vmatpush1.msra.mxu0 0.0
    %3045 = vmatprep.subr.mxu0 0.0
    %3046 = vmatpush1.msra.mxu0 0.0
    %3047 = vmatprep.subr.mxu0 0.0
    %3048 = vmatpush1.msra.mxu0 0.0
    %3049 = vmatprep.subr.mxu0 0.0
    %3050 = vmatpush1.msra.mxu0 0.0
    %3051 = vmatprep.subr.mxu0 0.0
    %3052 = vmatpush1.msra.mxu0 0.0
    %3053 = vmatprep.subr.mxu0 0.0
    %3054 = vmatpush1.msra.mxu0 0.0
    %3055 = vmatprep.subr.mxu0 0.0
    %3056 = vmatpush1.msra.mxu0 0.0
    %3057 = vmatprep.subr.mxu0 0.0
    %3058 = vmatpush1.msra.mxu0 0.0
    %3059 = vmatprep.subr.mxu0 0.0
    %3060 = vmatpush1.msra.mxu0 0.0
    %3061 = vmatprep.subr.mxu0 0.0
    %3062 = vmatpush1.msra.mxu0 0.0
    %3063 = vmatprep.subr.mxu0 0.0
    %3064 = vmatpush1.msra.mxu0 0.0
    %3065 = vmatprep.mubr.f32.mxu0 %v2999
    %3066 = vmatmul.mubr.f32.gmra.mrb[0].mxu0 %v2997
    %v3067 = vpop.f32.mrb[0].mxu0
    %v3068 = vadd.f32 0.0, %v3067
    %v3069 = vpop.f32.mrb[0].mxu0
    %v3070 = vadd.f32 0.0, %v3069
    %3071 = vdwg.mxu0
    %3072 = vmatprep.subr.mxu0 %v1063
    %3073 = vmatpush1.msra.mxu0 %v1062
    %3074 = vmatprep.subr.mxu0 %v1068
    %3075 = vmatpush1.msra.mxu0 %v1067
    %3076 = vmatprep.subr.mxu0 %v1073
    %3077 = vmatpush1.msra.mxu0 %v1072
    %3078 = vmatprep.subr.mxu0 %v1078
    %3079 = vmatpush1.msra.mxu0 %v1077
    %3080 = vmatprep.subr.mxu0 %v1083
    %3081 = vmatpush1.msra.mxu0 %v1082
    %3082 = vmatprep.subr.mxu0 %v1088
    %3083 = vmatpush1.msra.mxu0 %v1087
    %3084 = vmatprep.subr.mxu0 %v1093
    %3085 = vmatpush1.msra.mxu0 %v1092
    %3086 = vmatprep.subr.mxu0 %v1098
    %3087 = vmatpush1.msra.mxu0 %v1097
    %3088 = vmatprep.subr.mxu0 %v1103
    %3089 = vmatpush1.msra.mxu0 %v1102
    %3090 = vmatprep.subr.mxu0 %v1108
    %3091 = vmatpush1.msra.mxu0 %v1107
    %3092 = vmatprep.subr.mxu0 %v1113
    %3093 = vmatpush1.msra.mxu0 %v1112
    %3094 = vmatprep.subr.mxu0 %v1118
    %3095 = vmatpush1.msra.mxu0 %v1117
    %3096 = vmatprep.subr.mxu0 %v1123
    %3097 = vmatpush1.msra.mxu0 %v1122
    %3098 = vmatprep.subr.mxu0 %v1128
    %3099 = vmatpush1.msra.mxu0 %v1127
    %3100 = vmatprep.subr.mxu0 %v1133
    %3101 = vmatpush1.msra.mxu0 %v1132
    %3102 = vmatprep.subr.mxu0 %v1138
    %3103 = vmatpush1.msra.mxu0 %v1137
    %3104 = vmatprep.subr.mxu0 %v1143
    %3105 = vmatpush1.msra.mxu0 %v1142
    %3106 = vmatprep.subr.mxu0 %v1148
    %3107 = vmatpush1.msra.mxu0 %v1147
    %3108 = vmatprep.subr.mxu0 %v1179
    %3109 = vmatpush1.msra.mxu0 %v1176
    %3110 = vmatprep.subr.mxu0 0.0
    %3111 = vmatpush1.msra.mxu0 0.0
    %3112 = vmatprep.subr.mxu0 0.0
    %3113 = vmatpush1.msra.mxu0 0.0
    %3114 = vmatprep.subr.mxu0 0.0
    %3115 = vmatpush1.msra.mxu0 0.0
    %3116 = vmatprep.subr.mxu0 0.0
    %3117 = vmatpush1.msra.mxu0 0.0
    %3118 = vmatprep.subr.mxu0 0.0
    %3119 = vmatpush1.msra.mxu0 0.0
    %3120 = vmatprep.subr.mxu0 0.0
    %3121 = vmatpush1.msra.mxu0 0.0
    %3122 = vmatprep.subr.mxu0 0.0
    %3123 = vmatpush1.msra.mxu0 0.0
    %3124 = vmatprep.subr.mxu0 0.0
    %3125 = vmatpush1.msra.mxu0 0.0
    %3126 = vmatprep.subr.mxu0 0.0
    %3127 = vmatpush1.msra.mxu0 0.0
    %3128 = vmatprep.subr.mxu0 0.0
    %3129 = vmatpush1.msra.mxu0 0.0
    %3130 = vmatprep.subr.mxu0 0.0
    %3131 = vmatpush1.msra.mxu0 0.0
    %3132 = vmatprep.subr.mxu0 0.0
    %3133 = vmatpush1.msra.mxu0 0.0
    %3134 = vmatprep.subr.mxu0 0.0
    %3135 = vmatpush1.msra.mxu0 0.0
    %3136 = vmatprep.mubr.f32.mxu0 %v2999
    %3137 = vmatmul.mubr.f32.gmra.mrb[0].mxu0 %v2997
    %v3138 = vpop.f32.mrb[0].mxu0
    %v3139 = vadd.f32 0.0, %v3138
    %v3140 = vpop.f32.mrb[0].mxu0
    %v3141 = vadd.f32 0.0, %v3140
    %3142 = vdwg.mxu0
    %3143 = vmatprep.subr.mxu0 0.0
    %3144 = vmatpush1.msra.mxu0 %v1064
    %3145 = vmatprep.subr.mxu0 0.0
    %3146 = vmatpush1.msra.mxu0 %v1069
    %3147 = vmatprep.subr.mxu0 0.0
    %3148 = vmatpush1.msra.mxu0 %v1074
    %3149 = vmatprep.subr.mxu0 0.0
    %3150 = vmatpush1.msra.mxu0 %v1079
    %3151 = vmatprep.subr.mxu0 0.0
    %3152 = vmatpush1.msra.mxu0 %v1084
    %3153 = vmatprep.subr.mxu0 0.0
    %3154 = vmatpush1.msra.mxu0 %v1089
    %3155 = vmatprep.subr.mxu0 0.0
    %3156 = vmatpush1.msra.mxu0 %v1094
    %3157 = vmatprep.subr.mxu0 0.0
    %3158 = vmatpush1.msra.mxu0 %v1099
    %3159 = vmatprep.subr.mxu0 0.0
    %3160 = vmatpush1.msra.mxu0 %v1104
    %3161 = vmatprep.subr.mxu0 0.0
    %3162 = vmatpush1.msra.mxu0 %v1109
    %3163 = vmatprep.subr.mxu0 0.0
    %3164 = vmatpush1.msra.mxu0 %v1114
    %3165 = vmatprep.subr.mxu0 0.0
    %3166 = vmatpush1.msra.mxu0 %v1119
    %3167 = vmatprep.subr.mxu0 0.0
    %3168 = vmatpush1.msra.mxu0 %v1124
    %3169 = vmatprep.subr.mxu0 0.0
    %3170 = vmatpush1.msra.mxu0 %v1129
    %3171 = vmatprep.subr.mxu0 0.0
    %3172 = vmatpush1.msra.mxu0 %v1134
    %3173 = vmatprep.subr.mxu0 0.0
    %3174 = vmatpush1.msra.mxu0 %v1139
    %3175 = vmatprep.subr.mxu0 0.0
    %3176 = vmatpush1.msra.mxu0 %v1144
    %3177 = vmatprep.subr.mxu0 0.0
    %3178 = vmatpush1.msra.mxu0 %v1149
    %3179 = vmatprep.subr.mxu0 0.0
    %3180 = vmatpush1.msra.mxu0 %v1182
    %3181 = vmatprep.subr.mxu0 0.0
    %3182 = vmatpush1.msra.mxu0 0.0
    %3183 = vmatprep.subr.mxu0 0.0
    %3184 = vmatpush1.msra.mxu0 0.0
    %3185 = vmatprep.subr.mxu0 0.0
    %3186 = vmatpush1.msra.mxu0 0.0
    %3187 = vmatprep.subr.mxu0 0.0
    %3188 = vmatpush1.msra.mxu0 0.0
    %3189 = vmatprep.subr.mxu0 0.0
    %3190 = vmatpush1.msra.mxu0 0.0
    %3191 = vmatprep.subr.mxu0 0.0
    %3192 = vmatpush1.msra.mxu0 0.0
    %3193 = vmatprep.subr.mxu0 0.0
    %3194 = vmatpush1.msra.mxu0 0.0
    %3195 = vmatprep.subr.mxu0 0.0
    %3196 = vmatpush1.msra.mxu0 0.0
    %3197 = vmatprep.subr.mxu0 0.0
    %3198 = vmatpush1.msra.mxu0 0.0
    %3199 = vmatprep.subr.mxu0 0.0
    %3200 = vmatpush1.msra.mxu0 0.0
    %3201 = vmatprep.subr.mxu0 0.0
    %3202 = vmatpush1.msra.mxu0 0.0
    %3203 = vmatprep.subr.mxu0 0.0
    %3204 = vmatpush1.msra.mxu0 0.0
    %3205 = vmatprep.subr.mxu0 0.0
    %3206 = vmatpush1.msra.mxu0 0.0
    %3207 = vmatprep.mubr.f32.mxu0 %v2999
    %3208 = vmatmul.mubr.f32.gmra.mrb[0].mxu0 %v2997
    %v3209 = vpop.f32.mrb[0].mxu0
    %v3210 = vadd.f32 0.0, %v3209
    %v3211 = vpop.f32.mrb[0].mxu0
    %3212 = vdwg.mxu0
    %v3213 = vadd.f32 %v2986, %v3068
    %v3214 = vadd.f32 %v2987, %v3070
    %v3215 = vadd.f32 %v2988, %v3139
    %v3216 = vadd.f32 %v2989, %v3141
    %v3217 = vadd.f32 %v2990, %v3210
    %v3218 = vxor.u32 %v3213, 2147483648
    %v3219 = vxor.u32 %v3214, 2147483648
    %v3220 = vmul.f32 %v3218, 1.442695
    %v3221 = vpow.pop %v3220
    %v3222 = vmul.f32 %v3219, 1.442695
    %v3223 = vpow.pop %v3222
    %v3224 = vadd.f32 %v3221, 1.0
    %v3225 = vadd.f32 %v3223, 1.0
    %v3226 = vrcp.pop %v3224
    %v3227 = vmul.f32 1.0, %v3226
    %v3228 = vrcp.pop %v3225
    %v3229 = vmul.f32 1.0, %v3228
    %v3230 = vxor.u32 %v3215, 2147483648
    %v3231 = vmul.f32 %v3230, 1.442695
    %v3232 = vpow.pop %v3231
    %v3233 = vadd.f32 %v3232, 1.0
    %v3234 = vrcp.pop %v3233
    %v3235 = vmul.f32 1.0, %v3234
    %v3236 = vtanh.pop %v3215
    %v3237 = vtanh.pop %v3216
    %v3238 = vxor.u32 %v3216, 2147483648
    %v3239 = vxor.u32 %v3217, 2147483648
    %v3240 = vmul.f32 %v3238, 1.442695
    %v3241 = vpow.pop %v3240
    %v3242 = vmul.f32 %v3239, 1.442695
    %v3243 = vpow.pop %v3242
    %v3244 = vadd.f32 %v3241, 1.0
    %v3245 = vadd.f32 %v3243, 1.0
    %v3246 = vrcp.pop %v3244
    %v3247 = vmul.f32 1.0, %v3246
    %v3248 = vrcp.pop %v3245
    %v3249 = vmul.f32 1.0, %v3248
    %v3250 = vmul.f32 %v3229, %v2971
    %v3251 = vmul.f32 %v3235, %v2972
    %3254 = vrot.lane.b32.xlu0 %v3236, 84
    %v3255 = vpop.permute.xlu0 %3254
    %3256 = vrot.lane.b32.xlu0 %v3237, 84
    %v3257 = vpop.permute.xlu0 %3256
    %v3258 = vsel %vm1450, %v3255, %v3257
    %v3261 = vmul.f32 %v3227, %v3258
    %v3262 = vmul.f32 %v3229, %v3257
    %3265 = vrot.lane.b32.xlu0 %v3261, 22
    %v3266 = vpop.permute.xlu0 %3265
    %3267 = vrot.lane.b32.xlu0 %v3262, 22
    %v3268 = vpop.permute.xlu0 %3267
    %v3269 = vsel %vm1164, %v3266, %v3268
    %v3272 = vadd.f32 %v3250, %v3266
    %v3273 = vadd.f32 %v3251, %v3269
    %v3274 = vtanh.pop %v3272
    %v3275 = vtanh.pop %v3273
    %3278 = vrot.lane.b32.xlu0 %v3274, 44
    %v3279 = vpop.permute.xlu0 %3278
    %3280 = vrot.lane.b32.xlu0 %v3275, 44
    %v3281 = vpop.permute.xlu0 %3280
    %v3282 = vsel %vm316, %v3279, %v3281
    %v3285 = vmul.f32 %v3247, %v3279
    %v3286 = vmul.f32 %v3249, %v3282
    %v3287 = vld [vmem:[#allocation2 + $0x118] sm:$0xff]
    %v3288 = vld [vmem:[#allocation2 + $0x120] sm:$0xff]
    %v3289 = vld [vmem:[#allocation2 + $0x128] sm:$0xff]
    %v3290 = vld [vmem:[#allocation2 + $0x130] sm:$0xff]
    %v3291 = vld [vmem:[#allocation2 + $0x138] sm:$0xff]
    %3294 = vrot.lane.b32.xlu0 %v3285, 62
    %v3295 = vpop.permute.xlu0 %3294
    %3296 = vrot.lane.b32.xlu0 %v3286, 62
    %v3297 = vpop.permute.xlu0 %3296
    %v3298 = vsel %vm1491, %v3295, %v3297
    %v3300 = vsel %vm1164, %v3297, 0
    %3302 = vmatprep.subr.mxu0 %v1061
    %3303 = vmatpush1.msra.mxu0 %v1060
    %3304 = vmatprep.subr.mxu0 %v1066
    %3305 = vmatpush1.msra.mxu0 %v1065
    %3306 = vmatprep.subr.mxu0 %v1071
    %3307 = vmatpush1.msra.mxu0 %v1070
    %3308 = vmatprep.subr.mxu0 %v1076
    %3309 = vmatpush1.msra.mxu0 %v1075
    %3310 = vmatprep.subr.mxu0 %v1081
    %3311 = vmatpush1.msra.mxu0 %v1080
    %3312 = vmatprep.subr.mxu0 %v1086
    %3313 = vmatpush1.msra.mxu0 %v1085
    %3314 = vmatprep.subr.mxu0 %v1091
    %3315 = vmatpush1.msra.mxu0 %v1090
    %3316 = vmatprep.subr.mxu0 %v1096
    %3317 = vmatpush1.msra.mxu0 %v1095
    %3318 = vmatprep.subr.mxu0 %v1101
    %3319 = vmatpush1.msra.mxu0 %v1100
    %3320 = vmatprep.subr.mxu0 %v1106
    %3321 = vmatpush1.msra.mxu0 %v1105
    %3322 = vmatprep.subr.mxu0 %v1111
    %3323 = vmatpush1.msra.mxu0 %v1110
    %3324 = vmatprep.subr.mxu0 %v1116
    %3325 = vmatpush1.msra.mxu0 %v1115
    %3326 = vmatprep.subr.mxu0 %v1121
    %3327 = vmatpush1.msra.mxu0 %v1120
    %3328 = vmatprep.subr.mxu0 %v1126
    %3329 = vmatpush1.msra.mxu0 %v1125
    %3330 = vmatprep.subr.mxu0 %v1131
    %3331 = vmatpush1.msra.mxu0 %v1130
    %3332 = vmatprep.subr.mxu0 %v1136
    %3333 = vmatpush1.msra.mxu0 %v1135
    %3334 = vmatprep.subr.mxu0 %v1141
    %3335 = vmatpush1.msra.mxu0 %v1140
    %3336 = vmatprep.subr.mxu0 %v1146
    %3337 = vmatpush1.msra.mxu0 %v1145
    %3338 = vmatprep.subr.mxu0 %v1173
    %3339 = vmatpush1.msra.mxu0 %v1170
    %3340 = vmatprep.subr.mxu0 0.0
    %3341 = vmatpush1.msra.mxu0 0.0
    %3342 = vmatprep.subr.mxu0 0.0
    %3343 = vmatpush1.msra.mxu0 0.0
    %3344 = vmatprep.subr.mxu0 0.0
    %3345 = vmatpush1.msra.mxu0 0.0
    %3346 = vmatprep.subr.mxu0 0.0
    %3347 = vmatpush1.msra.mxu0 0.0
    %3348 = vmatprep.subr.mxu0 0.0
    %3349 = vmatpush1.msra.mxu0 0.0
    %3350 = vmatprep.subr.mxu0 0.0
    %3351 = vmatpush1.msra.mxu0 0.0
    %3352 = vmatprep.subr.mxu0 0.0
    %3353 = vmatpush1.msra.mxu0 0.0
    %3354 = vmatprep.subr.mxu0 0.0
    %3355 = vmatpush1.msra.mxu0 0.0
    %3356 = vmatprep.subr.mxu0 0.0
    %3357 = vmatpush1.msra.mxu0 0.0
    %3358 = vmatprep.subr.mxu0 0.0
    %3359 = vmatpush1.msra.mxu0 0.0
    %3360 = vmatprep.subr.mxu0 0.0
    %3361 = vmatpush1.msra.mxu0 0.0
    %3362 = vmatprep.subr.mxu0 0.0
    %3363 = vmatpush1.msra.mxu0 0.0
    %3364 = vmatprep.subr.mxu0 0.0
    %3365 = vmatpush1.msra.mxu0 0.0
    %3366 = vmatprep.mubr.f32.mxu0 %v3300
    %3367 = vmatmul.mubr.f32.gmra.mrb[0].mxu0 %v3298
    %v3368 = vpop.f32.mrb[0].mxu0
    %v3369 = vadd.f32 0.0, %v3368
    %v3370 = vpop.f32.mrb[0].mxu0
    %v3371 = vadd.f32 0.0, %v3370
    %3372 = vdwg.mxu0
    %3373 = vmatprep.subr.mxu0 %v1063
    %3374 = vmatpush1.msra.mxu0 %v1062
    %3375 = vmatprep.subr.mxu0 %v1068
    %3376 = vmatpush1.msra.mxu0 %v1067
    %3377 = vmatprep.subr.mxu0 %v1073
    %3378 = vmatpush1.msra.mxu0 %v1072
    %3379 = vmatprep.subr.mxu0 %v1078
    %3380 = vmatpush1.msra.mxu0 %v1077
    %3381 = vmatprep.subr.mxu0 %v1083
    %3382 = vmatpush1.msra.mxu0 %v1082
    %3383 = vmatprep.subr.mxu0 %v1088
    %3384 = vmatpush1.msra.mxu0 %v1087
    %3385 = vmatprep.subr.mxu0 %v1093
    %3386 = vmatpush1.msra.mxu0 %v1092
    %3387 = vmatprep.subr.mxu0 %v1098
    %3388 = vmatpush1.msra.mxu0 %v1097
    %3389 = vmatprep.subr.mxu0 %v1103
    %3390 = vmatpush1.msra.mxu0 %v1102
    %3391 = vmatprep.subr.mxu0 %v1108
    %3392 = vmatpush1.msra.mxu0 %v1107
    %3393 = vmatprep.subr.mxu0 %v1113
    %3394 = vmatpush1.msra.mxu0 %v1112
    %3395 = vmatprep.subr.mxu0 %v1118
    %3396 = vmatpush1.msra.mxu0 %v1117
    %3397 = vmatprep.subr.mxu0 %v1123
    %3398 = vmatpush1.msra.mxu0 %v1122
    %3399 = vmatprep.subr.mxu0 %v1128
    %3400 = vmatpush1.msra.mxu0 %v1127
    %3401 = vmatprep.subr.mxu0 %v1133
    %3402 = vmatpush1.msra.mxu0 %v1132
    %3403 = vmatprep.subr.mxu0 %v1138
    %3404 = vmatpush1.msra.mxu0 %v1137
    %3405 = vmatprep.subr.mxu0 %v1143
    %3406 = vmatpush1.msra.mxu0 %v1142
    %3407 = vmatprep.subr.mxu0 %v1148
    %3408 = vmatpush1.msra.mxu0 %v1147
    %3409 = vmatprep.subr.mxu0 %v1179
    %3410 = vmatpush1.msra.mxu0 %v1176
    %3411 = vmatprep.subr.mxu0 0.0
    %3412 = vmatpush1.msra.mxu0 0.0
    %3413 = vmatprep.subr.mxu0 0.0
    %3414 = vmatpush1.msra.mxu0 0.0
    %3415 = vmatprep.subr.mxu0 0.0
    %3416 = vmatpush1.msra.mxu0 0.0
    %3417 = vmatprep.subr.mxu0 0.0
    %3418 = vmatpush1.msra.mxu0 0.0
    %3419 = vmatprep.subr.mxu0 0.0
    %3420 = vmatpush1.msra.mxu0 0.0
    %3421 = vmatprep.subr.mxu0 0.0
    %3422 = vmatpush1.msra.mxu0 0.0
    %3423 = vmatprep.subr.mxu0 0.0
    %3424 = vmatpush1.msra.mxu0 0.0
    %3425 = vmatprep.subr.mxu0 0.0
    %3426 = vmatpush1.msra.mxu0 0.0
    %3427 = vmatprep.subr.mxu0 0.0
    %3428 = vmatpush1.msra.mxu0 0.0
    %3429 = vmatprep.subr.mxu0 0.0
    %3430 = vmatpush1.msra.mxu0 0.0
    %3431 = vmatprep.subr.mxu0 0.0
    %3432 = vmatpush1.msra.mxu0 0.0
    %3433 = vmatprep.subr.mxu0 0.0
    %3434 = vmatpush1.msra.mxu0 0.0
    %3435 = vmatprep.subr.mxu0 0.0
    %3436 = vmatpush1.msra.mxu0 0.0
    %3437 = vmatprep.mubr.f32.mxu0 %v3300
    %3438 = vmatmul.mubr.f32.gmra.mrb[0].mxu0 %v3298
    %v3439 = vpop.f32.mrb[0].mxu0
    %v3440 = vadd.f32 0.0, %v3439
    %v3441 = vpop.f32.mrb[0].mxu0
    %v3442 = vadd.f32 0.0, %v3441
    %3443 = vdwg.mxu0
    %3444 = vmatprep.subr.mxu0 0.0
    %3445 = vmatpush1.msra.mxu0 %v1064
    %3446 = vmatprep.subr.mxu0 0.0
    %3447 = vmatpush1.msra.mxu0 %v1069
    %3448 = vmatprep.subr.mxu0 0.0
    %3449 = vmatpush1.msra.mxu0 %v1074
    %3450 = vmatprep.subr.mxu0 0.0
    %3451 = vmatpush1.msra.mxu0 %v1079
    %3452 = vmatprep.subr.mxu0 0.0
    %3453 = vmatpush1.msra.mxu0 %v1084
    %3454 = vmatprep.subr.mxu0 0.0
    %3455 = vmatpush1.msra.mxu0 %v1089
    %3456 = vmatprep.subr.mxu0 0.0
    %3457 = vmatpush1.msra.mxu0 %v1094
    %3458 = vmatprep.subr.mxu0 0.0
    %3459 = vmatpush1.msra.mxu0 %v1099
    %3460 = vmatprep.subr.mxu0 0.0
    %3461 = vmatpush1.msra.mxu0 %v1104
    %3462 = vmatprep.subr.mxu0 0.0
    %3463 = vmatpush1.msra.mxu0 %v1109
    %3464 = vmatprep.subr.mxu0 0.0
    %3465 = vmatpush1.msra.mxu0 %v1114
    %3466 = vmatprep.subr.mxu0 0.0
    %3467 = vmatpush1.msra.mxu0 %v1119
    %3468 = vmatprep.subr.mxu0 0.0
    %3469 = vmatpush1.msra.mxu0 %v1124
    %3470 = vmatprep.subr.mxu0 0.0
    %3471 = vmatpush1.msra.mxu0 %v1129
    %3472 = vmatprep.subr.mxu0 0.0
    %3473 = vmatpush1.msra.mxu0 %v1134
    %3474 = vmatprep.subr.mxu0 0.0
    %3475 = vmatpush1.msra.mxu0 %v1139
    %3476 = vmatprep.subr.mxu0 0.0
    %3477 = vmatpush1.msra.mxu0 %v1144
    %3478 = vmatprep.subr.mxu0 0.0
    %3479 = vmatpush1.msra.mxu0 %v1149
    %3480 = vmatprep.subr.mxu0 0.0
    %3481 = vmatpush1.msra.mxu0 %v1182
    %3482 = vmatprep.subr.mxu0 0.0
    %3483 = vmatpush1.msra.mxu0 0.0
    %3484 = vmatprep.subr.mxu0 0.0
    %3485 = vmatpush1.msra.mxu0 0.0
    %3486 = vmatprep.subr.mxu0 0.0
    %3487 = vmatpush1.msra.mxu0 0.0
    %3488 = vmatprep.subr.mxu0 0.0
    %3489 = vmatpush1.msra.mxu0 0.0
    %3490 = vmatprep.subr.mxu0 0.0
    %3491 = vmatpush1.msra.mxu0 0.0
    %3492 = vmatprep.subr.mxu0 0.0
    %3493 = vmatpush1.msra.mxu0 0.0
    %3494 = vmatprep.subr.mxu0 0.0
    %3495 = vmatpush1.msra.mxu0 0.0
    %3496 = vmatprep.subr.mxu0 0.0
    %3497 = vmatpush1.msra.mxu0 0.0
    %3498 = vmatprep.subr.mxu0 0.0
    %3499 = vmatpush1.msra.mxu0 0.0
    %3500 = vmatprep.subr.mxu0 0.0
    %3501 = vmatpush1.msra.mxu0 0.0
    %3502 = vmatprep.subr.mxu0 0.0
    %3503 = vmatpush1.msra.mxu0 0.0
    %3504 = vmatprep.subr.mxu0 0.0
    %3505 = vmatpush1.msra.mxu0 0.0
    %3506 = vmatprep.subr.mxu0 0.0
    %3507 = vmatpush1.msra.mxu0 0.0
    %3508 = vmatprep.mubr.f32.mxu0 %v3300
    %3509 = vmatmul.mubr.f32.gmra.mrb[0].mxu0 %v3298
    %v3510 = vpop.f32.mrb[0].mxu0
    %v3511 = vadd.f32 0.0, %v3510
    %v3512 = vpop.f32.mrb[0].mxu0
    %3513 = vdwg.mxu0
    %v3514 = vadd.f32 %v3287, %v3369
    %v3515 = vadd.f32 %v3288, %v3371
    %v3516 = vadd.f32 %v3289, %v3440
    %v3517 = vadd.f32 %v3290, %v3442
    %v3518 = vadd.f32 %v3291, %v3511
    %v3519 = vxor.u32 %v3514, 2147483648
    %v3520 = vxor.u32 %v3515, 2147483648
    %v3521 = vmul.f32 %v3519, 1.442695
    %v3522 = vpow.pop %v3521
    %v3523 = vmul.f32 %v3520, 1.442695
    %v3524 = vpow.pop %v3523
    %v3525 = vadd.f32 %v3522, 1.0
    %v3526 = vadd.f32 %v3524, 1.0
    %v3527 = vrcp.pop %v3525
    %v3528 = vmul.f32 1.0, %v3527
    %v3529 = vrcp.pop %v3526
    %v3530 = vmul.f32 1.0, %v3529
    %v3531 = vxor.u32 %v3516, 2147483648
    %v3532 = vmul.f32 %v3531, 1.442695
    %v3533 = vpow.pop %v3532
    %v3534 = vadd.f32 %v3533, 1.0
    %v3535 = vrcp.pop %v3534
    %v3536 = vmul.f32 1.0, %v3535
    %v3537 = vtanh.pop %v3516
    %v3538 = vtanh.pop %v3517
    %v3539 = vxor.u32 %v3517, 2147483648
    %v3540 = vxor.u32 %v3518, 2147483648
    %v3541 = vmul.f32 %v3539, 1.442695
    %v3542 = vpow.pop %v3541
    %v3543 = vmul.f32 %v3540, 1.442695
    %v3544 = vpow.pop %v3543
    %v3545 = vadd.f32 %v3542, 1.0
    %v3546 = vadd.f32 %v3544, 1.0
    %v3547 = vrcp.pop %v3545
    %v3548 = vmul.f32 1.0, %v3547
    %v3549 = vrcp.pop %v3546
    %v3550 = vmul.f32 1.0, %v3549
    %v3551 = vmul.f32 %v3530, %v3272
    %v3552 = vmul.f32 %v3536, %v3273
    %3555 = vrot.lane.b32.xlu0 %v3537, 84
    %v3556 = vpop.permute.xlu0 %3555
    %3557 = vrot.lane.b32.xlu0 %v3538, 84
    %v3558 = vpop.permute.xlu0 %3557
    %v3559 = vsel %vm1450, %v3556, %v3558
    %v3562 = vmul.f32 %v3528, %v3559
    %v3563 = vmul.f32 %v3530, %v3558
    %3566 = vrot.lane.b32.xlu0 %v3562, 22
    %v3567 = vpop.permute.xlu0 %3566
    %3568 = vrot.lane.b32.xlu0 %v3563, 22
    %v3569 = vpop.permute.xlu0 %3568
    %v3570 = vsel %vm1164, %v3567, %v3569
    %v3573 = vadd.f32 %v3551, %v3567
    %v3574 = vadd.f32 %v3552, %v3570
    %v3575 = vtanh.pop %v3573
    %v3576 = vtanh.pop %v3574
    %3579 = vrot.lane.b32.xlu0 %v3575, 44
    %v3580 = vpop.permute.xlu0 %3579
    %3581 = vrot.lane.b32.xlu0 %v3576, 44
    %v3582 = vpop.permute.xlu0 %3581
    %v3583 = vsel %vm316, %v3580, %v3582
    %v3586 = vmul.f32 %v3548, %v3580
    %v3587 = vmul.f32 %v3550, %v3583
    %3590 = vrot.lane.b32.xlu0 %v3586, 62
    %v3591 = vpop.permute.xlu0 %3590
    %3592 = vrot.lane.b32.xlu0 %v3587, 62
    %v3593 = vpop.permute.xlu0 %3592
    %v3594 = vsel %vm1491, %v3591, %v3593
    %3597 = vst [vmem:[#allocation9] sm:$0xff] %v3594
    %3598 = vst.msk [vmem:[#allocation9 + $0x8] sm:$0xff] %vm1164, %v3593
    %3601 = vrot.lane.b32.xlu0 %v3573, 106
    %v3602 = vpop.permute.xlu0 %3601
    %3603 = vrot.lane.b32.xlu0 %v3574, 106
    %v3604 = vpop.permute.xlu0 %3603
    %vm3605 = vcmask 867328
    %v3606 = vsel %vm3605, %v3602, %v3604
    %3609 = vst [vmem:[#allocation10] sm:$0xff] %v3606
    %3610 = vst.msk [vmem:[#allocation10 + $0x8] sm:$0xff] %vm1164, %v3604
    %v3611 = vld [vmem:[%s6] sm:$0xff]
    %v3612 = vld [vmem:[%s6 + $0x8] sm:$0xff]
    %v3613 = vld [vmem:[%s6 + $0x10] sm:$0xff]
    %v3614 = vld [vmem:[%s6 + $0x18] sm:$0xff]
    %v3615 = vld [vmem:[%s6 + $0x20] sm:$0xff]
    %v3616 = vld [vmem:[%s6 + $0x28] sm:$0xff]
    %v3617 = vld [vmem:[%s6 + $0x30] sm:$0xff]
    %v3618 = vld [vmem:[%s6 + $0x38] sm:$0xff]
    %v3619 = vld [vmem:[%s6 + $0x40] sm:$0xff]
    %v3620 = vld [vmem:[%s6 + $0x48] sm:$0xff]
    %v3621 = vld [vmem:[%s6 + $0x50] sm:$0xff]
    %v3622 = vld [vmem:[%s6 + $0x58] sm:$0xff]
    %v3623 = vld [vmem:[%s6 + $0x60] sm:$0xff]
    %v3624 = vld [vmem:[%s6 + $0x68] sm:$0xff]
    %v3625 = vld [vmem:[%s6 + $0x70] sm:$0xff]
    %v3626 = vld [vmem:[%s6 + $0x78] sm:$0xff]
    %v3627 = vld [vmem:[%s6 + $0x80] sm:$0xff]
    %v3628 = vld [vmem:[%s6 + $0x88] sm:$0xff]
    %v3629 = vld [vmem:[%s6 + $0x90] sm:$0x3f]
    %v3630 = vld [vmem:[%s7] sm:$0x1]
    %v3632 = vlaneseq
    %v3633 = vshrl.u32 %v3632, 7
    %v3634 = vsub.s32 0, %v3633
    %v3635 = vrot.slane %v3630, %v3634
    %v3637 = vsel %vm1164, %v3593, 0
    %v3640 = vsel %vm1168, %v3629, 0
    %3642 = vmatprep.subr.mxu0 0.0
    %3643 = vmatpush1.msra.mxu0 %v3611
    %3644 = vmatprep.subr.mxu0 0.0
    %3645 = vmatpush1.msra.mxu0 %v3612
    %3646 = vmatprep.subr.mxu0 0.0
    %3647 = vmatpush1.msra.mxu0 %v3613
    %3648 = vmatprep.subr.mxu0 0.0
    %3649 = vmatpush1.msra.mxu0 %v3614
    %3650 = vmatprep.subr.mxu0 0.0
    %3651 = vmatpush1.msra.mxu0 %v3615
    %3652 = vmatprep.subr.mxu0 0.0
    %3653 = vmatpush1.msra.mxu0 %v3616
    %3654 = vmatprep.subr.mxu0 0.0
    %3655 = vmatpush1.msra.mxu0 %v3617
    %3656 = vmatprep.subr.mxu0 0.0
    %3657 = vmatpush1.msra.mxu0 %v3618
    %3658 = vmatprep.subr.mxu0 0.0
    %3659 = vmatpush1.msra.mxu0 %v3619
    %3660 = vmatprep.subr.mxu0 0.0
    %3661 = vmatpush1.msra.mxu0 %v3620
    %3662 = vmatprep.subr.mxu0 0.0
    %3663 = vmatpush1.msra.mxu0 %v3621
    %3664 = vmatprep.subr.mxu0 0.0
    %3665 = vmatpush1.msra.mxu0 %v3622
    %3666 = vmatprep.subr.mxu0 0.0
    %3667 = vmatpush1.msra.mxu0 %v3623
    %3668 = vmatprep.subr.mxu0 0.0
    %3669 = vmatpush1.msra.mxu0 %v3624
    %3670 = vmatprep.subr.mxu0 0.0
    %3671 = vmatpush1.msra.mxu0 %v3625
    %3672 = vmatprep.subr.mxu0 0.0
    %3673 = vmatpush1.msra.mxu0 %v3626
    %3674 = vmatprep.subr.mxu0 0.0
    %3675 = vmatpush1.msra.mxu0 %v3627
    %3676 = vmatprep.subr.mxu0 0.0
    %3677 = vmatpush1.msra.mxu0 %v3628
    %3678 = vmatprep.subr.mxu0 0.0
    %3679 = vmatpush1.msra.mxu0 %v3640
    %3680 = vmatprep.subr.mxu0 0.0
    %3681 = vmatpush1.msra.mxu0 0.0
    %3682 = vmatprep.subr.mxu0 0.0
    %3683 = vmatpush1.msra.mxu0 0.0
    %3684 = vmatprep.subr.mxu0 0.0
    %3685 = vmatpush1.msra.mxu0 0.0
    %3686 = vmatprep.subr.mxu0 0.0
    %3687 = vmatpush1.msra.mxu0 0.0
    %3688 = vmatprep.subr.mxu0 0.0
    %3689 = vmatpush1.msra.mxu0 0.0
    %3690 = vmatprep.subr.mxu0 0.0
    %3691 = vmatpush1.msra.mxu0 0.0
    %3692 = vmatprep.subr.mxu0 0.0
    %3693 = vmatpush1.msra.mxu0 0.0
    %3694 = vmatprep.subr.mxu0 0.0
    %3695 = vmatpush1.msra.mxu0 0.0
    %3696 = vmatprep.subr.mxu0 0.0
    %3697 = vmatpush1.msra.mxu0 0.0
    %3698 = vmatprep.subr.mxu0 0.0
    %3699 = vmatpush1.msra.mxu0 0.0
    %3700 = vmatprep.subr.mxu0 0.0
    %3701 = vmatpush1.msra.mxu0 0.0
    %3702 = vmatprep.subr.mxu0 0.0
    %3703 = vmatpush1.msra.mxu0 0.0
    %3704 = vmatprep.subr.mxu0 0.0
    %3705 = vmatpush1.msra.mxu0 0.0
    %3706 = vmatprep.mubr.f32.mxu0 %v3300
    %3707 = vmatmul.mubr.f32.gmra.mrb[0].mxu0 %v3298
    %v3708 = vpop.f32.mrb[0].mxu0
    %v3709 = vadd.f32 %v3635, %v3708
    %v3710 = vpop.f32.mrb[0].mxu0
    %3711 = vmatprep.mubr.f32.mxu0 %v3637
    %3712 = vmatmul.mubr.f32.gmra.mrb[0].mxu0 %v3594
    %v3713 = vpop.f32.mrb[0].mxu0
    %v3714 = vadd.f32 %v3635, %v3713
    %v3715 = vpop.f32.mrb[0].mxu0
    %3716 = vdwg.mxu0
    %vm3717 = vcmask 23552
    %v3718 = vsel %vm3717, %v3709, -inf
    %3719 = vmax.xlane.f32.xlu0 %v3718
    %v3720 = vpop.xlane.xlu0 %3719
    %v3721 = vsel %vm3717, %v3714, -inf
    %3722 = vmax.xlane.f32.xlu0 %v3721
    %v3723 = vpop.xlane.xlu0 %3722
    %v3724 = vsub.f32 %v3709, %v3720
    %v3725 = vsub.f32 %v3714, %v3723
    %v3726 = vmul.f32 %v3724, 1.442695
    %v3727 = vpow.pop %v3726
    %v3728 = vmul.f32 %v3725, 1.442695
    %v3729 = vpow.pop %v3728
    %v3730 = vsel %vm3717, %v3727, 0.0
    %3731 = vadd.xlane.f32.xlu0 %v3730
    %v3732 = vpop.xlane.xlu0 %3731
    %v3733 = vsel %vm3717, %v3729, 0.0
    %3734 = vadd.xlane.f32.xlu0 %v3733
    %v3735 = vpop.xlane.xlu0 %3734
    %v3736 = vrcp.pop %v3732
    %v3737 = vmul.f32 %v3727, %v3736
    %v3738 = vrcp.pop %v3735
    %v3739 = vmul.f32 %v3729, %v3738
    %3741 = vrot.lane.b32.xlu0 %v3737, 126
    %v3742 = vpop.permute.xlu0 %3741
    %3745 = vrot.lane.b32.xlu0 %v3739, 1
    %v3746 = vpop.permute.xlu0 %3745
    %vm3748 = vcmask 7168
    %v3749 = vsel %vm3748, %v3742, %v3746
    %3750 = vst.msk [vmem:[%s8] sm:$0xff] %vm3717, %v3749
    // Predicated region
    $region46: #{tpu_custom_call.1} parent=1 // pred_check
      _
    $region47: #{tpu_custom_call.1} parent=1 // pred_check_branch
      %3752 = sbr.rel (0) target = $region49
    $region48: #{tpu_custom_call.1} parent=1 // pred_region
      _
    $region49: #{tpu_custom_call.1} parent=1 // pred_fallthru
      _
    // Predicated region
    $region50: #{tpu_custom_call.1} parent=1 // pred_check
      _
    $region51: #{tpu_custom_call.1} parent=1 // pred_check_branch
      %3754 = sbr.rel (0) target = $region53
    $region52: #{tpu_custom_call.1} parent=1 // pred_region
      %s3756 = ssub.s32 256, 256
      %3757 = vsyncadd [#allocation5], %s3756
      %s3759 = sshll.u32 [#allocation9], 4
      %s3760 = int_to_ptr.vmem [resolvable:$true] %s3759
      %3762 = dma.vmem_to_hbm [thread:$0]  %s3760, 256, %s9, [#allocation5]
    $region53: #{tpu_custom_call.1} parent=1 // pred_fallthru
      _
    // Predicated region
    $region54: #{tpu_custom_call.1} parent=1 // pred_check
      _
    $region55: #{tpu_custom_call.1} parent=1 // pred_check_branch
      %3764 = sbr.rel (0) target = $region57
    $region56: #{tpu_custom_call.1} parent=1 // pred_region
      %s3766 = ssub.s32 256, 256
      %3767 = vsyncadd [#allocation11], %s3766
      %s3769 = sshll.u32 [#allocation10], 4
      %s3770 = int_to_ptr.vmem [resolvable:$true] %s3769
      %3772 = dma.vmem_to_hbm [thread:$0]  %s3770, 256, %s10, [#allocation11]
    $region57: #{tpu_custom_call.1} parent=1 // pred_fallthru
      _
    // Predicated region
    $region58: #{tpu_custom_call.1} parent=1 // pred_check
      _
    $region59: #{tpu_custom_call.1} parent=1 // pred_check_branch
      %3774 = sbr.rel (0) target = $region61
    $region60: #{tpu_custom_call.1} parent=1 // pred_region
      _
    $region61: #{tpu_custom_call.1} parent=1 // pred_fallthru
      _
    // Predicated region
    $region62: #{tpu_custom_call.1} parent=1 // pred_check
      _
    $region63: #{tpu_custom_call.1} parent=1 // pred_check_branch
      %3776 = sbr.rel (0) target = $region65
    $region64: #{tpu_custom_call.1} parent=1 // pred_region
      %3777 = dma.done [#allocation5], 256
    $region65: #{tpu_custom_call.1} parent=1 // pred_fallthru
      _
    // Predicated region
    $region66: #{tpu_custom_call.1} parent=1 // pred_check
      _
    $region67: #{tpu_custom_call.1} parent=1 // pred_check_branch
      %3779 = sbr.rel (0) target = $region69
    $region68: #{tpu_custom_call.1} parent=1 // pred_region
      %3780 = dma.done [#allocation11], 256
    $region69: #{tpu_custom_call.1} parent=1 // pred_fallthru
      _
    %3781 = vsyncpa [#allocation4], 1
    %3782 = vsyncpa [#allocation7], 1
    %3783 = vsyncpa [#allocation5], 1
    %3784 = vsyncpa [#allocation11], 1

</llo_original>
